<compile_context>
chip_gen: v6e
topology: v6e:2x2x1
jax: 0.10.0
libtpu: 0.0.40
codegen_flags: <defaults>
</compile_context>

<pallas_src>
import functools
import math

import jax
import jax.numpy as jnp
from jax.experimental import pallas as pl
from jax.experimental.pallas import tpu as pltpu

NEG_SLOPE = 0.2
SQRT2 = math.sqrt(2.0)


# ----------------------------------------------------------------------------
# Sizing helpers (generation aware).
# ----------------------------------------------------------------------------
def _vmem_capacity_bytes(default=64 << 20):
    """Physical VMEM of the attached TPU; conservative (v7x-sized) default."""
    try:
        info = pltpu.get_tpu_info()
        cap = int(getattr(info, "vmem_capacity_bytes", default))
        return cap if cap > 0 else default
    except Exception:
        return default


def _pick_tn(K, N, *, vmem_cap=None, bytes_per_elem=2, num_buffers=2):
    """Largest output-tile width tn that (a) divides N, (b) is a multiple of
    128 (lane width), (c) keeps `num_buffers` (K, tn) bf16 weight slabs inside
    ~55% of physical VMEM, (d) is capped at 1024 on 128 MiB parts (v5e/v6e)
    and 512 on 64 MiB parts (v7x; also gives an even N//tn at real sizes so
    the megacore-split first layer balances 9/9)."""
    if vmem_cap is None:
        vmem_cap = _vmem_capacity_bytes()
    slab_budget = int(vmem_cap * 0.55) // num_buffers
    cap = 1024 if vmem_cap >= (100 << 20) else 512
    best = None
    for tn in range(128, min(N, cap) + 1, 128):
        if N % tn == 0 and K * tn * bytes_per_elem <= slab_budget:
            best = tn
    if best is None:
        if N % 128 == 0:
            best = 128                      # smallest lane-aligned tile
        else:
            # Full-extent block is always legal; guard is only advisory here.
            # TODO(synk): K-tiling would be needed if a full-N slab for a
            # non-128-multiple N ever exceeded the VMEM budget.
            best = N
    return best


def _vmem_limit_bytes(need, vmem_cap):
    return int(min(max(need + (8 << 20), 32 << 20), int(vmem_cap * 0.9)))


# ----------------------------------------------------------------------------
# Kernel 1: first EqualLinear layer (K = 26*768 differs from the hidden dim).
# ----------------------------------------------------------------------------
def _eql_fused_lrelu_kernel(x_ref, w_ref, b_ref, o_ref, *, scale):
    """One (B, tn) output tile; grid = (N // tn,), full-K dot per step.
    x_ref (B, K) f32 resident; w_ref (K, tn) bf16 streamed slab;
    b_ref (1, tn) f32 (= bias * lr_mul); o_ref (B, tn) f32."""
    acc = jnp.dot(x_ref[...].astype(jnp.bfloat16), w_ref[...],
                  preferred_element_type=jnp.float32)
    z = acc * scale + b_ref[...]            # scalar weight-scale folded here
    o_ref[...] = jnp.where(z >= 0.0, z * SQRT2,
                           z * (NEG_SLOPE * SQRT2)).astype(o_ref.dtype)


def equal_linear_fused_lrelu(x, weight_t, bias_eff, lr_mul, *, tn=None):
    """y = leaky_relu(x @ (W*scale) + bias*lr_mul, 0.2) * sqrt(2).
    weight_t: (K, N) bf16, transposed, UNSCALED.  bias_eff: (1, N) f32,
    already multiplied by lr_mul."""
    B, K = x.shape
    Kw, N = weight_t.shape
    assert K == Kw
    vmem_cap = _vmem_capacity_bytes()
    if tn is None:
        tn = _pick_tn(K, N, vmem_cap=vmem_cap)
    assert tn == N or (N % tn == 0 and tn % 128 == 0)
    scale = lr_mul / math.sqrt(K)

    need = (2 * K * tn * 2          # bf16 weight slab, double-buffered
            + 2 * 8 * K * 4         # resident x (sublane-padded)
            + 2 * 8 * tn * 4        # bias tile
            + 2 * 8 * tn * 4)       # output tile

    kernel = functools.partial(_eql_fused_lrelu_kernel, scale=scale)
    return pl.pallas_call(
        kernel,
        out_shape=jax.ShapeDtypeStruct((B, N), jnp.float32),
        grid_spec=pltpu.PrefetchScalarGridSpec(
            num_scalar_prefetch=0,
            grid=(N // tn,),
            in_specs=[
                pl.BlockSpec((B, K), lambda j: (0, 0)),    # x: resident
                pl.BlockSpec((K, tn), lambda j: (0, j)),   # W slab: streamed
                pl.BlockSpec((1, tn), lambda j: (0, j)),   # bias tile
            ],
            out_specs=pl.BlockSpec((B, tn), lambda j: (0, j)),
        ),
        compiler_params=pltpu.CompilerParams(
            dimension_semantics=("parallel",),
            vmem_limit_bytes=_vmem_limit_bytes(need, vmem_cap)),
        cost_estimate=pl.CostEstimate(
            flops=2 * B * K * N, transcendentals=0,
            bytes_accessed=B * K * 4 + K * N * 2 + N * 4 + B * N * 4),
    )(x, weight_t, bias_eff)


# ----------------------------------------------------------------------------
# Kernel 2: the 14 identical hidden layers fused into one pallas_call.
# ----------------------------------------------------------------------------
def _fused_hidden_kernel(h0_ref, w_ref, b_ref, o_ref, act_ref, *, scale, tn):
    """grid = (L, N//tn), layer axis outer & sequential.
    h0_ref (B, N) f32 resident (first layer's output); w_ref (1, K, tn) bf16
    streamed slab of layer l; b_ref (1, 1, tn) f32 (= bias*lr_mul);
    o_ref (B, N) f32 resident output; act_ref (2, B, N) f32 ping-pong scratch:
    slot 0 = current layer's input, slot 1 = current layer's output."""
    l = pl.program_id(0)
    j = pl.program_id(1)
    nl = pl.num_programs(0)
    nj = pl.num_programs(1)

    # Seed the activation buffer with the first layer's output once.
    @pl.when(jnp.logical_and(l == 0, j == 0))
    def _():
        act_ref[0] = h0_ref[...]

    acc = jnp.dot(act_ref[0].astype(jnp.bfloat16), w_ref[0],
                  preferred_element_type=jnp.float32)
    z = acc * scale + b_ref[0]              # scalar weight-scale folded here
    y = jnp.where(z >= 0.0, z * SQRT2, z * (NEG_SLOPE * SQRT2))

    start = pl.multiple_of(j * tn, tn)
    act_ref[1, :, pl.ds(start, tn)] = y     # this layer's output tile (f32)

    @pl.when(l == nl - 1)                   # only the final layer hits HBM
    def _():
        o_ref[:, pl.ds(start, tn)] = y.astype(o_ref.dtype)

    # Layer boundary: publish this layer's output as the next layer's input.
    @pl.when(j == nj - 1)
    def _():
        act_ref[0] = act_ref[1]


def fused_hidden_layers(h0, w_stack, b_eff_stack, lr_mul, *, tn=None):
    """Apply L identical EqualLinear + fused_lrelu layers in ONE pallas_call.
    h0: (B, N) f32; w_stack: (L, N, N) bf16 transposed/unscaled;
    b_eff_stack: (L, 1, N) f32 (= bias * lr_mul)."""
    B, N = h0.shape
    L, K, N2 = w_stack.shape
    assert K == N and N2 == N
    if L == 0:
        return h0
    vmem_cap = _vmem_capacity_bytes()
    if tn is None:
        tn = _pick_tn(K, N, vmem_cap=vmem_cap)
    assert tn == N or (N % tn == 0 and tn % 128 == 0)
    scale = lr_mul / math.sqrt(K)

    need = (2 * K * tn * 2        # streamed bf16 W slab (double-buffered)
            + 2 * 8 * tn * 4      # bias tile
            + 2 * 8 * N * 4       # resident h0
            + 2 * 8 * N * 4       # resident output
            + 2 * 8 * N * 4)      # activation ping-pong scratch

    kernel = functools.partial(_fused_hidden_kernel, scale=scale, tn=tn)
    return pl.pallas_call(
        kernel,
        out_shape=jax.ShapeDtypeStruct((B, N), jnp.float32),
        grid_spec=pltpu.PrefetchScalarGridSpec(
            num_scalar_prefetch=0,
            grid=(L, N // tn),
            in_specs=[
                pl.BlockSpec((B, N), lambda l, j: (0, 0)),         # h0 resident
                pl.BlockSpec((1, K, tn), lambda l, j: (l, 0, j)),  # W slab
                pl.BlockSpec((1, 1, tn), lambda l, j: (l, 0, j)),  # bias tile
            ],
            out_specs=pl.BlockSpec((B, N), lambda l, j: (0, 0)),   # resident
            scratch_shapes=[pltpu.VMEM((2, B, N), jnp.float32)],
        ),
        compiler_params=pltpu.CompilerParams(
            # Layer axis must be sequential; the N axis is also kept
            # sequential because layer l+1 needs ALL of layer l's tiles (a
            # megacore split would leave each core half the activation).
            dimension_semantics=("arbitrary", "arbitrary"),
            vmem_limit_bytes=_vmem_limit_bytes(need, vmem_cap)),
        cost_estimate=pl.CostEstimate(
            flops=2 * B * K * N * L, transcendentals=0,
            bytes_accessed=L * K * N * 2 + L * N * 4 + 2 * B * N * 4),
    )(h0, w_stack, b_eff_stack)


# ----------------------------------------------------------------------------
# Parameters, forward pass, pure-JAX references.
# ----------------------------------------------------------------------------
def init_i_map_params(key, in_dim, hidden_dim, n_layers=15, lr_mul=0.01):
    """Synthetic parameters matching EqualLinear.__init__ structure:
    weight ~ randn(out, in) / lr_mul (stored transposed, bf16, unscaled).
    All per-layer folding (bias*lr_mul, reshapes, bf16 casts, hidden-layer
    weight stacking) is done ONCE here so the forward pass is exactly two
    pallas_calls with no glue HLOs in between."""
    kw0, kb0, kwh, kbh = jax.random.split(key, 4)
    L = n_layers - 1
    w0_t = (jax.random.normal(kw0, (in_dim, hidden_dim), jnp.float32)
            / lr_mul).astype(jnp.bfloat16)
    b0 = 0.1 * jax.random.normal(kb0, (hidden_dim,), jnp.float32)
    wh_t = (jax.random.normal(kwh, (L, hidden_dim, hidden_dim), jnp.float32)
            / lr_mul).astype(jnp.bfloat16)
    bh = 0.1 * jax.random.normal(kbh, (L, hidden_dim), jnp.float32)
    return {
        "w0_t": w0_t,
        "b0_raw": b0,
        "b0_eff": (b0 * lr_mul).reshape(1, hidden_dim),
        "wh_t": wh_t,
        "bh_raw": bh,
        "bh_eff": (bh * lr_mul).reshape(L, 1, hidden_dim),
    }


def i_map_forward(x, params, latent_dim, num_styles=18, lr_mul=0.01):
    """x: (B, T, C) -> (out, feat), each (B, num_styles, latent_dim)."""
    B = x.shape[0]
    h = x.reshape(B, x.shape[1] * x.shape[2]).astype(jnp.float32)
    h = equal_linear_fused_lrelu(h, params["w0_t"], params["b0_eff"], lr_mul)
    h = fused_hidden_layers(h, params["wh_t"], params["bh_eff"], lr_mul)
    # torch.stack(out.split(latent_dim, 1), dim=1) == reshape(B, 18, latent)
    out = h.reshape(B, num_styles, latent_dim)
    feat = out
    return out, feat


def _reference_forward(x, params, latent_dim, num_styles=18, lr_mul=0.01,
                       match_kernel_dtypes=True):
    """Pure-JAX reference.  match_kernel_dtypes=True reproduces the kernel
    numerics (bf16 MXU operands, f32 accumulation/activations, scale folded
    after the matmul); False keeps activations f32 for a loose semantic
    check."""
    B = x.shape[0]
    h = x.reshape(B, -1).astype(jnp.float32)
    L = params["wh_t"].shape[0]
    weights = [params["w0_t"]] + [params["wh_t"][i] for i in range(L)]
    biases = [params["b0_raw"]] + [params["bh_raw"][i] for i in range(L)]
    for w_t, b in zip(weights, biases):
        K = w_t.shape[0]
        scale = lr_mul / math.sqrt(K)
        if match_kernel_dtypes:
            acc = jnp.dot(h.astype(jnp.bfloat16), w_t.astype(jnp.bfloat16),
                          preferred_element_type=jnp.float32)
        else:
            acc = jnp.dot(h, w_t.astype(jnp.float32),
                          preferred_element_type=jnp.float32)
        z = acc * scale + b.astype(jnp.float32) * lr_mul
        h = jnp.where(z >= 0.0, z * SQRT2, z * (NEG_SLOPE * SQRT2))
    return h.reshape(B, num_styles, latent_dim)


if __name__ == "__main__":
    # Small-shape configuration consistent with the module's forward:
    # real module uses T=26 tokens of dim 768 -> 18 styles of dim 512.
    # Token/latent dims are scaled down; structure & layer count are kept.
    B = 2
    NUM_TOKENS = 26
    TOKEN_DIM = 64          # real: 768
    LATENT_DIM = 64         # real: 512
    NUM_STYLES = 18
    N_LAYERS = 15           # 1 + 14, as in the module
    LR_MUL = 0.01

    key = jax.random.PRNGKey(0)
    key, xk, pk = jax.random.split(key, 3)
    x = jax.random.normal(xk, (B, NUM_TOKENS, TOKEN_DIM), dtype=jnp.float32)

    params = init_i_map_params(pk, NUM_TOKENS * TOKEN_DIM,
                               LATENT_DIM * NUM_STYLES,
                               n_layers=N_LAYERS, lr_mul=LR_MUL)

    fwd = jax.jit(functools.partial(i_map_forward, latent_dim=LATENT_DIM,
                                    num_styles=NUM_STYLES, lr_mul=LR_MUL))
    out, feat = fwd(x, params)
    out = jax.block_until_ready(out)
    feat = jax.block_until_ready(feat)

    assert out.shape == (B, NUM_STYLES, LATENT_DIM)
    assert feat.shape == (B, NUM_STYLES, LATENT_DIM)

    # Tight check: reference with identical numerics (bf16 MXU, f32 acc).
    ref_exact = _reference_forward(x, params, LATENT_DIM, NUM_STYLES, LR_MUL,
                                   match_kernel_dtypes=True)
    assert jnp.allclose(out, ref_exact, rtol=2e-3, atol=2e-3), (
        "max abs err vs exact ref: "
        + str(float(jnp.max(jnp.abs(out - ref_exact)))))

    # Loose check: f32-activation reference — bf16 operand drift compounds
    # over 15 layers, so the semantic check uses a coarse tolerance.
    ref_f32 = _reference_forward(x, params, LATENT_DIM, NUM_STYLES, LR_MUL,
                                 match_kernel_dtypes=False)
    assert jnp.allclose(out, ref_f32, rtol=1e-1, atol=1e-1)

    print("KERNEL_OK")
</pallas_src>

<mosaic_0001>
module attributes {stable_mosaic.version = 11 : i64} {
  func.func @_fused_hidden_kernel(%arg0: i32, %arg1: i32, %arg2: memref<2x1152xf32, #tpu.memory_space<vmem>>, %arg3: memref<1x1152x384xbf16, #tpu.memory_space<vmem>>, %arg4: memref<1x1x384xf32, #tpu.memory_space<vmem>>, %arg5: memref<2x1152xf32, #tpu.memory_space<vmem>>, %arg6: memref<2x2x1152xf32, #tpu.memory_space<vmem>>) attributes {dimension_semantics = [#tpu.dimension_semantics<arbitrary>, #tpu.dimension_semantics<arbitrary>], iteration_bounds = array<i64: 14, 3>, scalar_prefetch = 0 : i64, scratch_operands = 1 : i64, tpu.core_type = #tpu.core_type<tc>, window_params = [{pipeline_mode = #tpu.pipeline_mode<synchronous>, transform_indices = @transform_0, window_bounds = array<i64: 2, 1152>}, {transform_indices = @transform_1, window_bounds = array<i64: 1, 1152, 384>}, {transform_indices = @transform_2, window_bounds = array<i64: 1, 1, 384>}, {pipeline_mode = #tpu.pipeline_mode<synchronous>, transform_indices = @transform_3, window_bounds = array<i64: 2, 1152>}]} {
    %c0_i32 = arith.constant 0 : i32
    %0 = arith.cmpi eq, %arg0, %c0_i32 : i32
    %c0_i32_0 = arith.constant 0 : i32
    %1 = arith.cmpi eq, %arg1, %c0_i32_0 : i32
    %2 = arith.andi %0, %1 : i1
    %3 = arith.extui %2 : i1 to i32
    %c0_i32_1 = arith.constant 0 : i32
    %4 = arith.cmpi ne, %3, %c0_i32_1 : i32
    scf.if %4 {
      %c0_17 = arith.constant 0 : index
      %c0_18 = arith.constant 0 : index
      %36 = vector.load %arg2[%c0_17, %c0_18] : memref<2x1152xf32, #tpu.memory_space<vmem>>, vector<2x1152xf32>
      %c0_19 = arith.constant 0 : index
      %c0_20 = arith.constant 0 : index
      %c0_21 = arith.constant 0 : index
      %37 = vector.load %arg6[%c0_19, %c0_20, %c0_21] : memref<2x2x1152xf32, #tpu.memory_space<vmem>>, vector<1x2x1152xf32>
      %38 = vector.shape_cast %37 : vector<1x2x1152xf32> to vector<2x1152xf32>
      %39 = vector.shape_cast %36 : vector<2x1152xf32> to vector<1x2x1152xf32>
      tpu.vector_store %arg6[%c0_19, %c0_20, %c0_21], %39 {strides = array<i32>} : memref<2x2x1152xf32, #tpu.memory_space<vmem>>, vector<1x2x1152xf32>,
    } else {
    }
    %c0 = arith.constant 0 : index
    %c0_2 = arith.constant 0 : index
    %c0_3 = arith.constant 0 : index
    %5 = vector.load %arg6[%c0, %c0_2, %c0_3] : memref<2x2x1152xf32, #tpu.memory_space<vmem>>, vector<1x2x1152xf32>
    %6 = vector.shape_cast %5 : vector<1x2x1152xf32> to vector<2x1152xf32>
    %7 = arith.truncf %6 : vector<2x1152xf32> to vector<2x1152xbf16>
    %c0_4 = arith.constant 0 : index
    %c0_5 = arith.constant 0 : index
    %c0_6 = arith.constant 0 : index
    %8 = vector.load %arg3[%c0_4, %c0_5, %c0_6] : memref<1x1152x384xbf16, #tpu.memory_space<vmem>>, vector<1x1152x384xbf16>
    %9 = vector.shape_cast %8 : vector<1x1152x384xbf16> to vector<1152x384xbf16>
    %cst = arith.constant dense<0.000000e+00> : vector<2x384xf32>
    %10 = tpu.matmul %7, %9, %cst {dimension_numbers = #tpu.dot_dimension_numbers<[1], [0], [0], [1], [0, 0, 1, 1], [], []>} : vector<2x1152xbf16>, vector<1152x384xbf16>, vector<2x384xf32> -> vector<2x384xf32>
    %cst_7 = arith.constant 2.94627825E-4 : f32
    %11 = vector.broadcast %cst_7 : f32 to vector<2x384xf32>
    %12 = arith.mulf %10, %11 : vector<2x384xf32>
    %c0_8 = arith.constant 0 : index
    %c0_9 = arith.constant 0 : index
    %c0_10 = arith.constant 0 : index
    %13 = vector.load %arg4[%c0_8, %c0_9, %c0_10] : memref<1x1x384xf32, #tpu.memory_space<vmem>>, vector<1x1x384xf32>
    %14 = vector.shape_cast %13 : vector<1x1x384xf32> to vector<1x384xf32>
    %15 = vector.broadcast %14 : vector<1x384xf32> to vector<2x384xf32>
    %16 = arith.addf %12, %15 : vector<2x384xf32>
    %cst_11 = arith.constant 0.000000e+00 : f32
    %17 = vector.broadcast %cst_11 : f32 to vector<2x384xf32>
    %18 = arith.cmpf oge, %16, %17 : vector<2x384xf32>
    %cst_12 = arith.constant 1.41421354 : f32
    %19 = vector.broadcast %cst_12 : f32 to vector<2x384xf32>
    %20 = arith.mulf %16, %19 : vector<2x384xf32>
    %cst_13 = arith.constant 0.282842726 : f32
    %21 = vector.broadcast %cst_13 : f32 to vector<2x384xf32>
    %22 = arith.mulf %16, %21 : vector<2x384xf32>
    %23 = arith.select %18, %20, %22 : vector<2x384xi1>, vector<2x384xf32>
    %c384_i32 = arith.constant 384 : i32
    %24 = arith.muli %arg1, %c384_i32 : i32
    %25 = tpu.assume_multiple %24, 384 : i32
    %c1 = arith.constant 1 : index
    %c0_14 = arith.constant 0 : index
    %26 = arith.index_cast %25 : i32 to index
    %27 = vector.load %arg6[%c1, %c0_14, %26] : memref<2x2x1152xf32, #tpu.memory_space<vmem>>, vector<1x2x384xf32>
    %28 = vector.shape_cast %27 : vector<1x2x384xf32> to vector<2x384xf32>
    %29 = vector.shape_cast %23 : vector<2x384xf32> to vector<1x2x384xf32>
    tpu.vector_store %arg6[%c1, %c0_14, %26], %29 {strides = array<i32>} : memref<2x2x1152xf32, #tpu.memory_space<vmem>>, vector<1x2x384xf32>,
    %c13_i32 = arith.constant 13 : i32
    %30 = arith.cmpi eq, %arg0, %c13_i32 : i32
    %31 = arith.extui %30 : i1 to i32
    %c0_i32_15 = arith.constant 0 : i32
    %32 = arith.cmpi ne, %31, %c0_i32_15 : i32
    scf.if %32 {
      %c0_17 = arith.constant 0 : index
      %36 = arith.index_cast %25 : i32 to index
      %37 = vector.load %arg5[%c0_17, %36] : memref<2x1152xf32, #tpu.memory_space<vmem>>, vector<2x384xf32>
      tpu.vector_store %arg5[%c0_17, %36], %23 {strides = array<i32>} : memref<2x1152xf32, #tpu.memory_space<vmem>>, vector<2x384xf32>,
    } else {
    }
    %c2_i32 = arith.constant 2 : i32
    %33 = arith.cmpi eq, %arg1, %c2_i32 : i32
    %34 = arith.extui %33 : i1 to i32
    %c0_i32_16 = arith.constant 0 : i32
    %35 = arith.cmpi ne, %34, %c0_i32_16 : i32
    scf.if %35 {
      %c1_17 = arith.constant 1 : index
      %c0_18 = arith.constant 0 : index
      %c0_19 = arith.constant 0 : index
      %36 = vector.load %arg6[%c1_17, %c0_18, %c0_19] : memref<2x2x1152xf32, #tpu.memory_space<vmem>>, vector<1x2x1152xf32>
      %37 = vector.shape_cast %36 : vector<1x2x1152xf32> to vector<2x1152xf32>
      %c0_20 = arith.constant 0 : index
      %c0_21 = arith.constant 0 : index
      %c0_22 = arith.constant 0 : index
      %38 = vector.load %arg6[%c0_20, %c0_21, %c0_22] : memref<2x2x1152xf32, #tpu.memory_space<vmem>>, vector<1x2x1152xf32>
      %39 = vector.shape_cast %38 : vector<1x2x1152xf32> to vector<2x1152xf32>
      %40 = vector.shape_cast %37 : vector<2x1152xf32> to vector<1x2x1152xf32>
      tpu.vector_store %arg6[%c0_20, %c0_21, %c0_22], %40 {strides = array<i32>} : memref<2x2x1152xf32, #tpu.memory_space<vmem>>, vector<1x2x1152xf32>,
    } else {
    }
    return
  }
  func.func @transform_0(%arg0: i32, %arg1: i32) -> (i32, i32) {
    %c0_i32 = arith.constant 0 : i32
    %c0_i32_0 = arith.constant 0 : i32
    %c0_i32_1 = arith.constant 0 : i32
    return %c0_i32, %c0_i32_0 : i32, i32
  }
  func.func @transform_1(%arg0: i32, %arg1: i32) -> (i32, i32, i32) {
    %c0_i32 = arith.constant 0 : i32
    %c0_i32_0 = arith.constant 0 : i32
    return %arg0, %c0_i32, %arg1 : i32, i32, i32
  }
  func.func @transform_2(%arg0: i32, %arg1: i32) -> (i32, i32, i32) {
    %c0_i32 = arith.constant 0 : i32
    %c0_i32_0 = arith.constant 0 : i32
    return %arg0, %c0_i32, %arg1 : i32, i32, i32
  }
  func.func @transform_3(%arg0: i32, %arg1: i32) -> (i32, i32) {
    %c0_i32 = arith.constant 0 : i32
    %c0_i32_0 = arith.constant 0 : i32
    %c0_i32_1 = arith.constant 0 : i32
    return %c0_i32, %c0_i32_0 : i32, i32
  }
}

module attributes {stable_mosaic.version = 11 : i64} {
  func.func @_eql_fused_lrelu_kernel(%arg0: i32, %arg1: memref<2x1664xf32, #tpu.memory_space<vmem>>, %arg2: memref<1664x384xbf16, #tpu.memory_space<vmem>>, %arg3: memref<1x384xf32, #tpu.memory_space<vmem>>, %arg4: memref<2x384xf32, #tpu.memory_space<vmem>>) attributes {dimension_semantics = [#tpu.dimension_semantics<parallel>], iteration_bounds = array<i64: 3>, scalar_prefetch = 0 : i64, scratch_operands = 0 : i64, tpu.core_type = #tpu.core_type<tc>, window_params = [{pipeline_mode = #tpu.pipeline_mode<synchronous>, transform_indices = @transform_0, window_bounds = array<i64: 2, 1664>}, {transform_indices = @transform_1, window_bounds = array<i64: 1664, 384>}, {transform_indices = @transform_2, window_bounds = array<i64: 1, 384>}, {transform_indices = @transform_3, window_bounds = array<i64: 2, 384>}]} {
    %c0 = arith.constant 0 : index
    %c0_0 = arith.constant 0 : index
    %0 = vector.load %arg1[%c0, %c0_0] : memref<2x1664xf32, #tpu.memory_space<vmem>>, vector<2x1664xf32>
    %1 = arith.truncf %0 : vector<2x1664xf32> to vector<2x1664xbf16>
    %c0_1 = arith.constant 0 : index
    %c0_2 = arith.constant 0 : index
    %2 = vector.load %arg2[%c0_1, %c0_2] : memref<1664x384xbf16, #tpu.memory_space<vmem>>, vector<1664x384xbf16>
    %cst = arith.constant dense<0.000000e+00> : vector<2x384xf32>
    %3 = tpu.matmul %1, %2, %cst {dimension_numbers = #tpu.dot_dimension_numbers<[1], [0], [0], [1], [0, 0, 1, 1], [], []>} : vector<2x1664xbf16>, vector<1664x384xbf16>, vector<2x384xf32> -> vector<2x384xf32>
    %cst_3 = arith.constant 2.45145173E-4 : f32
    %4 = vector.broadcast %cst_3 : f32 to vector<2x384xf32>
    %5 = arith.mulf %3, %4 : vector<2x384xf32>
    %c0_4 = arith.constant 0 : index
    %c0_5 = arith.constant 0 : index
    %6 = vector.load %arg3[%c0_4, %c0_5] : memref<1x384xf32, #tpu.memory_space<vmem>>, vector<1x384xf32>
    %7 = vector.broadcast %6 : vector<1x384xf32> to vector<2x384xf32>
    %8 = arith.addf %5, %7 : vector<2x384xf32>
    %cst_6 = arith.constant 0.000000e+00 : f32
    %9 = vector.broadcast %cst_6 : f32 to vector<2x384xf32>
    %10 = arith.cmpf oge, %8, %9 : vector<2x384xf32>
    %cst_7 = arith.constant 1.41421354 : f32
    %11 = vector.broadcast %cst_7 : f32 to vector<2x384xf32>
    %12 = arith.mulf %8, %11 : vector<2x384xf32>
    %cst_8 = arith.constant 0.282842726 : f32
    %13 = vector.broadcast %cst_8 : f32 to vector<2x384xf32>
    %14 = arith.mulf %8, %13 : vector<2x384xf32>
    %15 = arith.select %10, %12, %14 : vector<2x384xi1>, vector<2x384xf32>
    %c0_9 = arith.constant 0 : index
    %c0_10 = arith.constant 0 : index
    %16 = vector.load %arg4[%c0_9, %c0_10] : memref<2x384xf32, #tpu.memory_space<vmem>>, vector<2x384xf32>
    tpu.vector_store %arg4[%c0_9, %c0_10], %15 {strides = array<i32>} : memref<2x384xf32, #tpu.memory_space<vmem>>, vector<2x384xf32>,
    return
  }
  func.func @transform_0(%arg0: i32) -> (i32, i32) {
    %c0_i32 = arith.constant 0 : i32
    %c0_i32_0 = arith.constant 0 : i32
    %c0_i32_1 = arith.constant 0 : i32
    return %c0_i32, %c0_i32_0 : i32, i32
  }
  func.func @transform_1(%arg0: i32) -> (i32, i32) {
    %c0_i32 = arith.constant 0 : i32
    %c0_i32_0 = arith.constant 0 : i32
    return %c0_i32, %arg0 : i32, i32
  }
  func.func @transform_2(%arg0: i32) -> (i32, i32) {
    %c0_i32 = arith.constant 0 : i32
    %c0_i32_0 = arith.constant 0 : i32
    return %c0_i32, %arg0 : i32, i32
  }
  func.func @transform_3(%arg0: i32) -> (i32, i32) {
    %c0_i32 = arith.constant 0 : i32
    %c0_i32_0 = arith.constant 0 : i32
    return %c0_i32, %arg0 : i32, i32
  }
}

</mosaic_0001>

<llo_original>
// kernel: i_map_forward.3
$region0: #{i_map_forward.3}
  #allocation0 [shape = 'u32[]', space=smem, size = 0x4, offset = 0x4, fixed_abs, tag = 'smem constant byte address 0x4 - core index']
  #allocation1 [shape = 'u32[144,128]{1,0:T(1,128)}', space=vmem, size = 0x12000, scoped, tag = 'internal scratch']
  #allocation2 [shape = 'f32[2,2,1152]{2,1,0:T(2,128)}', space=vmem, size = 0x4800, scoped, tag = 'scratch operand']
  %s0 = inlined_call_operand.vmem [shape: f32[2,1152], index: 0, kind: input, shape index: {}]
  %s1 = inlined_call_operand.hbm [shape: bf16[14,1152,1152], index: 1, kind: input, shape index: {}]
  %s2 = inlined_call_operand.hbm [shape: f32[14,1,1152], index: 2, kind: input, shape index: {}]
  %s3 = inlined_call_operand.vmem [shape: f32[2,1152], index: 3, kind: output, shape index: {}]
  %s4 = sld [smem:[#allocation0]]
  $region65: #{i_map_forward.3} parent=0
    _
  %s6 = ssub.s32 1, %s4
  %s7 = scalar_select 0, %s6, %s4
  $region1: #{i_map_forward.3} parent=0
    #allocation3 [shape = 'u8[1769472]{0}', space=vmem, size = 0x1b0000, scoped, tag = 'input window, operand 1']
    #allocation4 [shape = 's32[2]{0}', space=sflag, size = 0x8, scoped, tag = 'scoped memory for i_map_forward.3']
    #allocation5 [shape = 'u8[3072]{0}', space=vmem, size = 0xc00, scoped, tag = 'input window, operand 2']
    #allocation6 [shape = 's32[2]{0}', space=sflag, size = 0x8, scoped, tag = 'scoped memory for i_map_forward.3']
    %8 = vsyncpa [#allocation4], 0
    %s9 = scalar_lea.sflag [#allocation4], 1
    %10 = vsyncpa %s9, 0
    %11 = vsyncpa [#allocation6], 0
    %s12 = scalar_lea.sflag [#allocation6], 1
    %13 = vsyncpa %s12, 0
    loop: start=0, step=1, limit=44
    $region2: #{i_map_forward.3} parent=1 // loop_pre_header
      _
    $region3: #{i_map_forward.3} parent=1 // loop_header
      %s15 = sphi 0, %s19
      %p16 = scmp.ge.s32.totalorder %s15, 44
      %s22 = sphi 0, %s34
      %s23 = sphi 0, %s30
      %s24 = sphi 0, %s22
      %s25 = sphi 0, %s23
      %s26 = sphi 0, %s24
      %s27 = sphi 0, %s25
      %s35 = sphi 0, %s35
      %s37 = sphi 0, %s35
      %s38 = sphi 0, %s37
      %s52 = sphi 0, %s38
      %s60 = sphi 0, %s62
      %s63 = sphi 0, %s60
      %s64 = sphi 0, %s63
      %s80 = sphi 0, %s64
      %s88 = sphi 0, %s90
      %s91 = sphi 0, %s88
      %s92 = sphi 0, %s91
      %s108 = sphi 0, %s92
      %s112 = sphi 0, %s112
      %s114 = sphi 0, %s112
      %s115 = sphi 0, %s114
      %s129 = sphi 0, %s115
    $region4: #{i_map_forward.3} parent=1 // loop_header_branch
      %18 = sbr.rel (%p16) target = $region8
    $region5: #{i_map_forward.3} parent=1 // loop_body
      %s20 = ssub.s32 %s15, 1
      %s21 = ssub.s32 %s15, 2
      %s28 = sadd.s32 1, %s23
      %p29 = scmp.ge.s32.totalorder %s28, 3
      %s30 = scalar_select %p29, 0, %s28
      %s31 = sadd.s32 1, %s22
      %s32 = scalar_select %p29, %s31, %s22
      %p33 = scmp.ge.s32.totalorder %s32, 14
      %s34 = scalar_select %p33, 0, %s32
      %s36 = sadd.s32 %s35, 1
      %p39 = scmp.eq.s32.totalorder %s15, 41
      %p40 = scmp.ne.s32.totalorder %s35, %s37
      %p41 = scmp.eq.s32.totalorder %s15, 0
      %p42 = por %p40, %p41
      %p43 = scmp.ne.s32.totalorder %s35, %s37
      %p44 = scmp.eq.s32.totalorder %s20, 41
      %p45 = por %p43, %p44
      %p46 = scmp.ne.s32.totalorder %s37, %s38
      %p47 = scmp.eq.s32.totalorder %s20, 0
      %p48 = por %p46, %p47
      %p49 = scmp.ne.s32.totalorder %s37, %s38
      %p50 = scmp.eq.s32.totalorder %s21, 41
      %p51 = por %p49, %p50
      %p53 = scmp.ne.s32.totalorder %s38, %s52
      %p54 = scmp.eq.s32.totalorder %s21, 0
      %p55 = por %p53, %p54
      %s56 = ssub.s32 %s22, %s34
      %s57 = ssub.s32 %s23, %s30
      %s58 = sor.u32 %s56, %s57
      %p59 = scmp.eq.s32.totalorder %s58, 0
      %s61 = sadd.s32 %s60, 1
      %s62 = scalar_select %p59, %s60, %s61
      %p65 = pneg %p59
      %p66 = scmp.eq.s32.totalorder %s15, 41
      %p67 = por %p65, %p66
      %p68 = scmp.ne.s32.totalorder %s60, %s63
      %p69 = scmp.eq.s32.totalorder %s15, 0
      %p70 = por %p68, %p69
      %p71 = scmp.ne.s32.totalorder %s60, %s63
      %p72 = scmp.eq.s32.totalorder %s20, 41
      %p73 = por %p71, %p72
      %p74 = scmp.ne.s32.totalorder %s63, %s64
      %p75 = scmp.eq.s32.totalorder %s20, 0
      %p76 = por %p74, %p75
      %p77 = scmp.ne.s32.totalorder %s63, %s64
      %p78 = scmp.eq.s32.totalorder %s21, 41
      %p79 = por %p77, %p78
      %p81 = scmp.ne.s32.totalorder %s64, %s80
      %p82 = scmp.eq.s32.totalorder %s21, 0
      %p83 = por %p81, %p82
      %s84 = ssub.s32 %s22, %s34
      %s85 = ssub.s32 %s23, %s30
      %s86 = sor.u32 %s84, %s85
      %p87 = scmp.eq.s32.totalorder %s86, 0
      %s89 = sadd.s32 %s88, 1
      %s90 = scalar_select %p87, %s88, %s89
      %p93 = pneg %p87
      %p94 = scmp.eq.s32.totalorder %s15, 41
      %p95 = por %p93, %p94
      %p96 = scmp.ne.s32.totalorder %s88, %s91
      %p97 = scmp.eq.s32.totalorder %s15, 0
      %p98 = por %p96, %p97
      %p99 = scmp.ne.s32.totalorder %s88, %s91
      %p100 = scmp.eq.s32.totalorder %s20, 41
      %p101 = por %p99, %p100
      %p102 = scmp.ne.s32.totalorder %s91, %s92
      %p103 = scmp.eq.s32.totalorder %s20, 0
      %p104 = por %p102, %p103
      %p105 = scmp.ne.s32.totalorder %s91, %s92
      %p106 = scmp.eq.s32.totalorder %s21, 41
      %p107 = por %p105, %p106
      %p109 = scmp.ne.s32.totalorder %s92, %s108
      %p110 = scmp.eq.s32.totalorder %s21, 0
      %p111 = por %p109, %p110
      %s113 = sadd.s32 %s112, 1
      %p116 = scmp.eq.s32.totalorder %s15, 41
      %p117 = scmp.ne.s32.totalorder %s112, %s114
      %p118 = scmp.eq.s32.totalorder %s15, 0
      %p119 = por %p117, %p118
      %p120 = scmp.ne.s32.totalorder %s112, %s114
      %p121 = scmp.eq.s32.totalorder %s20, 41
      %p122 = por %p120, %p121
      %p123 = scmp.ne.s32.totalorder %s114, %s115
      %p124 = scmp.eq.s32.totalorder %s20, 0
      %p125 = por %p123, %p124
      %p126 = scmp.ne.s32.totalorder %s114, %s115
      %p127 = scmp.eq.s32.totalorder %s21, 41
      %p128 = por %p126, %p127
      %p130 = scmp.ne.s32.totalorder %s115, %s129
      %p131 = scmp.eq.s32.totalorder %s21, 0
      %p132 = por %p130, %p131
      %p133 = scmp.le.s32.totalorder 1, %s15
      %p134 = scmp.lt.s32.totalorder %s15, 43
      %p135 = pnand %p133, %p134
      %p136 = pneg %p135
      // Predicated region
      $region9: #{i_map_forward.3} parent=5 // pred_check
        _
      $region10: #{i_map_forward.3} parent=5 // pred_check_branch
        %138 = sbr.rel (%p135) target = $region12
      $region11: #{i_map_forward.3} parent=5 // pred_region
        %s139 = ssub.s32 %s15, 1
        // Predicated region
        $region13: #{i_map_forward.3} parent=11 // pred_check
          %p140 = pneg %p48
        $region14: #{i_map_forward.3} parent=11 // pred_check_branch
          %142 = sbr.rel (%p140) target = $region16
        $region15: #{i_map_forward.3} parent=11 // pred_region
          _
        $region16: #{i_map_forward.3} parent=11 // pred_fallthru
          _
      $region12: #{i_map_forward.3} parent=5 // pred_fallthru
        _
      %p143 = scmp.lt.s32.totalorder %s15, 42
      // Predicated region
      $region17: #{i_map_forward.3} parent=5 // pred_check
        %p144 = pneg %p143
      $region18: #{i_map_forward.3} parent=5 // pred_check_branch
        %146 = sbr.rel (%p144) target = $region20
      $region19: #{i_map_forward.3} parent=5 // pred_region
        // Predicated region
        $region21: #{i_map_forward.3} parent=19 // pred_check
          %p147 = pneg %p70
        $region22: #{i_map_forward.3} parent=19 // pred_check_branch
          %149 = sbr.rel (%p147) target = $region24
        $region23: #{i_map_forward.3} parent=19 // pred_region
          %s150 = sand.u32 %s60, 1
          %s151 = scalar_lea.sflag [#allocation4], %s150
          %s152 = sand.u32 %s60, 1
          %s153 = smul.addr %s152, 1728
          %s154 = scalar_lea.vmem [#allocation3], %s153
          %s155 = smul.u32 3, %s23
          %s157 = ssub.s32 27648, 27648
          %158 = vsyncadd %s151, %s157
          %s159 = smul.addr %s22, 1296
          %s160 = sadd.s32 %s155, %s159
          %s161 = smul.addr %s160, 64
          %s162 = scalar_lea.hbm %s1, %s161
          %s163 = sshll.u32 %s154, 4
          %s164 = int_to_ptr.vmem [resolvable:$true] %s163
          %169 = dma.hbm_to_vmem [thread:$0]  %s162, 27648, %s164, %s151, 576, 192, 12
        $region24: #{i_map_forward.3} parent=19 // pred_fallthru
          _
        // Predicated region
        $region25: #{i_map_forward.3} parent=19 // pred_check
          %p170 = pneg %p98
        $region26: #{i_map_forward.3} parent=19 // pred_check_branch
          %172 = sbr.rel (%p170) target = $region28
        $region27: #{i_map_forward.3} parent=19 // pred_region
          %s173 = sand.u32 %s88, 1
          %s174 = scalar_lea.sflag [#allocation6], %s173
          %s175 = sand.u32 %s88, 1
          %s176 = smul.addr %s175, 3
          %s177 = scalar_lea.vmem [#allocation5], %s176
          %s178 = smul.u32 3, %s23
          %s180 = ssub.s32 48, 48
          %181 = vsyncadd %s174, %s180
          %s182 = smul.addr %s22, 9
          %s183 = sadd.s32 %s178, %s182
          %s184 = smul.addr %s183, 16
          %s185 = scalar_lea.hbm %s2, %s184
          %s187 = sshll.u32 %s177, 4
          %s188 = int_to_ptr.vmem [resolvable:$true] %s187
          %190 = dma.hbm_to_vmem [thread:$0]  %s185, 48, %s188, %s174
        $region28: #{i_map_forward.3} parent=19 // pred_fallthru
          _
      $region20: #{i_map_forward.3} parent=5 // pred_fallthru
        _
      %p191 = scmp.le.s32.totalorder 1, %s15
      %p192 = scmp.lt.s32.totalorder %s15, 43
      %p193 = pnand %p191, %p192
      %p194 = pneg %p193
      // Predicated region
      $region29: #{i_map_forward.3} parent=5 // pred_check
        _
      $region30: #{i_map_forward.3} parent=5 // pred_check_branch
        %196 = sbr.rel (%p193) target = $region32
      $region31: #{i_map_forward.3} parent=5 // pred_region
        %s197 = ssub.s32 %s15, 1
        %s198 = sand.u32 %s63, 1
        %s199 = scalar_lea.sflag [#allocation4], %s198
        %s200 = sand.u32 %s63, 1
        %s201 = smul.addr %s200, 1728
        %s202 = scalar_lea.vmem [#allocation3], %s201
        // Predicated region
        $region33: #{i_map_forward.3} parent=31 // pred_check
          %p203 = pneg %p76
        $region34: #{i_map_forward.3} parent=31 // pred_check_branch
          %205 = sbr.rel (%p203) target = $region36
        $region35: #{i_map_forward.3} parent=31 // pred_region
          %206 = dma.done %s199, 27648
        $region36: #{i_map_forward.3} parent=31 // pred_fallthru
          _
        %s207 = sand.u32 %s91, 1
        %s208 = scalar_lea.sflag [#allocation6], %s207
        %s209 = sand.u32 %s91, 1
        %s210 = smul.addr %s209, 3
        %s211 = scalar_lea.vmem [#allocation5], %s210
        // Predicated region
        $region37: #{i_map_forward.3} parent=31 // pred_check
          %p212 = pneg %p104
        $region38: #{i_map_forward.3} parent=31 // pred_check_branch
          %214 = sbr.rel (%p212) target = $region40
        $region39: #{i_map_forward.3} parent=31 // pred_region
          %215 = dma.done %s208, 48
        $region40: #{i_map_forward.3} parent=31 // pred_fallthru
          _
        %p216 = pneg %p48
        %p217 = pneg %p45
        %s218 = sand.u32 %s63, 1
        %s219 = scalar_lea.sflag [#allocation4], %s218
        %s220 = sand.u32 %s63, 1
        %s221 = smul.addr %s220, 1728
        %s222 = scalar_lea.vmem [#allocation3], %s221
        %p223 = pneg %p76
        %p224 = pneg %p73
        %s225 = sand.u32 %s91, 1
        %s226 = scalar_lea.sflag [#allocation6], %s225
        %s227 = sand.u32 %s91, 1
        %s228 = smul.addr %s227, 3
        %s229 = scalar_lea.vmem [#allocation5], %s228
        %p230 = pneg %p104
        %p231 = pneg %p101
        %p232 = pneg %p125
        %p233 = pneg %p122
        %s234 = smul.u32 3, %s25
        %s235 = smul.u32 3, %s25
        %p237 = scmp.eq.s32.totalorder %s24, 0
        %p238 = scmp.eq.s32.totalorder %s25, 0
        %p239 = pnand %p237, %p238
        %p240 = pneg %p239
        // Predicated region
        $region41: #{i_map_forward.3} parent=31 // pred_check
          _
        $region42: #{i_map_forward.3} parent=31 // pred_check_branch
          %242 = sbr.rel (%p239) target = $region44
        $region43: #{i_map_forward.3} parent=31 // pred_region
          %v243 = vld [vmem:[%s0] sm:$0xff]
          %v244 = vld [vmem:[%s0 + $0x8] sm:$0xff]
          %v245 = vld [vmem:[%s0 + $0x10] sm:$0x3]
          %246 = vst [vmem:[#allocation2] sm:$0xff] %v243
          %247 = vst [vmem:[#allocation2 + $0x8] sm:$0xff] %v244
          %248 = vst [vmem:[#allocation2 + $0x10] sm:$0x3] %v245
        $region44: #{i_map_forward.3} parent=31 // pred_fallthru
          _
        %v249 = vld [vmem:[#allocation2] sm:$0xff]
        %v250 = vld [vmem:[#allocation2 + $0x8] sm:$0xff]
        %v251 = vld [vmem:[#allocation2 + $0x10] sm:$0x3]
        %v255 = vcombine.high %v249, %v249
        %v257 = vunpack.c.l.s4 1983009808
        %v258 = vunpack.c.0.s8 %v257
        %v259 = vlaneseq
        %v260 = vshrl.u32 %v259, 7
        %v261 = vsub.s32 %v258, %v260
        %v262 = vrot.slane %v249, %v261
        %v264 = vunpack.c.l.s4 1983009808
        %v265 = vunpack.c.0.s8 %v264
        %v266 = vlaneseq
        %v267 = vshrl.u32 %v266, 7
        %v268 = vsub.s32 %v265, %v267
        %v269 = vrot.slane %v255, %v268
        %v270 = vcombine.high %v262, %v262
        %v271 = vcombine.high %v269, %v269
        %v272 = vcombine.high %v250, %v250
        %v274 = vunpack.c.l.s4 1983009808
        %v275 = vunpack.c.0.s8 %v274
        %v276 = vlaneseq
        %v277 = vshrl.u32 %v276, 7
        %v278 = vsub.s32 %v275, %v277
        %v279 = vrot.slane %v250, %v278
        %v281 = vunpack.c.l.s4 1983009808
        %v282 = vunpack.c.0.s8 %v281
        %v283 = vlaneseq
        %v284 = vshrl.u32 %v283, 7
        %v285 = vsub.s32 %v282, %v284
        %v286 = vrot.slane %v272, %v285
        %v287 = vcombine.high %v279, %v279
        %v288 = vcombine.high %v286, %v286
        %v290 = vunpack.c.l.s4 1983009808
        %v291 = vunpack.c.0.s8 %v290
        %v292 = vlaneseq
        %v293 = vshrl.u32 %v292, 7
        %v294 = vsub.s32 %v291, %v293
        %v295 = vrot.slane %v251, %v294
        %v305 = vpack.c.bf16 %v262, %v262
        %v306 = vpack.c.bf16 %v270, %v270
        %v307 = vpack.c.bf16 %v269, %v269
        %v308 = vpack.c.bf16 %v271, %v271
        %v309 = vpack.c.bf16 %v279, %v279
        %v310 = vpack.c.bf16 %v287, %v287
        %v311 = vpack.c.bf16 %v286, %v286
        %v312 = vpack.c.bf16 %v288, %v288
        %v313 = vpack.c.bf16 %v295, %v295
        %v314 = vld [vmem:[%s202] sm:$0xff]
        %v315 = vld [vmem:[%s202 + $0x8] sm:$0xf]
        %v316 = vld [vmem:[%s202 + $0xc] sm:$0xff]
        %v317 = vld [vmem:[%s202 + $0x14] sm:$0xf]
        %v318 = vld [vmem:[%s202 + $0x18] sm:$0xff]
        %v319 = vld [vmem:[%s202 + $0x20] sm:$0xf]
        %v320 = vld [vmem:[%s202 + $0x24] sm:$0xff]
        %v321 = vld [vmem:[%s202 + $0x2c] sm:$0xf]
        %v322 = vld [vmem:[%s202 + $0x30] sm:$0xff]
        %v323 = vld [vmem:[%s202 + $0x38] sm:$0xf]
        %v324 = vld [vmem:[%s202 + $0x3c] sm:$0xff]
        %v325 = vld [vmem:[%s202 + $0x44] sm:$0xf]
        %v326 = vld [vmem:[%s202 + $0x48] sm:$0xff]
        %v327 = vld [vmem:[%s202 + $0x50] sm:$0xf]
        %v328 = vld [vmem:[%s202 + $0x54] sm:$0xff]
        %v329 = vld [vmem:[%s202 + $0x5c] sm:$0xf]
        %v330 = vld [vmem:[%s202 + $0x60] sm:$0xff]
        %v331 = vld [vmem:[%s202 + $0x68] sm:$0xf]
        %v332 = vld [vmem:[%s202 + $0x6c] sm:$0xff]
        %v333 = vld [vmem:[%s202 + $0x74] sm:$0xf]
        %v334 = vld [vmem:[%s202 + $0x78] sm:$0xff]
        %v335 = vld [vmem:[%s202 + $0x80] sm:$0xf]
        %v336 = vld [vmem:[%s202 + $0x84] sm:$0xff]
        %v337 = vld [vmem:[%s202 + $0x8c] sm:$0xf]
        %v338 = vld [vmem:[%s202 + $0x90] sm:$0xff]
        %v339 = vld [vmem:[%s202 + $0x98] sm:$0xf]
        %v340 = vld [vmem:[%s202 + $0x9c] sm:$0xff]
        %v341 = vld [vmem:[%s202 + $0xa4] sm:$0xf]
        %v342 = vld [vmem:[%s202 + $0xa8] sm:$0xff]
        %v343 = vld [vmem:[%s202 + $0xb0] sm:$0xf]
        %v344 = vld [vmem:[%s202 + $0xb4] sm:$0xff]
        %v345 = vld [vmem:[%s202 + $0xbc] sm:$0xf]
        %v346 = vld [vmem:[%s202 + $0xc0] sm:$0xff]
        %v347 = vld [vmem:[%s202 + $0xc8] sm:$0xf]
        %v348 = vld [vmem:[%s202 + $0xcc] sm:$0xff]
        %v349 = vld [vmem:[%s202 + $0xd4] sm:$0xf]
        %v350 = vld [vmem:[%s202 + $0xd8] sm:$0xff]
        %v351 = vld [vmem:[%s202 + $0xe0] sm:$0xf]
        %v352 = vld [vmem:[%s202 + $0xe4] sm:$0xff]
        %v353 = vld [vmem:[%s202 + $0xec] sm:$0xf]
        %v354 = vld [vmem:[%s202 + $0xf0] sm:$0xff]
        %v355 = vld [vmem:[%s202 + $0xf8] sm:$0xf]
        %v356 = vld [vmem:[%s202 + $0xfc] sm:$0xff]
        %v357 = vld [vmem:[%s202 + $0x104] sm:$0xf]
        %v358 = vld [vmem:[%s202 + $0x108] sm:$0xff]
        %v359 = vld [vmem:[%s202 + $0x110] sm:$0xf]
        %v360 = vld [vmem:[%s202 + $0x114] sm:$0xff]
        %v361 = vld [vmem:[%s202 + $0x11c] sm:$0xf]
        %v362 = vld [vmem:[%s202 + $0x120] sm:$0xff]
        %v363 = vld [vmem:[%s202 + $0x128] sm:$0xf]
        %v364 = vld [vmem:[%s202 + $0x12c] sm:$0xff]
        %v365 = vld [vmem:[%s202 + $0x134] sm:$0xf]
        %v366 = vld [vmem:[%s202 + $0x138] sm:$0xff]
        %v367 = vld [vmem:[%s202 + $0x140] sm:$0xf]
        %v368 = vld [vmem:[%s202 + $0x144] sm:$0xff]
        %v369 = vld [vmem:[%s202 + $0x14c] sm:$0xf]
        %v370 = vld [vmem:[%s202 + $0x150] sm:$0xff]
        %v371 = vld [vmem:[%s202 + $0x158] sm:$0xf]
        %v372 = vld [vmem:[%s202 + $0x15c] sm:$0xff]
        %v373 = vld [vmem:[%s202 + $0x164] sm:$0xf]
        %v374 = vld [vmem:[%s202 + $0x168] sm:$0xff]
        %v375 = vld [vmem:[%s202 + $0x170] sm:$0xf]
        %v376 = vld [vmem:[%s202 + $0x174] sm:$0xff]
        %v377 = vld [vmem:[%s202 + $0x17c] sm:$0xf]
        %v378 = vld [vmem:[%s202 + $0x180] sm:$0xff]
        %v379 = vld [vmem:[%s202 + $0x188] sm:$0xf]
        %v380 = vld [vmem:[%s202 + $0x18c] sm:$0xff]
        %v381 = vld [vmem:[%s202 + $0x194] sm:$0xf]
        %v382 = vld [vmem:[%s202 + $0x198] sm:$0xff]
        %v383 = vld [vmem:[%s202 + $0x1a0] sm:$0xf]
        %v384 = vld [vmem:[%s202 + $0x1a4] sm:$0xff]
        %v385 = vld [vmem:[%s202 + $0x1ac] sm:$0xf]
        %v386 = vld [vmem:[%s202 + $0x1b0] sm:$0xff]
        %v387 = vld [vmem:[%s202 + $0x1b8] sm:$0xf]
        %v388 = vld [vmem:[%s202 + $0x1bc] sm:$0xff]
        %v389 = vld [vmem:[%s202 + $0x1c4] sm:$0xf]
        %v390 = vld [vmem:[%s202 + $0x1c8] sm:$0xff]
        %v391 = vld [vmem:[%s202 + $0x1d0] sm:$0xf]
        %v392 = vld [vmem:[%s202 + $0x1d4] sm:$0xff]
        %v393 = vld [vmem:[%s202 + $0x1dc] sm:$0xf]
        %v394 = vld [vmem:[%s202 + $0x1e0] sm:$0xff]
        %v395 = vld [vmem:[%s202 + $0x1e8] sm:$0xf]
        %v396 = vld [vmem:[%s202 + $0x1ec] sm:$0xff]
        %v397 = vld [vmem:[%s202 + $0x1f4] sm:$0xf]
        %v398 = vld [vmem:[%s202 + $0x1f8] sm:$0xff]
        %v399 = vld [vmem:[%s202 + $0x200] sm:$0xf]
        %v400 = vld [vmem:[%s202 + $0x204] sm:$0xff]
        %v401 = vld [vmem:[%s202 + $0x20c] sm:$0xf]
        %v402 = vld [vmem:[%s202 + $0x210] sm:$0xff]
        %v403 = vld [vmem:[%s202 + $0x218] sm:$0xf]
        %v404 = vld [vmem:[%s202 + $0x21c] sm:$0xff]
        %v405 = vld [vmem:[%s202 + $0x224] sm:$0xf]
        %v406 = vld [vmem:[%s202 + $0x228] sm:$0xff]
        %v407 = vld [vmem:[%s202 + $0x230] sm:$0xf]
        %v408 = vld [vmem:[%s202 + $0x234] sm:$0xff]
        %v409 = vld [vmem:[%s202 + $0x23c] sm:$0xf]
        %v410 = vld [vmem:[%s202 + $0x240] sm:$0xff]
        %v411 = vld [vmem:[%s202 + $0x248] sm:$0xf]
        %v412 = vld [vmem:[%s202 + $0x24c] sm:$0xff]
        %v413 = vld [vmem:[%s202 + $0x254] sm:$0xf]
        %v414 = vld [vmem:[%s202 + $0x258] sm:$0xff]
        %v415 = vld [vmem:[%s202 + $0x260] sm:$0xf]
        %v416 = vld [vmem:[%s202 + $0x264] sm:$0xff]
        %v417 = vld [vmem:[%s202 + $0x26c] sm:$0xf]
        %v418 = vld [vmem:[%s202 + $0x270] sm:$0xff]
        %v419 = vld [vmem:[%s202 + $0x278] sm:$0xf]
        %v420 = vld [vmem:[%s202 + $0x27c] sm:$0xff]
        %v421 = vld [vmem:[%s202 + $0x284] sm:$0xf]
        %v422 = vld [vmem:[%s202 + $0x288] sm:$0xff]
        %v423 = vld [vmem:[%s202 + $0x290] sm:$0xf]
        %v424 = vld [vmem:[%s202 + $0x294] sm:$0xff]
        %v425 = vld [vmem:[%s202 + $0x29c] sm:$0xf]
        %v426 = vld [vmem:[%s202 + $0x2a0] sm:$0xff]
        %v427 = vld [vmem:[%s202 + $0x2a8] sm:$0xf]
        %v428 = vld [vmem:[%s202 + $0x2ac] sm:$0xff]
        %v429 = vld [vmem:[%s202 + $0x2b4] sm:$0xf]
        %v430 = vld [vmem:[%s202 + $0x2b8] sm:$0xff]
        %v431 = vld [vmem:[%s202 + $0x2c0] sm:$0xf]
        %v432 = vld [vmem:[%s202 + $0x2c4] sm:$0xff]
        %v433 = vld [vmem:[%s202 + $0x2cc] sm:$0xf]
        %v434 = vld [vmem:[%s202 + $0x2d0] sm:$0xff]
        %v435 = vld [vmem:[%s202 + $0x2d8] sm:$0xf]
        %v436 = vld [vmem:[%s202 + $0x2dc] sm:$0xff]
        %v437 = vld [vmem:[%s202 + $0x2e4] sm:$0xf]
        %v438 = vld [vmem:[%s202 + $0x2e8] sm:$0xff]
        %v439 = vld [vmem:[%s202 + $0x2f0] sm:$0xf]
        %v440 = vld [vmem:[%s202 + $0x2f4] sm:$0xff]
        %v441 = vld [vmem:[%s202 + $0x2fc] sm:$0xf]
        %v442 = vld [vmem:[%s202 + $0x300] sm:$0xff]
        %v443 = vld [vmem:[%s202 + $0x308] sm:$0xf]
        %v444 = vld [vmem:[%s202 + $0x30c] sm:$0xff]
        %v445 = vld [vmem:[%s202 + $0x314] sm:$0xf]
        %v446 = vld [vmem:[%s202 + $0x318] sm:$0xff]
        %v447 = vld [vmem:[%s202 + $0x320] sm:$0xf]
        %v448 = vld [vmem:[%s202 + $0x324] sm:$0xff]
        %v449 = vld [vmem:[%s202 + $0x32c] sm:$0xf]
        %v450 = vld [vmem:[%s202 + $0x330] sm:$0xff]
        %v451 = vld [vmem:[%s202 + $0x338] sm:$0xf]
        %v452 = vld [vmem:[%s202 + $0x33c] sm:$0xff]
        %v453 = vld [vmem:[%s202 + $0x344] sm:$0xf]
        %v454 = vld [vmem:[%s202 + $0x348] sm:$0xff]
        %v455 = vld [vmem:[%s202 + $0x350] sm:$0xf]
        %v456 = vld [vmem:[%s202 + $0x354] sm:$0xff]
        %v457 = vld [vmem:[%s202 + $0x35c] sm:$0xf]
        %v458 = vld [vmem:[%s202 + $0x360] sm:$0xff]
        %v459 = vld [vmem:[%s202 + $0x368] sm:$0xf]
        %v460 = vld [vmem:[%s202 + $0x36c] sm:$0xff]
        %v461 = vld [vmem:[%s202 + $0x374] sm:$0xf]
        %v462 = vld [vmem:[%s202 + $0x378] sm:$0xff]
        %v463 = vld [vmem:[%s202 + $0x380] sm:$0xf]
        %v464 = vld [vmem:[%s202 + $0x384] sm:$0xff]
        %v465 = vld [vmem:[%s202 + $0x38c] sm:$0xf]
        %v466 = vld [vmem:[%s202 + $0x390] sm:$0xff]
        %v467 = vld [vmem:[%s202 + $0x398] sm:$0xf]
        %v468 = vld [vmem:[%s202 + $0x39c] sm:$0xff]
        %v469 = vld [vmem:[%s202 + $0x3a4] sm:$0xf]
        %v470 = vld [vmem:[%s202 + $0x3a8] sm:$0xff]
        %v471 = vld [vmem:[%s202 + $0x3b0] sm:$0xf]
        %v472 = vld [vmem:[%s202 + $0x3b4] sm:$0xff]
        %v473 = vld [vmem:[%s202 + $0x3bc] sm:$0xf]
        %v474 = vld [vmem:[%s202 + $0x3c0] sm:$0xff]
        %v475 = vld [vmem:[%s202 + $0x3c8] sm:$0xf]
        %v476 = vld [vmem:[%s202 + $0x3cc] sm:$0xff]
        %v477 = vld [vmem:[%s202 + $0x3d4] sm:$0xf]
        %v478 = vld [vmem:[%s202 + $0x3d8] sm:$0xff]
        %v479 = vld [vmem:[%s202 + $0x3e0] sm:$0xf]
        %v480 = vld [vmem:[%s202 + $0x3e4] sm:$0xff]
        %v481 = vld [vmem:[%s202 + $0x3ec] sm:$0xf]
        %v482 = vld [vmem:[%s202 + $0x3f0] sm:$0xff]
        %v483 = vld [vmem:[%s202 + $0x3f8] sm:$0xf]
        %v484 = vld [vmem:[%s202 + $0x3fc] sm:$0xff]
        %v485 = vld [vmem:[%s202 + $0x404] sm:$0xf]
        %v486 = vld [vmem:[%s202 + $0x408] sm:$0xff]
        %v487 = vld [vmem:[%s202 + $0x410] sm:$0xf]
        %v488 = vld [vmem:[%s202 + $0x414] sm:$0xff]
        %v489 = vld [vmem:[%s202 + $0x41c] sm:$0xf]
        %v490 = vld [vmem:[%s202 + $0x420] sm:$0xff]
        %v491 = vld [vmem:[%s202 + $0x428] sm:$0xf]
        %v492 = vld [vmem:[%s202 + $0x42c] sm:$0xff]
        %v493 = vld [vmem:[%s202 + $0x434] sm:$0xf]
        %v494 = vld [vmem:[%s202 + $0x438] sm:$0xff]
        %v495 = vld [vmem:[%s202 + $0x440] sm:$0xf]
        %v496 = vld [vmem:[%s202 + $0x444] sm:$0xff]
        %v497 = vld [vmem:[%s202 + $0x44c] sm:$0xf]
        %v498 = vld [vmem:[%s202 + $0x450] sm:$0xff]
        %v499 = vld [vmem:[%s202 + $0x458] sm:$0xf]
        %v500 = vld [vmem:[%s202 + $0x45c] sm:$0xff]
        %v501 = vld [vmem:[%s202 + $0x464] sm:$0xf]
        %v502 = vld [vmem:[%s202 + $0x468] sm:$0xff]
        %v503 = vld [vmem:[%s202 + $0x470] sm:$0xf]
        %v504 = vld [vmem:[%s202 + $0x474] sm:$0xff]
        %v505 = vld [vmem:[%s202 + $0x47c] sm:$0xf]
        %v506 = vld [vmem:[%s202 + $0x480] sm:$0xff]
        %v507 = vld [vmem:[%s202 + $0x488] sm:$0xf]
        %v508 = vld [vmem:[%s202 + $0x48c] sm:$0xff]
        %v509 = vld [vmem:[%s202 + $0x494] sm:$0xf]
        %v510 = vld [vmem:[%s202 + $0x498] sm:$0xff]
        %v511 = vld [vmem:[%s202 + $0x4a0] sm:$0xf]
        %v512 = vld [vmem:[%s202 + $0x4a4] sm:$0xff]
        %v513 = vld [vmem:[%s202 + $0x4ac] sm:$0xf]
        %v514 = vld [vmem:[%s202 + $0x4b0] sm:$0xff]
        %v515 = vld [vmem:[%s202 + $0x4b8] sm:$0xf]
        %v516 = vld [vmem:[%s202 + $0x4bc] sm:$0xff]
        %v517 = vld [vmem:[%s202 + $0x4c4] sm:$0xf]
        %v518 = vld [vmem:[%s202 + $0x4c8] sm:$0xff]
        %v519 = vld [vmem:[%s202 + $0x4d0] sm:$0xf]
        %v520 = vld [vmem:[%s202 + $0x4d4] sm:$0xff]
        %v521 = vld [vmem:[%s202 + $0x4dc] sm:$0xf]
        %v522 = vld [vmem:[%s202 + $0x4e0] sm:$0xff]
        %v523 = vld [vmem:[%s202 + $0x4e8] sm:$0xf]
        %v524 = vld [vmem:[%s202 + $0x4ec] sm:$0xff]
        %v525 = vld [vmem:[%s202 + $0x4f4] sm:$0xf]
        %v526 = vld [vmem:[%s202 + $0x4f8] sm:$0xff]
        %v527 = vld [vmem:[%s202 + $0x500] sm:$0xf]
        %v528 = vld [vmem:[%s202 + $0x504] sm:$0xff]
        %v529 = vld [vmem:[%s202 + $0x50c] sm:$0xf]
        %v530 = vld [vmem:[%s202 + $0x510] sm:$0xff]
        %v531 = vld [vmem:[%s202 + $0x518] sm:$0xf]
        %v532 = vld [vmem:[%s202 + $0x51c] sm:$0xff]
        %v533 = vld [vmem:[%s202 + $0x524] sm:$0xf]
        %v534 = vld [vmem:[%s202 + $0x528] sm:$0xff]
        %v535 = vld [vmem:[%s202 + $0x530] sm:$0xf]
        %v536 = vld [vmem:[%s202 + $0x534] sm:$0xff]
        %v537 = vld [vmem:[%s202 + $0x53c] sm:$0xf]
        %v538 = vld [vmem:[%s202 + $0x540] sm:$0xff]
        %v539 = vld [vmem:[%s202 + $0x548] sm:$0xf]
        %v540 = vld [vmem:[%s202 + $0x54c] sm:$0xff]
        %v541 = vld [vmem:[%s202 + $0x554] sm:$0xf]
        %v542 = vld [vmem:[%s202 + $0x558] sm:$0xff]
        %v543 = vld [vmem:[%s202 + $0x560] sm:$0xf]
        %v544 = vld [vmem:[%s202 + $0x564] sm:$0xff]
        %v545 = vld [vmem:[%s202 + $0x56c] sm:$0xf]
        %v546 = vld [vmem:[%s202 + $0x570] sm:$0xff]
        %v547 = vld [vmem:[%s202 + $0x578] sm:$0xf]
        %v548 = vld [vmem:[%s202 + $0x57c] sm:$0xff]
        %v549 = vld [vmem:[%s202 + $0x584] sm:$0xf]
        %v550 = vld [vmem:[%s202 + $0x588] sm:$0xff]
        %v551 = vld [vmem:[%s202 + $0x590] sm:$0xf]
        %v552 = vld [vmem:[%s202 + $0x594] sm:$0xff]
        %v553 = vld [vmem:[%s202 + $0x59c] sm:$0xf]
        %v554 = vld [vmem:[%s202 + $0x5a0] sm:$0xff]
        %v555 = vld [vmem:[%s202 + $0x5a8] sm:$0xf]
        %v556 = vld [vmem:[%s202 + $0x5ac] sm:$0xff]
        %v557 = vld [vmem:[%s202 + $0x5b4] sm:$0xf]
        %v558 = vld [vmem:[%s202 + $0x5b8] sm:$0xff]
        %v559 = vld [vmem:[%s202 + $0x5c0] sm:$0xf]
        %v560 = vld [vmem:[%s202 + $0x5c4] sm:$0xff]
        %v561 = vld [vmem:[%s202 + $0x5cc] sm:$0xf]
        %v562 = vld [vmem:[%s202 + $0x5d0] sm:$0xff]
        %v563 = vld [vmem:[%s202 + $0x5d8] sm:$0xf]
        %v564 = vld [vmem:[%s202 + $0x5dc] sm:$0xff]
        %v565 = vld [vmem:[%s202 + $0x5e4] sm:$0xf]
        %v566 = vld [vmem:[%s202 + $0x5e8] sm:$0xff]
        %v567 = vld [vmem:[%s202 + $0x5f0] sm:$0xf]
        %v568 = vld [vmem:[%s202 + $0x5f4] sm:$0xff]
        %v569 = vld [vmem:[%s202 + $0x5fc] sm:$0xf]
        %v570 = vld [vmem:[%s202 + $0x600] sm:$0xff]
        %v571 = vld [vmem:[%s202 + $0x608] sm:$0xf]
        %v572 = vld [vmem:[%s202 + $0x60c] sm:$0xff]
        %v573 = vld [vmem:[%s202 + $0x614] sm:$0xf]
        %v574 = vld [vmem:[%s202 + $0x618] sm:$0xff]
        %v575 = vld [vmem:[%s202 + $0x620] sm:$0xf]
        %v576 = vld [vmem:[%s202 + $0x624] sm:$0xff]
        %v577 = vld [vmem:[%s202 + $0x62c] sm:$0xf]
        %v578 = vld [vmem:[%s202 + $0x630] sm:$0xff]
        %v579 = vld [vmem:[%s202 + $0x638] sm:$0xf]
        %v580 = vld [vmem:[%s202 + $0x63c] sm:$0xff]
        %v581 = vld [vmem:[%s202 + $0x644] sm:$0xf]
        %v582 = vld [vmem:[%s202 + $0x648] sm:$0xff]
        %v583 = vld [vmem:[%s202 + $0x650] sm:$0xf]
        %v584 = vld [vmem:[%s202 + $0x654] sm:$0xff]
        %v585 = vld [vmem:[%s202 + $0x65c] sm:$0xf]
        %v586 = vld [vmem:[%s202 + $0x660] sm:$0xff]
        %v587 = vld [vmem:[%s202 + $0x668] sm:$0xf]
        %v588 = vld [vmem:[%s202 + $0x66c] sm:$0xff]
        %v589 = vld [vmem:[%s202 + $0x674] sm:$0xf]
        %v590 = vld [vmem:[%s202 + $0x678] sm:$0xff]
        %v591 = vld [vmem:[%s202 + $0x680] sm:$0xf]
        %v592 = vld [vmem:[%s202 + $0x684] sm:$0xff]
        %v593 = vld [vmem:[%s202 + $0x68c] sm:$0xf]
        %v594 = vld [vmem:[%s202 + $0x690] sm:$0xff]
        %v595 = vld [vmem:[%s202 + $0x698] sm:$0xf]
        %v596 = vld [vmem:[%s202 + $0x69c] sm:$0xff]
        %v597 = vld [vmem:[%s202 + $0x6a4] sm:$0xf]
        %v598 = vld [vmem:[%s202 + $0x6a8] sm:$0xff]
        %v599 = vld [vmem:[%s202 + $0x6b0] sm:$0xf]
        %v600 = vld [vmem:[%s202 + $0x6b4] sm:$0xff]
        %v601 = vld [vmem:[%s202 + $0x6bc] sm:$0xf]
        %v890 = vunpack.c.l.b16 %v314
        %v891 = vunpack.c.h.b16 %v314
        %v892 = vunpack.c.l.b16 %v315
        %v893 = vunpack.c.l.b16 %v316
        %v894 = vunpack.c.h.b16 %v316
        %v895 = vunpack.c.l.b16 %v317
        %v896 = vunpack.c.l.b16 %v318
        %v897 = vunpack.c.h.b16 %v318
        %v898 = vunpack.c.l.b16 %v319
        %v899 = vunpack.c.l.b16 %v320
        %v900 = vunpack.c.h.b16 %v320
        %v901 = vunpack.c.l.b16 %v321
        %v902 = vunpack.c.l.b16 %v322
        %v903 = vunpack.c.h.b16 %v322
        %v904 = vunpack.c.l.b16 %v323
        %v905 = vunpack.c.l.b16 %v324
        %v906 = vunpack.c.h.b16 %v324
        %v907 = vunpack.c.l.b16 %v325
        %v908 = vunpack.c.l.b16 %v326
        %v909 = vunpack.c.h.b16 %v326
        %v910 = vunpack.c.l.b16 %v327
        %v911 = vunpack.c.l.b16 %v328
        %v912 = vunpack.c.h.b16 %v328
        %v913 = vunpack.c.l.b16 %v329
        %v914 = vunpack.c.l.b16 %v330
        %v915 = vunpack.c.h.b16 %v330
        %v916 = vunpack.c.l.b16 %v331
        %v917 = vunpack.c.l.b16 %v332
        %v918 = vunpack.c.h.b16 %v332
        %v919 = vunpack.c.l.b16 %v333
        %v920 = vunpack.c.l.b16 %v334
        %v921 = vunpack.c.h.b16 %v334
        %v922 = vunpack.c.l.b16 %v335
        %v923 = vunpack.c.l.b16 %v336
        %v924 = vunpack.c.h.b16 %v336
        %v925 = vunpack.c.l.b16 %v337
        %v926 = vunpack.c.l.b16 %v338
        %v927 = vunpack.c.h.b16 %v338
        %v928 = vunpack.c.l.b16 %v339
        %v929 = vunpack.c.l.b16 %v340
        %v930 = vunpack.c.h.b16 %v340
        %v931 = vunpack.c.l.b16 %v341
        %v932 = vunpack.c.l.b16 %v342
        %v933 = vunpack.c.h.b16 %v342
        %v934 = vunpack.c.l.b16 %v343
        %v935 = vunpack.c.l.b16 %v344
        %v936 = vunpack.c.h.b16 %v344
        %v937 = vunpack.c.l.b16 %v345
        %v938 = vunpack.c.l.b16 %v346
        %v939 = vunpack.c.h.b16 %v346
        %v940 = vunpack.c.l.b16 %v347
        %v941 = vunpack.c.l.b16 %v348
        %v942 = vunpack.c.h.b16 %v348
        %v943 = vunpack.c.l.b16 %v349
        %v944 = vunpack.c.l.b16 %v350
        %v945 = vunpack.c.h.b16 %v350
        %v946 = vunpack.c.l.b16 %v351
        %v947 = vunpack.c.l.b16 %v352
        %v948 = vunpack.c.h.b16 %v352
        %v949 = vunpack.c.l.b16 %v353
        %v950 = vunpack.c.l.b16 %v354
        %v951 = vunpack.c.h.b16 %v354
        %v952 = vunpack.c.l.b16 %v355
        %v953 = vunpack.c.l.b16 %v356
        %v954 = vunpack.c.h.b16 %v356
        %v955 = vunpack.c.l.b16 %v357
        %v956 = vunpack.c.l.b16 %v358
        %v957 = vunpack.c.h.b16 %v358
        %v958 = vunpack.c.l.b16 %v359
        %v959 = vunpack.c.l.b16 %v360
        %v960 = vunpack.c.h.b16 %v360
        %v961 = vunpack.c.l.b16 %v361
        %v962 = vunpack.c.l.b16 %v362
        %v963 = vunpack.c.h.b16 %v362
        %v964 = vunpack.c.l.b16 %v363
        %v965 = vunpack.c.l.b16 %v364
        %v966 = vunpack.c.h.b16 %v364
        %v967 = vunpack.c.l.b16 %v365
        %v968 = vunpack.c.l.b16 %v366
        %v969 = vunpack.c.h.b16 %v366
        %v970 = vunpack.c.l.b16 %v367
        %v971 = vunpack.c.l.b16 %v368
        %v972 = vunpack.c.h.b16 %v368
        %v973 = vunpack.c.l.b16 %v369
        %v974 = vunpack.c.l.b16 %v370
        %v975 = vunpack.c.h.b16 %v370
        %v976 = vunpack.c.l.b16 %v371
        %v977 = vunpack.c.l.b16 %v372
        %v978 = vunpack.c.h.b16 %v372
        %v979 = vunpack.c.l.b16 %v373
        %v980 = vunpack.c.l.b16 %v374
        %v981 = vunpack.c.h.b16 %v374
        %v982 = vunpack.c.l.b16 %v375
        %v983 = vunpack.c.l.b16 %v376
        %v984 = vunpack.c.h.b16 %v376
        %v985 = vunpack.c.l.b16 %v377
        %v986 = vunpack.c.l.b16 %v378
        %v987 = vunpack.c.h.b16 %v378
        %v988 = vunpack.c.l.b16 %v379
        %v989 = vunpack.c.l.b16 %v380
        %v990 = vunpack.c.h.b16 %v380
        %v991 = vunpack.c.l.b16 %v381
        %v992 = vunpack.c.l.b16 %v382
        %v993 = vunpack.c.h.b16 %v382
        %v994 = vunpack.c.l.b16 %v383
        %v995 = vunpack.c.l.b16 %v384
        %v996 = vunpack.c.h.b16 %v384
        %v997 = vunpack.c.l.b16 %v385
        %v998 = vunpack.c.l.b16 %v386
        %v999 = vunpack.c.h.b16 %v386
        %v1000 = vunpack.c.l.b16 %v387
        %v1001 = vunpack.c.l.b16 %v388
        %v1002 = vunpack.c.h.b16 %v388
        %v1003 = vunpack.c.l.b16 %v389
        %v1004 = vunpack.c.l.b16 %v390
        %v1005 = vunpack.c.h.b16 %v390
        %v1006 = vunpack.c.l.b16 %v391
        %v1007 = vunpack.c.l.b16 %v392
        %v1008 = vunpack.c.h.b16 %v392
        %v1009 = vunpack.c.l.b16 %v393
        %v1010 = vunpack.c.l.b16 %v394
        %v1011 = vunpack.c.h.b16 %v394
        %v1012 = vunpack.c.l.b16 %v395
        %v1013 = vunpack.c.l.b16 %v396
        %v1014 = vunpack.c.h.b16 %v396
        %v1015 = vunpack.c.l.b16 %v397
        %v1016 = vunpack.c.l.b16 %v398
        %v1017 = vunpack.c.h.b16 %v398
        %v1018 = vunpack.c.l.b16 %v399
        %v1019 = vunpack.c.l.b16 %v400
        %v1020 = vunpack.c.h.b16 %v400
        %v1021 = vunpack.c.l.b16 %v401
        %v1022 = vunpack.c.l.b16 %v402
        %v1023 = vunpack.c.h.b16 %v402
        %v1024 = vunpack.c.l.b16 %v403
        %v1025 = vunpack.c.l.b16 %v404
        %v1026 = vunpack.c.h.b16 %v404
        %v1027 = vunpack.c.l.b16 %v405
        %v1028 = vunpack.c.l.b16 %v406
        %v1029 = vunpack.c.h.b16 %v406
        %v1030 = vunpack.c.l.b16 %v407
        %v1031 = vunpack.c.l.b16 %v408
        %v1032 = vunpack.c.h.b16 %v408
        %v1033 = vunpack.c.l.b16 %v409
        %v1034 = vunpack.c.l.b16 %v410
        %v1035 = vunpack.c.h.b16 %v410
        %v1036 = vunpack.c.l.b16 %v411
        %v1037 = vunpack.c.l.b16 %v412
        %v1038 = vunpack.c.h.b16 %v412
        %v1039 = vunpack.c.l.b16 %v413
        %v1040 = vunpack.c.l.b16 %v414
        %v1041 = vunpack.c.h.b16 %v414
        %v1042 = vunpack.c.l.b16 %v415
        %v1043 = vunpack.c.l.b16 %v416
        %v1044 = vunpack.c.h.b16 %v416
        %v1045 = vunpack.c.l.b16 %v417
        %v1046 = vunpack.c.l.b16 %v418
        %v1047 = vunpack.c.h.b16 %v418
        %v1048 = vunpack.c.l.b16 %v419
        %v1049 = vunpack.c.l.b16 %v420
        %v1050 = vunpack.c.h.b16 %v420
        %v1051 = vunpack.c.l.b16 %v421
        %v1052 = vunpack.c.l.b16 %v422
        %v1053 = vunpack.c.h.b16 %v422
        %v1054 = vunpack.c.l.b16 %v423
        %v1055 = vunpack.c.l.b16 %v424
        %v1056 = vunpack.c.h.b16 %v424
        %v1057 = vunpack.c.l.b16 %v425
        %v1058 = vunpack.c.l.b16 %v426
        %v1059 = vunpack.c.h.b16 %v426
        %v1060 = vunpack.c.l.b16 %v427
        %v1061 = vunpack.c.l.b16 %v428
        %v1062 = vunpack.c.h.b16 %v428
        %v1063 = vunpack.c.l.b16 %v429
        %v1064 = vunpack.c.l.b16 %v430
        %v1065 = vunpack.c.h.b16 %v430
        %v1066 = vunpack.c.l.b16 %v431
        %v1067 = vunpack.c.l.b16 %v432
        %v1068 = vunpack.c.h.b16 %v432
        %v1069 = vunpack.c.l.b16 %v433
        %v1070 = vunpack.c.l.b16 %v434
        %v1071 = vunpack.c.h.b16 %v434
        %v1072 = vunpack.c.l.b16 %v435
        %v1073 = vunpack.c.l.b16 %v436
        %v1074 = vunpack.c.h.b16 %v436
        %v1075 = vunpack.c.l.b16 %v437
        %v1076 = vunpack.c.l.b16 %v438
        %v1077 = vunpack.c.h.b16 %v438
        %v1078 = vunpack.c.l.b16 %v439
        %v1079 = vunpack.c.l.b16 %v440
        %v1080 = vunpack.c.h.b16 %v440
        %v1081 = vunpack.c.l.b16 %v441
        %v1082 = vunpack.c.l.b16 %v442
        %v1083 = vunpack.c.h.b16 %v442
        %v1084 = vunpack.c.l.b16 %v443
        %v1085 = vunpack.c.l.b16 %v444
        %v1086 = vunpack.c.h.b16 %v444
        %v1087 = vunpack.c.l.b16 %v445
        %v1088 = vunpack.c.l.b16 %v446
        %v1089 = vunpack.c.h.b16 %v446
        %v1090 = vunpack.c.l.b16 %v447
        %v1091 = vunpack.c.l.b16 %v448
        %v1092 = vunpack.c.h.b16 %v448
        %v1093 = vunpack.c.l.b16 %v449
        %v1094 = vunpack.c.l.b16 %v450
        %v1095 = vunpack.c.h.b16 %v450
        %v1096 = vunpack.c.l.b16 %v451
        %v1097 = vunpack.c.l.b16 %v452
        %v1098 = vunpack.c.h.b16 %v452
        %v1099 = vunpack.c.l.b16 %v453
        %v1100 = vunpack.c.l.b16 %v454
        %v1101 = vunpack.c.h.b16 %v454
        %v1102 = vunpack.c.l.b16 %v455
        %v1103 = vunpack.c.l.b16 %v456
        %v1104 = vunpack.c.h.b16 %v456
        %v1105 = vunpack.c.l.b16 %v457
        %v1106 = vunpack.c.l.b16 %v458
        %v1107 = vunpack.c.h.b16 %v458
        %v1108 = vunpack.c.l.b16 %v459
        %v1109 = vunpack.c.l.b16 %v460
        %v1110 = vunpack.c.h.b16 %v460
        %v1111 = vunpack.c.l.b16 %v461
        %v1112 = vunpack.c.l.b16 %v462
        %v1113 = vunpack.c.h.b16 %v462
        %v1114 = vunpack.c.l.b16 %v463
        %v1115 = vunpack.c.l.b16 %v464
        %v1116 = vunpack.c.h.b16 %v464
        %v1117 = vunpack.c.l.b16 %v465
        %v1118 = vunpack.c.l.b16 %v466
        %v1119 = vunpack.c.h.b16 %v466
        %v1120 = vunpack.c.l.b16 %v467
        %v1121 = vunpack.c.l.b16 %v468
        %v1122 = vunpack.c.h.b16 %v468
        %v1123 = vunpack.c.l.b16 %v469
        %v1124 = vunpack.c.l.b16 %v470
        %v1125 = vunpack.c.h.b16 %v470
        %v1126 = vunpack.c.l.b16 %v471
        %v1127 = vunpack.c.l.b16 %v472
        %v1128 = vunpack.c.h.b16 %v472
        %v1129 = vunpack.c.l.b16 %v473
        %v1130 = vunpack.c.l.b16 %v474
        %v1131 = vunpack.c.h.b16 %v474
        %v1132 = vunpack.c.l.b16 %v475
        %v1133 = vunpack.c.l.b16 %v476
        %v1134 = vunpack.c.h.b16 %v476
        %v1135 = vunpack.c.l.b16 %v477
        %v1136 = vunpack.c.l.b16 %v478
        %v1137 = vunpack.c.h.b16 %v478
        %v1138 = vunpack.c.l.b16 %v479
        %v1139 = vunpack.c.l.b16 %v480
        %v1140 = vunpack.c.h.b16 %v480
        %v1141 = vunpack.c.l.b16 %v481
        %v1142 = vunpack.c.l.b16 %v482
        %v1143 = vunpack.c.h.b16 %v482
        %v1144 = vunpack.c.l.b16 %v483
        %v1145 = vunpack.c.l.b16 %v484
        %v1146 = vunpack.c.h.b16 %v484
        %v1147 = vunpack.c.l.b16 %v485
        %v1148 = vunpack.c.l.b16 %v486
        %v1149 = vunpack.c.h.b16 %v486
        %v1150 = vunpack.c.l.b16 %v487
        %v1151 = vunpack.c.l.b16 %v488
        %v1152 = vunpack.c.h.b16 %v488
        %v1153 = vunpack.c.l.b16 %v489
        %v1154 = vunpack.c.l.b16 %v490
        %v1155 = vunpack.c.h.b16 %v490
        %v1156 = vunpack.c.l.b16 %v491
        %v1157 = vunpack.c.l.b16 %v492
        %v1158 = vunpack.c.h.b16 %v492
        %v1159 = vunpack.c.l.b16 %v493
        %v1160 = vunpack.c.l.b16 %v494
        %v1161 = vunpack.c.h.b16 %v494
        %v1162 = vunpack.c.l.b16 %v495
        %v1163 = vunpack.c.l.b16 %v496
        %v1164 = vunpack.c.h.b16 %v496
        %v1165 = vunpack.c.l.b16 %v497
        %v1166 = vunpack.c.l.b16 %v498
        %v1167 = vunpack.c.h.b16 %v498
        %v1168 = vunpack.c.l.b16 %v499
        %v1169 = vunpack.c.l.b16 %v500
        %v1170 = vunpack.c.h.b16 %v500
        %v1171 = vunpack.c.l.b16 %v501
        %v1172 = vunpack.c.l.b16 %v502
        %v1173 = vunpack.c.h.b16 %v502
        %v1174 = vunpack.c.l.b16 %v503
        %v1175 = vunpack.c.l.b16 %v504
        %v1176 = vunpack.c.h.b16 %v504
        %v1177 = vunpack.c.l.b16 %v505
        %v1178 = vunpack.c.l.b16 %v506
        %v1179 = vunpack.c.h.b16 %v506
        %v1180 = vunpack.c.l.b16 %v507
        %v1181 = vunpack.c.l.b16 %v508
        %v1182 = vunpack.c.h.b16 %v508
        %v1183 = vunpack.c.l.b16 %v509
        %v1184 = vunpack.c.l.b16 %v510
        %v1185 = vunpack.c.h.b16 %v510
        %v1186 = vunpack.c.l.b16 %v511
        %v1187 = vunpack.c.l.b16 %v512
        %v1188 = vunpack.c.h.b16 %v512
        %v1189 = vunpack.c.l.b16 %v513
        %v1190 = vunpack.c.l.b16 %v514
        %v1191 = vunpack.c.h.b16 %v514
        %v1192 = vunpack.c.l.b16 %v515
        %v1193 = vunpack.c.l.b16 %v516
        %v1194 = vunpack.c.h.b16 %v516
        %v1195 = vunpack.c.l.b16 %v517
        %v1196 = vunpack.c.l.b16 %v518
        %v1197 = vunpack.c.h.b16 %v518
        %v1198 = vunpack.c.l.b16 %v519
        %v1199 = vunpack.c.l.b16 %v520
        %v1200 = vunpack.c.h.b16 %v520
        %v1201 = vunpack.c.l.b16 %v521
        %v1202 = vunpack.c.l.b16 %v522
        %v1203 = vunpack.c.h.b16 %v522
        %v1204 = vunpack.c.l.b16 %v523
        %v1205 = vunpack.c.l.b16 %v524
        %v1206 = vunpack.c.h.b16 %v524
        %v1207 = vunpack.c.l.b16 %v525
        %v1208 = vunpack.c.l.b16 %v526
        %v1209 = vunpack.c.h.b16 %v526
        %v1210 = vunpack.c.l.b16 %v527
        %v1211 = vunpack.c.l.b16 %v528
        %v1212 = vunpack.c.h.b16 %v528
        %v1213 = vunpack.c.l.b16 %v529
        %v1214 = vunpack.c.l.b16 %v530
        %v1215 = vunpack.c.h.b16 %v530
        %v1216 = vunpack.c.l.b16 %v531
        %v1217 = vunpack.c.l.b16 %v532
        %v1218 = vunpack.c.h.b16 %v532
        %v1219 = vunpack.c.l.b16 %v533
        %v1220 = vunpack.c.l.b16 %v534
        %v1221 = vunpack.c.h.b16 %v534
        %v1222 = vunpack.c.l.b16 %v535
        %v1223 = vunpack.c.l.b16 %v536
        %v1224 = vunpack.c.h.b16 %v536
        %v1225 = vunpack.c.l.b16 %v537
        %v1226 = vunpack.c.l.b16 %v538
        %v1227 = vunpack.c.h.b16 %v538
        %v1228 = vunpack.c.l.b16 %v539
        %v1229 = vunpack.c.l.b16 %v540
        %v1230 = vunpack.c.h.b16 %v540
        %v1231 = vunpack.c.l.b16 %v541
        %v1232 = vunpack.c.l.b16 %v542
        %v1233 = vunpack.c.h.b16 %v542
        %v1234 = vunpack.c.l.b16 %v543
        %v1235 = vunpack.c.l.b16 %v544
        %v1236 = vunpack.c.h.b16 %v544
        %v1237 = vunpack.c.l.b16 %v545
        %v1238 = vunpack.c.l.b16 %v546
        %v1239 = vunpack.c.h.b16 %v546
        %v1240 = vunpack.c.l.b16 %v547
        %v1241 = vunpack.c.l.b16 %v548
        %v1242 = vunpack.c.h.b16 %v548
        %v1243 = vunpack.c.l.b16 %v549
        %v1244 = vunpack.c.l.b16 %v550
        %v1245 = vunpack.c.h.b16 %v550
        %v1246 = vunpack.c.l.b16 %v551
        %v1247 = vunpack.c.l.b16 %v552
        %v1248 = vunpack.c.h.b16 %v552
        %v1249 = vunpack.c.l.b16 %v553
        %v1250 = vunpack.c.l.b16 %v554
        %v1251 = vunpack.c.h.b16 %v554
        %v1252 = vunpack.c.l.b16 %v555
        %v1253 = vunpack.c.l.b16 %v556
        %v1254 = vunpack.c.h.b16 %v556
        %v1255 = vunpack.c.l.b16 %v557
        %v1256 = vunpack.c.l.b16 %v558
        %v1257 = vunpack.c.h.b16 %v558
        %v1258 = vunpack.c.l.b16 %v559
        %v1259 = vunpack.c.l.b16 %v560
        %v1260 = vunpack.c.h.b16 %v560
        %v1261 = vunpack.c.l.b16 %v561
        %v1262 = vunpack.c.l.b16 %v562
        %v1263 = vunpack.c.h.b16 %v562
        %v1264 = vunpack.c.l.b16 %v563
        %v1265 = vunpack.c.l.b16 %v564
        %v1266 = vunpack.c.h.b16 %v564
        %v1267 = vunpack.c.l.b16 %v565
        %v1268 = vunpack.c.l.b16 %v566
        %v1269 = vunpack.c.h.b16 %v566
        %v1270 = vunpack.c.l.b16 %v567
        %v1271 = vunpack.c.l.b16 %v568
        %v1272 = vunpack.c.h.b16 %v568
        %v1273 = vunpack.c.l.b16 %v569
        %v1274 = vunpack.c.l.b16 %v570
        %v1275 = vunpack.c.h.b16 %v570
        %v1276 = vunpack.c.l.b16 %v571
        %v1277 = vunpack.c.l.b16 %v572
        %v1278 = vunpack.c.h.b16 %v572
        %v1279 = vunpack.c.l.b16 %v573
        %v1280 = vunpack.c.l.b16 %v574
        %v1281 = vunpack.c.h.b16 %v574
        %v1282 = vunpack.c.l.b16 %v575
        %v1283 = vunpack.c.l.b16 %v576
        %v1284 = vunpack.c.h.b16 %v576
        %v1285 = vunpack.c.l.b16 %v577
        %v1286 = vunpack.c.l.b16 %v578
        %v1287 = vunpack.c.h.b16 %v578
        %v1288 = vunpack.c.l.b16 %v579
        %v1289 = vunpack.c.l.b16 %v580
        %v1290 = vunpack.c.h.b16 %v580
        %v1291 = vunpack.c.l.b16 %v581
        %v1292 = vunpack.c.l.b16 %v582
        %v1293 = vunpack.c.h.b16 %v582
        %v1294 = vunpack.c.l.b16 %v583
        %v1295 = vunpack.c.l.b16 %v584
        %v1296 = vunpack.c.h.b16 %v584
        %v1297 = vunpack.c.l.b16 %v585
        %v1298 = vunpack.c.l.b16 %v586
        %v1299 = vunpack.c.h.b16 %v586
        %v1300 = vunpack.c.l.b16 %v587
        %v1301 = vunpack.c.l.b16 %v588
        %v1302 = vunpack.c.h.b16 %v588
        %v1303 = vunpack.c.l.b16 %v589
        %v1304 = vunpack.c.l.b16 %v590
        %v1305 = vunpack.c.h.b16 %v590
        %v1306 = vunpack.c.l.b16 %v591
        %v1307 = vunpack.c.l.b16 %v592
        %v1308 = vunpack.c.h.b16 %v592
        %v1309 = vunpack.c.l.b16 %v593
        %v1310 = vunpack.c.l.b16 %v594
        %v1311 = vunpack.c.h.b16 %v594
        %v1312 = vunpack.c.l.b16 %v595
        %v1313 = vunpack.c.l.b16 %v596
        %v1314 = vunpack.c.h.b16 %v596
        %v1315 = vunpack.c.l.b16 %v597
        %v1316 = vunpack.c.l.b16 %v598
        %v1317 = vunpack.c.h.b16 %v598
        %v1318 = vunpack.c.l.b16 %v599
        %v1319 = vunpack.c.l.b16 %v600
        %v1320 = vunpack.c.h.b16 %v600
        %v1321 = vunpack.c.l.b16 %v601
        %v1322 = vpack.c.b16 %v893, %v890
        %v1323 = vpack.c.b16 %v894, %v891
        %v1324 = vpack.c.b16 %v895, %v892
        %v1325 = vpack.c.b16 %v899, %v896
        %v1326 = vpack.c.b16 %v900, %v897
        %v1327 = vpack.c.b16 %v901, %v898
        %v1328 = vpack.c.b16 %v905, %v902
        %v1329 = vpack.c.b16 %v906, %v903
        %v1330 = vpack.c.b16 %v907, %v904
        %v1331 = vpack.c.b16 %v911, %v908
        %v1332 = vpack.c.b16 %v912, %v909
        %v1333 = vpack.c.b16 %v913, %v910
        %v1334 = vpack.c.b16 %v917, %v914
        %v1335 = vpack.c.b16 %v918, %v915
        %v1336 = vpack.c.b16 %v919, %v916
        %v1337 = vpack.c.b16 %v923, %v920
        %v1338 = vpack.c.b16 %v924, %v921
        %v1339 = vpack.c.b16 %v925, %v922
        %v1340 = vpack.c.b16 %v929, %v926
        %v1341 = vpack.c.b16 %v930, %v927
        %v1342 = vpack.c.b16 %v931, %v928
        %v1343 = vpack.c.b16 %v935, %v932
        %v1344 = vpack.c.b16 %v936, %v933
        %v1345 = vpack.c.b16 %v937, %v934
        %v1346 = vpack.c.b16 %v941, %v938
        %v1347 = vpack.c.b16 %v942, %v939
        %v1348 = vpack.c.b16 %v943, %v940
        %v1349 = vpack.c.b16 %v947, %v944
        %v1350 = vpack.c.b16 %v948, %v945
        %v1351 = vpack.c.b16 %v949, %v946
        %v1352 = vpack.c.b16 %v953, %v950
        %v1353 = vpack.c.b16 %v954, %v951
        %v1354 = vpack.c.b16 %v955, %v952
        %v1355 = vpack.c.b16 %v959, %v956
        %v1356 = vpack.c.b16 %v960, %v957
        %v1357 = vpack.c.b16 %v961, %v958
        %v1358 = vpack.c.b16 %v965, %v962
        %v1359 = vpack.c.b16 %v966, %v963
        %v1360 = vpack.c.b16 %v967, %v964
        %v1361 = vpack.c.b16 %v971, %v968
        %v1362 = vpack.c.b16 %v972, %v969
        %v1363 = vpack.c.b16 %v973, %v970
        %v1364 = vpack.c.b16 %v977, %v974
        %v1365 = vpack.c.b16 %v978, %v975
        %v1366 = vpack.c.b16 %v979, %v976
        %v1367 = vpack.c.b16 %v983, %v980
        %v1368 = vpack.c.b16 %v984, %v981
        %v1369 = vpack.c.b16 %v985, %v982
        %v1370 = vpack.c.b16 %v989, %v986
        %v1371 = vpack.c.b16 %v990, %v987
        %v1372 = vpack.c.b16 %v991, %v988
        %v1373 = vpack.c.b16 %v995, %v992
        %v1374 = vpack.c.b16 %v996, %v993
        %v1375 = vpack.c.b16 %v997, %v994
        %v1376 = vpack.c.b16 %v1001, %v998
        %v1377 = vpack.c.b16 %v1002, %v999
        %v1378 = vpack.c.b16 %v1003, %v1000
        %v1379 = vpack.c.b16 %v1007, %v1004
        %v1380 = vpack.c.b16 %v1008, %v1005
        %v1381 = vpack.c.b16 %v1009, %v1006
        %v1382 = vpack.c.b16 %v1013, %v1010
        %v1383 = vpack.c.b16 %v1014, %v1011
        %v1384 = vpack.c.b16 %v1015, %v1012
        %v1385 = vpack.c.b16 %v1019, %v1016
        %v1386 = vpack.c.b16 %v1020, %v1017
        %v1387 = vpack.c.b16 %v1021, %v1018
        %v1388 = vpack.c.b16 %v1025, %v1022
        %v1389 = vpack.c.b16 %v1026, %v1023
        %v1390 = vpack.c.b16 %v1027, %v1024
        %v1391 = vpack.c.b16 %v1031, %v1028
        %v1392 = vpack.c.b16 %v1032, %v1029
        %v1393 = vpack.c.b16 %v1033, %v1030
        %v1394 = vpack.c.b16 %v1037, %v1034
        %v1395 = vpack.c.b16 %v1038, %v1035
        %v1396 = vpack.c.b16 %v1039, %v1036
        %v1397 = vpack.c.b16 %v1043, %v1040
        %v1398 = vpack.c.b16 %v1044, %v1041
        %v1399 = vpack.c.b16 %v1045, %v1042
        %v1400 = vpack.c.b16 %v1049, %v1046
        %v1401 = vpack.c.b16 %v1050, %v1047
        %v1402 = vpack.c.b16 %v1051, %v1048
        %v1403 = vpack.c.b16 %v1055, %v1052
        %v1404 = vpack.c.b16 %v1056, %v1053
        %v1405 = vpack.c.b16 %v1057, %v1054
        %v1406 = vpack.c.b16 %v1061, %v1058
        %v1407 = vpack.c.b16 %v1062, %v1059
        %v1408 = vpack.c.b16 %v1063, %v1060
        %v1409 = vpack.c.b16 %v1067, %v1064
        %v1410 = vpack.c.b16 %v1068, %v1065
        %v1411 = vpack.c.b16 %v1069, %v1066
        %v1412 = vpack.c.b16 %v1073, %v1070
        %v1413 = vpack.c.b16 %v1074, %v1071
        %v1414 = vpack.c.b16 %v1075, %v1072
        %v1415 = vpack.c.b16 %v1079, %v1076
        %v1416 = vpack.c.b16 %v1080, %v1077
        %v1417 = vpack.c.b16 %v1081, %v1078
        %v1418 = vpack.c.b16 %v1085, %v1082
        %v1419 = vpack.c.b16 %v1086, %v1083
        %v1420 = vpack.c.b16 %v1087, %v1084
        %v1421 = vpack.c.b16 %v1091, %v1088
        %v1422 = vpack.c.b16 %v1092, %v1089
        %v1423 = vpack.c.b16 %v1093, %v1090
        %v1424 = vpack.c.b16 %v1097, %v1094
        %v1425 = vpack.c.b16 %v1098, %v1095
        %v1426 = vpack.c.b16 %v1099, %v1096
        %v1427 = vpack.c.b16 %v1103, %v1100
        %v1428 = vpack.c.b16 %v1104, %v1101
        %v1429 = vpack.c.b16 %v1105, %v1102
        %v1430 = vpack.c.b16 %v1109, %v1106
        %v1431 = vpack.c.b16 %v1110, %v1107
        %v1432 = vpack.c.b16 %v1111, %v1108
        %v1433 = vpack.c.b16 %v1115, %v1112
        %v1434 = vpack.c.b16 %v1116, %v1113
        %v1435 = vpack.c.b16 %v1117, %v1114
        %v1436 = vpack.c.b16 %v1121, %v1118
        %v1437 = vpack.c.b16 %v1122, %v1119
        %v1438 = vpack.c.b16 %v1123, %v1120
        %v1439 = vpack.c.b16 %v1127, %v1124
        %v1440 = vpack.c.b16 %v1128, %v1125
        %v1441 = vpack.c.b16 %v1129, %v1126
        %v1442 = vpack.c.b16 %v1133, %v1130
        %v1443 = vpack.c.b16 %v1134, %v1131
        %v1444 = vpack.c.b16 %v1135, %v1132
        %v1445 = vpack.c.b16 %v1139, %v1136
        %v1446 = vpack.c.b16 %v1140, %v1137
        %v1447 = vpack.c.b16 %v1141, %v1138
        %v1448 = vpack.c.b16 %v1145, %v1142
        %v1449 = vpack.c.b16 %v1146, %v1143
        %v1450 = vpack.c.b16 %v1147, %v1144
        %v1451 = vpack.c.b16 %v1151, %v1148
        %v1452 = vpack.c.b16 %v1152, %v1149
        %v1453 = vpack.c.b16 %v1153, %v1150
        %v1454 = vpack.c.b16 %v1157, %v1154
        %v1455 = vpack.c.b16 %v1158, %v1155
        %v1456 = vpack.c.b16 %v1159, %v1156
        %v1457 = vpack.c.b16 %v1163, %v1160
        %v1458 = vpack.c.b16 %v1164, %v1161
        %v1459 = vpack.c.b16 %v1165, %v1162
        %v1460 = vpack.c.b16 %v1169, %v1166
        %v1461 = vpack.c.b16 %v1170, %v1167
        %v1462 = vpack.c.b16 %v1171, %v1168
        %v1463 = vpack.c.b16 %v1175, %v1172
        %v1464 = vpack.c.b16 %v1176, %v1173
        %v1465 = vpack.c.b16 %v1177, %v1174
        %v1466 = vpack.c.b16 %v1181, %v1178
        %v1467 = vpack.c.b16 %v1182, %v1179
        %v1468 = vpack.c.b16 %v1183, %v1180
        %v1469 = vpack.c.b16 %v1187, %v1184
        %v1470 = vpack.c.b16 %v1188, %v1185
        %v1471 = vpack.c.b16 %v1189, %v1186
        %v1472 = vpack.c.b16 %v1193, %v1190
        %v1473 = vpack.c.b16 %v1194, %v1191
        %v1474 = vpack.c.b16 %v1195, %v1192
        %v1475 = vpack.c.b16 %v1199, %v1196
        %v1476 = vpack.c.b16 %v1200, %v1197
        %v1477 = vpack.c.b16 %v1201, %v1198
        %v1478 = vpack.c.b16 %v1205, %v1202
        %v1479 = vpack.c.b16 %v1206, %v1203
        %v1480 = vpack.c.b16 %v1207, %v1204
        %v1481 = vpack.c.b16 %v1211, %v1208
        %v1482 = vpack.c.b16 %v1212, %v1209
        %v1483 = vpack.c.b16 %v1213, %v1210
        %v1484 = vpack.c.b16 %v1217, %v1214
        %v1485 = vpack.c.b16 %v1218, %v1215
        %v1486 = vpack.c.b16 %v1219, %v1216
        %v1487 = vpack.c.b16 %v1223, %v1220
        %v1488 = vpack.c.b16 %v1224, %v1221
        %v1489 = vpack.c.b16 %v1225, %v1222
        %v1490 = vpack.c.b16 %v1229, %v1226
        %v1491 = vpack.c.b16 %v1230, %v1227
        %v1492 = vpack.c.b16 %v1231, %v1228
        %v1493 = vpack.c.b16 %v1235, %v1232
        %v1494 = vpack.c.b16 %v1236, %v1233
        %v1495 = vpack.c.b16 %v1237, %v1234
        %v1496 = vpack.c.b16 %v1241, %v1238
        %v1497 = vpack.c.b16 %v1242, %v1239
        %v1498 = vpack.c.b16 %v1243, %v1240
        %v1499 = vpack.c.b16 %v1247, %v1244
        %v1500 = vpack.c.b16 %v1248, %v1245
        %v1501 = vpack.c.b16 %v1249, %v1246
        %v1502 = vpack.c.b16 %v1253, %v1250
        %v1503 = vpack.c.b16 %v1254, %v1251
        %v1504 = vpack.c.b16 %v1255, %v1252
        %v1505 = vpack.c.b16 %v1259, %v1256
        %v1506 = vpack.c.b16 %v1260, %v1257
        %v1507 = vpack.c.b16 %v1261, %v1258
        %v1508 = vpack.c.b16 %v1265, %v1262
        %v1509 = vpack.c.b16 %v1266, %v1263
        %v1510 = vpack.c.b16 %v1267, %v1264
        %v1511 = vpack.c.b16 %v1271, %v1268
        %v1512 = vpack.c.b16 %v1272, %v1269
        %v1513 = vpack.c.b16 %v1273, %v1270
        %v1514 = vpack.c.b16 %v1277, %v1274
        %v1515 = vpack.c.b16 %v1278, %v1275
        %v1516 = vpack.c.b16 %v1279, %v1276
        %v1517 = vpack.c.b16 %v1283, %v1280
        %v1518 = vpack.c.b16 %v1284, %v1281
        %v1519 = vpack.c.b16 %v1285, %v1282
        %v1520 = vpack.c.b16 %v1289, %v1286
        %v1521 = vpack.c.b16 %v1290, %v1287
        %v1522 = vpack.c.b16 %v1291, %v1288
        %v1523 = vpack.c.b16 %v1295, %v1292
        %v1524 = vpack.c.b16 %v1296, %v1293
        %v1525 = vpack.c.b16 %v1297, %v1294
        %v1526 = vpack.c.b16 %v1301, %v1298
        %v1527 = vpack.c.b16 %v1302, %v1299
        %v1528 = vpack.c.b16 %v1303, %v1300
        %v1529 = vpack.c.b16 %v1307, %v1304
        %v1530 = vpack.c.b16 %v1308, %v1305
        %v1531 = vpack.c.b16 %v1309, %v1306
        %v1532 = vpack.c.b16 %v1313, %v1310
        %v1533 = vpack.c.b16 %v1314, %v1311
        %v1534 = vpack.c.b16 %v1315, %v1312
        %v1535 = vpack.c.b16 %v1319, %v1316
        %v1536 = vpack.c.b16 %v1320, %v1317
        %v1537 = vpack.c.b16 %v1321, %v1318
        %1754 = vmatprep.subr.bf16.mxu0 %v1344
        %1755 = vmatpush1.bf16.msra.mxu0 %v1343
        %1756 = vmatprep.subr.bf16.mxu0 %v1341
        %1757 = vmatpush1.bf16.msra.mxu0 %v1340
        %1758 = vmatprep.subr.bf16.mxu0 %v1338
        %1759 = vmatpush1.bf16.msra.mxu0 %v1337
        %1760 = vmatprep.subr.bf16.mxu0 %v1335
        %1761 = vmatpush1.bf16.msra.mxu0 %v1334
        %1762 = vmatprep.subr.bf16.mxu0 %v1332
        %1763 = vmatpush1.bf16.msra.mxu0 %v1331
        %1764 = vmatprep.subr.bf16.mxu0 %v1329
        %1765 = vmatpush1.bf16.msra.mxu0 %v1328
        %1766 = vmatprep.subr.bf16.mxu0 %v1326
        %1767 = vmatpush1.bf16.msra.mxu0 %v1325
        %1768 = vmatprep.subr.bf16.mxu0 %v1323
        %1769 = vmatpush1.bf16.msra.mxu0 %v1322
        %1770 = vmatprep.subr.bf16.mxu0 %v1368
        %1771 = vmatpush2.bf16.msra.mxu0 %v1367
        %1772 = vmatprep.subr.bf16.mxu0 %v1365
        %1773 = vmatpush2.bf16.msra.mxu0 %v1364
        %1774 = vmatprep.subr.bf16.mxu0 %v1362
        %1775 = vmatpush2.bf16.msra.mxu0 %v1361
        %1776 = vmatprep.subr.bf16.mxu0 %v1359
        %1777 = vmatpush2.bf16.msra.mxu0 %v1358
        %1778 = vmatprep.subr.bf16.mxu0 %v1356
        %1779 = vmatpush2.bf16.msra.mxu0 %v1355
        %1780 = vmatprep.subr.bf16.mxu0 %v1353
        %1781 = vmatpush2.bf16.msra.mxu0 %v1352
        %1782 = vmatprep.subr.bf16.mxu0 %v1350
        %1783 = vmatpush2.bf16.msra.mxu0 %v1349
        %1784 = vmatprep.subr.bf16.mxu0 %v1347
        %1785 = vmatpush2.bf16.msra.mxu0 %v1346
        %1786 = vmatprep.mubr.bf16.mxu0 %v306
        %1787 = vmatmul.mubr.bf16.gmra.mxu0 %v305
        %v1788 = vpop.f32.mrf.mxu0
        %v1789 = vadd.f32 0.0, %v1788
        %v1790 = vpop.f32.mrf.mxu0
        %v1791 = vadd.f32 0.0, %v1790
        %v1792 = vpop.f32.mrf.mxu0
        %v1793 = vpop.f32.mrf.mxu0
        %1794 = vdwg.mxu0
        %1795 = vmatprep.subr.bf16.mxu0 %v1392
        %1796 = vmatpush1.bf16.msra.mxu0 %v1391
        %1797 = vmatprep.subr.bf16.mxu0 %v1389
        %1798 = vmatpush1.bf16.msra.mxu0 %v1388
        %1799 = vmatprep.subr.bf16.mxu0 %v1386
        %1800 = vmatpush1.bf16.msra.mxu0 %v1385
        %1801 = vmatprep.subr.bf16.mxu0 %v1383
        %1802 = vmatpush1.bf16.msra.mxu0 %v1382
        %1803 = vmatprep.subr.bf16.mxu0 %v1380
        %1804 = vmatpush1.bf16.msra.mxu0 %v1379
        %1805 = vmatprep.subr.bf16.mxu0 %v1377
        %1806 = vmatpush1.bf16.msra.mxu0 %v1376
        %1807 = vmatprep.subr.bf16.mxu0 %v1374
        %1808 = vmatpush1.bf16.msra.mxu0 %v1373
        %1809 = vmatprep.subr.bf16.mxu0 %v1371
        %1810 = vmatpush1.bf16.msra.mxu0 %v1370
        %1811 = vmatprep.subr.bf16.mxu0 %v1416
        %1812 = vmatpush2.bf16.msra.mxu0 %v1415
        %1813 = vmatprep.subr.bf16.mxu0 %v1413
        %1814 = vmatpush2.bf16.msra.mxu0 %v1412
        %1815 = vmatprep.subr.bf16.mxu0 %v1410
        %1816 = vmatpush2.bf16.msra.mxu0 %v1409
        %1817 = vmatprep.subr.bf16.mxu0 %v1407
        %1818 = vmatpush2.bf16.msra.mxu0 %v1406
        %1819 = vmatprep.subr.bf16.mxu0 %v1404
        %1820 = vmatpush2.bf16.msra.mxu0 %v1403
        %1821 = vmatprep.subr.bf16.mxu0 %v1401
        %1822 = vmatpush2.bf16.msra.mxu0 %v1400
        %1823 = vmatprep.subr.bf16.mxu0 %v1398
        %1824 = vmatpush2.bf16.msra.mxu0 %v1397
        %1825 = vmatprep.subr.bf16.mxu0 %v1395
        %1826 = vmatpush2.bf16.msra.mxu0 %v1394
        %1827 = vmatprep.mubr.bf16.mxu0 %v308
        %1828 = vmatmul.mubr.bf16.gmra.mxu0 %v307
        %v1829 = vpop.f32.mrf.mxu0
        %v1830 = vadd.f32 %v1789, %v1829
        %v1831 = vpop.f32.mrf.mxu0
        %v1832 = vadd.f32 %v1791, %v1831
        %v1833 = vpop.f32.mrf.mxu0
        %v1834 = vpop.f32.mrf.mxu0
        %1835 = vdwg.mxu0
        %1836 = vmatprep.subr.bf16.mxu0 %v1440
        %1837 = vmatpush1.bf16.msra.mxu0 %v1439
        %1838 = vmatprep.subr.bf16.mxu0 %v1437
        %1839 = vmatpush1.bf16.msra.mxu0 %v1436
        %1840 = vmatprep.subr.bf16.mxu0 %v1434
        %1841 = vmatpush1.bf16.msra.mxu0 %v1433
        %1842 = vmatprep.subr.bf16.mxu0 %v1431
        %1843 = vmatpush1.bf16.msra.mxu0 %v1430
        %1844 = vmatprep.subr.bf16.mxu0 %v1428
        %1845 = vmatpush1.bf16.msra.mxu0 %v1427
        %1846 = vmatprep.subr.bf16.mxu0 %v1425
        %1847 = vmatpush1.bf16.msra.mxu0 %v1424
        %1848 = vmatprep.subr.bf16.mxu0 %v1422
        %1849 = vmatpush1.bf16.msra.mxu0 %v1421
        %1850 = vmatprep.subr.bf16.mxu0 %v1419
        %1851 = vmatpush1.bf16.msra.mxu0 %v1418
        %1852 = vmatprep.subr.bf16.mxu0 %v1464
        %1853 = vmatpush2.bf16.msra.mxu0 %v1463
        %1854 = vmatprep.subr.bf16.mxu0 %v1461
        %1855 = vmatpush2.bf16.msra.mxu0 %v1460
        %1856 = vmatprep.subr.bf16.mxu0 %v1458
        %1857 = vmatpush2.bf16.msra.mxu0 %v1457
        %1858 = vmatprep.subr.bf16.mxu0 %v1455
        %1859 = vmatpush2.bf16.msra.mxu0 %v1454
        %1860 = vmatprep.subr.bf16.mxu0 %v1452
        %1861 = vmatpush2.bf16.msra.mxu0 %v1451
        %1862 = vmatprep.subr.bf16.mxu0 %v1449
        %1863 = vmatpush2.bf16.msra.mxu0 %v1448
        %1864 = vmatprep.subr.bf16.mxu0 %v1446
        %1865 = vmatpush2.bf16.msra.mxu0 %v1445
        %1866 = vmatprep.subr.bf16.mxu0 %v1443
        %1867 = vmatpush2.bf16.msra.mxu0 %v1442
        %1868 = vmatprep.mubr.bf16.mxu0 %v310
        %1869 = vmatmul.mubr.bf16.gmra.mxu0 %v309
        %v1870 = vpop.f32.mrf.mxu0
        %v1871 = vadd.f32 %v1830, %v1870
        %v1872 = vpop.f32.mrf.mxu0
        %v1873 = vadd.f32 %v1832, %v1872
        %v1874 = vpop.f32.mrf.mxu0
        %v1875 = vpop.f32.mrf.mxu0
        %1876 = vdwg.mxu0
        %1877 = vmatprep.subr.bf16.mxu0 %v1488
        %1878 = vmatpush1.bf16.msra.mxu0 %v1487
        %1879 = vmatprep.subr.bf16.mxu0 %v1485
        %1880 = vmatpush1.bf16.msra.mxu0 %v1484
        %1881 = vmatprep.subr.bf16.mxu0 %v1482
        %1882 = vmatpush1.bf16.msra.mxu0 %v1481
        %1883 = vmatprep.subr.bf16.mxu0 %v1479
        %1884 = vmatpush1.bf16.msra.mxu0 %v1478
        %1885 = vmatprep.subr.bf16.mxu0 %v1476
        %1886 = vmatpush1.bf16.msra.mxu0 %v1475
        %1887 = vmatprep.subr.bf16.mxu0 %v1473
        %1888 = vmatpush1.bf16.msra.mxu0 %v1472
        %1889 = vmatprep.subr.bf16.mxu0 %v1470
        %1890 = vmatpush1.bf16.msra.mxu0 %v1469
        %1891 = vmatprep.subr.bf16.mxu0 %v1467
        %1892 = vmatpush1.bf16.msra.mxu0 %v1466
        %1893 = vmatprep.subr.bf16.mxu0 %v1512
        %1894 = vmatpush2.bf16.msra.mxu0 %v1511
        %1895 = vmatprep.subr.bf16.mxu0 %v1509
        %1896 = vmatpush2.bf16.msra.mxu0 %v1508
        %1897 = vmatprep.subr.bf16.mxu0 %v1506
        %1898 = vmatpush2.bf16.msra.mxu0 %v1505
        %1899 = vmatprep.subr.bf16.mxu0 %v1503
        %1900 = vmatpush2.bf16.msra.mxu0 %v1502
        %1901 = vmatprep.subr.bf16.mxu0 %v1500
        %1902 = vmatpush2.bf16.msra.mxu0 %v1499
        %1903 = vmatprep.subr.bf16.mxu0 %v1497
        %1904 = vmatpush2.bf16.msra.mxu0 %v1496
        %1905 = vmatprep.subr.bf16.mxu0 %v1494
        %1906 = vmatpush2.bf16.msra.mxu0 %v1493
        %1907 = vmatprep.subr.bf16.mxu0 %v1491
        %1908 = vmatpush2.bf16.msra.mxu0 %v1490
        %1909 = vmatprep.mubr.bf16.mxu0 %v312
        %1910 = vmatmul.mubr.bf16.gmra.mxu0 %v311
        %v1911 = vpop.f32.mrf.mxu0
        %v1912 = vadd.f32 %v1871, %v1911
        %v1913 = vpop.f32.mrf.mxu0
        %v1914 = vadd.f32 %v1873, %v1913
        %v1915 = vpop.f32.mrf.mxu0
        %v1916 = vpop.f32.mrf.mxu0
        %1917 = vdwg.mxu0
        %1918 = vmatprep.subr.bf16.mxu0 %v1536
        %1919 = vmatpush1.bf16.msra.mxu0 %v1535
        %1920 = vmatprep.subr.bf16.mxu0 %v1533
        %1921 = vmatpush1.bf16.msra.mxu0 %v1532
        %1922 = vmatprep.subr.bf16.mxu0 %v1530
        %1923 = vmatpush1.bf16.msra.mxu0 %v1529
        %1924 = vmatprep.subr.bf16.mxu0 %v1527
        %1925 = vmatpush1.bf16.msra.mxu0 %v1526
        %1926 = vmatprep.subr.bf16.mxu0 %v1524
        %1927 = vmatpush1.bf16.msra.mxu0 %v1523
        %1928 = vmatprep.subr.bf16.mxu0 %v1521
        %1929 = vmatpush1.bf16.msra.mxu0 %v1520
        %1930 = vmatprep.subr.bf16.mxu0 %v1518
        %1931 = vmatpush1.bf16.msra.mxu0 %v1517
        %1932 = vmatprep.subr.bf16.mxu0 %v1515
        %1933 = vmatpush1.bf16.msra.mxu0 %v1514
        %1934 = vmatprep.subr.bf16.mxu0 0
        %1935 = vmatpush2.bf16.msra.mxu0 0
        %1936 = vmatprep.subr.bf16.mxu0 0
        %1937 = vmatpush2.bf16.msra.mxu0 0
        %1938 = vmatprep.subr.bf16.mxu0 0
        %1939 = vmatpush2.bf16.msra.mxu0 0
        %1940 = vmatprep.subr.bf16.mxu0 0
        %1941 = vmatpush2.bf16.msra.mxu0 0
        %1942 = vmatprep.subr.bf16.mxu0 0
        %1943 = vmatpush2.bf16.msra.mxu0 0
        %1944 = vmatprep.subr.bf16.mxu0 0
        %1945 = vmatpush2.bf16.msra.mxu0 0
        %1946 = vmatprep.subr.bf16.mxu0 0
        %1947 = vmatpush2.bf16.msra.mxu0 0
        %1948 = vmatprep.subr.bf16.mxu0 0
        %1949 = vmatpush2.bf16.msra.mxu0 0
        %1950 = vmatprep.mubr.bf16.mxu0 0
        %1951 = vmatmul.mubr.bf16.gmra.mxu0 %v313
        %v1952 = vpop.f32.mrf.mxu0
        %v1953 = vadd.f32 %v1912, %v1952
        %v1954 = vpop.f32.mrf.mxu0
        %v1955 = vadd.f32 %v1914, %v1954
        %v1956 = vpop.f32.mrf.mxu0
        %v1957 = vpop.f32.mrf.mxu0
        %1958 = vdwg.mxu0
        %1959 = vmatprep.subr.bf16.mxu0 0
        %1960 = vmatpush1.bf16.msra.mxu0 %v1345
        %1961 = vmatprep.subr.bf16.mxu0 0
        %1962 = vmatpush1.bf16.msra.mxu0 %v1342
        %1963 = vmatprep.subr.bf16.mxu0 0
        %1964 = vmatpush1.bf16.msra.mxu0 %v1339
        %1965 = vmatprep.subr.bf16.mxu0 0
        %1966 = vmatpush1.bf16.msra.mxu0 %v1336
        %1967 = vmatprep.subr.bf16.mxu0 0
        %1968 = vmatpush1.bf16.msra.mxu0 %v1333
        %1969 = vmatprep.subr.bf16.mxu0 0
        %1970 = vmatpush1.bf16.msra.mxu0 %v1330
        %1971 = vmatprep.subr.bf16.mxu0 0
        %1972 = vmatpush1.bf16.msra.mxu0 %v1327
        %1973 = vmatprep.subr.bf16.mxu0 0
        %1974 = vmatpush1.bf16.msra.mxu0 %v1324
        %1975 = vmatprep.subr.bf16.mxu0 0
        %1976 = vmatpush2.bf16.msra.mxu0 %v1369
        %1977 = vmatprep.subr.bf16.mxu0 0
        %1978 = vmatpush2.bf16.msra.mxu0 %v1366
        %1979 = vmatprep.subr.bf16.mxu0 0
        %1980 = vmatpush2.bf16.msra.mxu0 %v1363
        %1981 = vmatprep.subr.bf16.mxu0 0
        %1982 = vmatpush2.bf16.msra.mxu0 %v1360
        %1983 = vmatprep.subr.bf16.mxu0 0
        %1984 = vmatpush2.bf16.msra.mxu0 %v1357
        %1985 = vmatprep.subr.bf16.mxu0 0
        %1986 = vmatpush2.bf16.msra.mxu0 %v1354
        %1987 = vmatprep.subr.bf16.mxu0 0
        %1988 = vmatpush2.bf16.msra.mxu0 %v1351
        %1989 = vmatprep.subr.bf16.mxu0 0
        %1990 = vmatpush2.bf16.msra.mxu0 %v1348
        %1991 = vmatprep.mubr.bf16.mxu0 %v306
        %1992 = vmatmul.mubr.bf16.gmra.mxu0 %v305
        %v1993 = vpop.f32.mrf.mxu0
        %v1994 = vadd.f32 0.0, %v1993
        %v1995 = vpop.f32.mrf.mxu0
        %v1996 = vpop.f32.mrf.mxu0
        %v1997 = vpop.f32.mrf.mxu0
        %1998 = vdwg.mxu0
        %1999 = vmatprep.subr.bf16.mxu0 0
        %2000 = vmatpush1.bf16.msra.mxu0 %v1393
        %2001 = vmatprep.subr.bf16.mxu0 0
        %2002 = vmatpush1.bf16.msra.mxu0 %v1390
        %2003 = vmatprep.subr.bf16.mxu0 0
        %2004 = vmatpush1.bf16.msra.mxu0 %v1387
        %2005 = vmatprep.subr.bf16.mxu0 0
        %2006 = vmatpush1.bf16.msra.mxu0 %v1384
        %2007 = vmatprep.subr.bf16.mxu0 0
        %2008 = vmatpush1.bf16.msra.mxu0 %v1381
        %2009 = vmatprep.subr.bf16.mxu0 0
        %2010 = vmatpush1.bf16.msra.mxu0 %v1378
        %2011 = vmatprep.subr.bf16.mxu0 0
        %2012 = vmatpush1.bf16.msra.mxu0 %v1375
        %2013 = vmatprep.subr.bf16.mxu0 0
        %2014 = vmatpush1.bf16.msra.mxu0 %v1372
        %2015 = vmatprep.subr.bf16.mxu0 0
        %2016 = vmatpush2.bf16.msra.mxu0 %v1417
        %2017 = vmatprep.subr.bf16.mxu0 0
        %2018 = vmatpush2.bf16.msra.mxu0 %v1414
        %2019 = vmatprep.subr.bf16.mxu0 0
        %2020 = vmatpush2.bf16.msra.mxu0 %v1411
        %2021 = vmatprep.subr.bf16.mxu0 0
        %2022 = vmatpush2.bf16.msra.mxu0 %v1408
        %2023 = vmatprep.subr.bf16.mxu0 0
        %2024 = vmatpush2.bf16.msra.mxu0 %v1405
        %2025 = vmatprep.subr.bf16.mxu0 0
        %2026 = vmatpush2.bf16.msra.mxu0 %v1402
        %2027 = vmatprep.subr.bf16.mxu0 0
        %2028 = vmatpush2.bf16.msra.mxu0 %v1399
        %2029 = vmatprep.subr.bf16.mxu0 0
        %2030 = vmatpush2.bf16.msra.mxu0 %v1396
        %2031 = vmatprep.mubr.bf16.mxu0 %v308
        %2032 = vmatmul.mubr.bf16.gmra.mxu0 %v307
        %v2033 = vpop.f32.mrf.mxu0
        %v2034 = vadd.f32 %v1994, %v2033
        %v2035 = vpop.f32.mrf.mxu0
        %v2036 = vpop.f32.mrf.mxu0
        %v2037 = vpop.f32.mrf.mxu0
        %2038 = vdwg.mxu0
        %2039 = vmatprep.subr.bf16.mxu0 0
        %2040 = vmatpush1.bf16.msra.mxu0 %v1441
        %2041 = vmatprep.subr.bf16.mxu0 0
        %2042 = vmatpush1.bf16.msra.mxu0 %v1438
        %2043 = vmatprep.subr.bf16.mxu0 0
        %2044 = vmatpush1.bf16.msra.mxu0 %v1435
        %2045 = vmatprep.subr.bf16.mxu0 0
        %2046 = vmatpush1.bf16.msra.mxu0 %v1432
        %2047 = vmatprep.subr.bf16.mxu0 0
        %2048 = vmatpush1.bf16.msra.mxu0 %v1429
        %2049 = vmatprep.subr.bf16.mxu0 0
        %2050 = vmatpush1.bf16.msra.mxu0 %v1426
        %2051 = vmatprep.subr.bf16.mxu0 0
        %2052 = vmatpush1.bf16.msra.mxu0 %v1423
        %2053 = vmatprep.subr.bf16.mxu0 0
        %2054 = vmatpush1.bf16.msra.mxu0 %v1420
        %2055 = vmatprep.subr.bf16.mxu0 0
        %2056 = vmatpush2.bf16.msra.mxu0 %v1465
        %2057 = vmatprep.subr.bf16.mxu0 0
        %2058 = vmatpush2.bf16.msra.mxu0 %v1462
        %2059 = vmatprep.subr.bf16.mxu0 0
        %2060 = vmatpush2.bf16.msra.mxu0 %v1459
        %2061 = vmatprep.subr.bf16.mxu0 0
        %2062 = vmatpush2.bf16.msra.mxu0 %v1456
        %2063 = vmatprep.subr.bf16.mxu0 0
        %2064 = vmatpush2.bf16.msra.mxu0 %v1453
        %2065 = vmatprep.subr.bf16.mxu0 0
        %2066 = vmatpush2.bf16.msra.mxu0 %v1450
        %2067 = vmatprep.subr.bf16.mxu0 0
        %2068 = vmatpush2.bf16.msra.mxu0 %v1447
        %2069 = vmatprep.subr.bf16.mxu0 0
        %2070 = vmatpush2.bf16.msra.mxu0 %v1444
        %2071 = vmatprep.mubr.bf16.mxu0 %v310
        %2072 = vmatmul.mubr.bf16.gmra.mxu0 %v309
        %v2073 = vpop.f32.mrf.mxu0
        %v2074 = vadd.f32 %v2034, %v2073
        %v2075 = vpop.f32.mrf.mxu0
        %v2076 = vpop.f32.mrf.mxu0
        %v2077 = vpop.f32.mrf.mxu0
        %2078 = vdwg.mxu0
        %2079 = vmatprep.subr.bf16.mxu0 0
        %2080 = vmatpush1.bf16.msra.mxu0 %v1489
        %2081 = vmatprep.subr.bf16.mxu0 0
        %2082 = vmatpush1.bf16.msra.mxu0 %v1486
        %2083 = vmatprep.subr.bf16.mxu0 0
        %2084 = vmatpush1.bf16.msra.mxu0 %v1483
        %2085 = vmatprep.subr.bf16.mxu0 0
        %2086 = vmatpush1.bf16.msra.mxu0 %v1480
        %2087 = vmatprep.subr.bf16.mxu0 0
        %2088 = vmatpush1.bf16.msra.mxu0 %v1477
        %2089 = vmatprep.subr.bf16.mxu0 0
        %2090 = vmatpush1.bf16.msra.mxu0 %v1474
        %2091 = vmatprep.subr.bf16.mxu0 0
        %2092 = vmatpush1.bf16.msra.mxu0 %v1471
        %2093 = vmatprep.subr.bf16.mxu0 0
        %2094 = vmatpush1.bf16.msra.mxu0 %v1468
        %2095 = vmatprep.subr.bf16.mxu0 0
        %2096 = vmatpush2.bf16.msra.mxu0 %v1513
        %2097 = vmatprep.subr.bf16.mxu0 0
        %2098 = vmatpush2.bf16.msra.mxu0 %v1510
        %2099 = vmatprep.subr.bf16.mxu0 0
        %2100 = vmatpush2.bf16.msra.mxu0 %v1507
        %2101 = vmatprep.subr.bf16.mxu0 0
        %2102 = vmatpush2.bf16.msra.mxu0 %v1504
        %2103 = vmatprep.subr.bf16.mxu0 0
        %2104 = vmatpush2.bf16.msra.mxu0 %v1501
        %2105 = vmatprep.subr.bf16.mxu0 0
        %2106 = vmatpush2.bf16.msra.mxu0 %v1498
        %2107 = vmatprep.subr.bf16.mxu0 0
        %2108 = vmatpush2.bf16.msra.mxu0 %v1495
        %2109 = vmatprep.subr.bf16.mxu0 0
        %2110 = vmatpush2.bf16.msra.mxu0 %v1492
        %2111 = vmatprep.mubr.bf16.mxu0 %v312
        %2112 = vmatmul.mubr.bf16.gmra.mxu0 %v311
        %v2113 = vpop.f32.mrf.mxu0
        %v2114 = vadd.f32 %v2074, %v2113
        %v2115 = vpop.f32.mrf.mxu0
        %v2116 = vpop.f32.mrf.mxu0
        %v2117 = vpop.f32.mrf.mxu0
        %2118 = vdwg.mxu0
        %2119 = vmatprep.subr.bf16.mxu0 0
        %2120 = vmatpush1.bf16.msra.mxu0 %v1537
        %2121 = vmatprep.subr.bf16.mxu0 0
        %2122 = vmatpush1.bf16.msra.mxu0 %v1534
        %2123 = vmatprep.subr.bf16.mxu0 0
        %2124 = vmatpush1.bf16.msra.mxu0 %v1531
        %2125 = vmatprep.subr.bf16.mxu0 0
        %2126 = vmatpush1.bf16.msra.mxu0 %v1528
        %2127 = vmatprep.subr.bf16.mxu0 0
        %2128 = vmatpush1.bf16.msra.mxu0 %v1525
        %2129 = vmatprep.subr.bf16.mxu0 0
        %2130 = vmatpush1.bf16.msra.mxu0 %v1522
        %2131 = vmatprep.subr.bf16.mxu0 0
        %2132 = vmatpush1.bf16.msra.mxu0 %v1519
        %2133 = vmatprep.subr.bf16.mxu0 0
        %2134 = vmatpush1.bf16.msra.mxu0 %v1516
        %2135 = vmatprep.subr.bf16.mxu0 0
        %2136 = vmatpush2.bf16.msra.mxu0 0
        %2137 = vmatprep.subr.bf16.mxu0 0
        %2138 = vmatpush2.bf16.msra.mxu0 0
        %2139 = vmatprep.subr.bf16.mxu0 0
        %2140 = vmatpush2.bf16.msra.mxu0 0
        %2141 = vmatprep.subr.bf16.mxu0 0
        %2142 = vmatpush2.bf16.msra.mxu0 0
        %2143 = vmatprep.subr.bf16.mxu0 0
        %2144 = vmatpush2.bf16.msra.mxu0 0
        %2145 = vmatprep.subr.bf16.mxu0 0
        %2146 = vmatpush2.bf16.msra.mxu0 0
        %2147 = vmatprep.subr.bf16.mxu0 0
        %2148 = vmatpush2.bf16.msra.mxu0 0
        %2149 = vmatprep.subr.bf16.mxu0 0
        %2150 = vmatpush2.bf16.msra.mxu0 0
        %2151 = vmatprep.mubr.bf16.mxu0 0
        %2152 = vmatmul.mubr.bf16.gmra.mxu0 %v313
        %v2153 = vpop.f32.mrf.mxu0
        %v2154 = vadd.f32 %v2114, %v2153
        %v2155 = vpop.f32.mrf.mxu0
        %v2156 = vpop.f32.mrf.mxu0
        %v2157 = vpop.f32.mrf.mxu0
        %2158 = vdwg.mxu0
        %v2159 = vmul.f32 %v1953, 0.00029462783
        %v2160 = vmul.f32 %v1955, 0.00029462783
        %v2161 = vmul.f32 %v2154, 0.00029462783
        %v2162 = vld [vmem:[%s211] sm:$0x7]
        %v2164 = vlaneseq
        %v2165 = vshrl.u32 %v2164, 7
        %v2166 = vsub.s32 0, %v2165
        %v2167 = vrot.slane %v2162, %v2166
        %v2168 = vlaneseq
        %v2169 = vshrl.u32 %v2168, 7
        %v2170 = vsub.s32 1, %v2169
        %v2171 = vrot.slane %v2162, %v2170
        %v2172 = vlaneseq
        %v2173 = vshrl.u32 %v2172, 7
        %v2174 = vsub.s32 2, %v2173
        %v2175 = vrot.slane %v2162, %v2174
        %v2179 = vadd.f32 %v2159, %v2167
        %v2180 = vadd.f32 %v2160, %v2171
        %v2181 = vadd.f32 %v2161, %v2175
        %vm2182 = vcmp.ge.f32.partialorder %v2179, 0.0
        %vm2183 = vcmp.ge.f32.partialorder %v2180, 0.0
        %vm2184 = vcmp.ge.f32.partialorder %v2181, 0.0
        %v2185 = vmul.f32 %v2179, 1.4142135
        %v2186 = vmul.f32 %v2180, 1.4142135
        %v2187 = vmul.f32 %v2181, 1.4142135
        %v2188 = vmul.f32 %v2179, 0.28284273
        %v2189 = vmul.f32 %v2180, 0.28284273
        %v2190 = vmul.f32 %v2181, 0.28284273
        %v2191 = vsel %vm2182, %v2185, %v2188
        %v2192 = vsel %vm2183, %v2186, %v2189
        %v2193 = vsel %vm2184, %v2187, %v2190
        %s2194 = smul.u32 %s25, 384
        %v2198 = vcombine.low %v2191, %v2192
        %v2200 = vunpack.c.l.s4 1983009808
        %v2201 = vunpack.c.0.s8 %v2200
        %v2202 = vlaneseq
        %v2203 = vshrl.u32 %v2202, 7
        %v2204 = vsub.s32 %v2201, %v2203
        %v2205 = vrot.slane %v2198, %v2204
        %v2207 = vunpack.c.l.s4 1983009808
        %v2208 = vunpack.c.0.s8 %v2207
        %v2209 = vlaneseq
        %v2210 = vshrl.u32 %v2209, 7
        %v2211 = vsub.s32 %v2208, %v2210
        %v2212 = vrot.slane %v2193, %v2211
        %v2213 = vcombine.low %v2205, %v2212
        %s2215 = sshra.s32 %s2194, 7
        %s2216 = sand.u32 %s2194, 127
        %s2217 = sadd.s32 %s2215, 9
        %s2218 = smul.addr %s2217, 2
        %s2219 = scalar_lea.vmem [#allocation2], %s2218
        %2220 = vst [vmem:[%s2219] sm:$0x3f] %v2213
        %p2221 = scmp.eq.s32.totalorder %s24, 13
        // Predicated region
        $region45: #{i_map_forward.3} parent=31 // pred_check
          %p2222 = pneg %p2221
        $region46: #{i_map_forward.3} parent=31 // pred_check_branch
          %2224 = sbr.rel (%p2222) target = $region48
        $region47: #{i_map_forward.3} parent=31 // pred_region
          %s2225 = smul.addr %s2215, 2
          %s2226 = scalar_lea.vmem %s3, %s2225
          %2227 = vst [vmem:[%s2226] sm:$0x3f] %v2213
        $region48: #{i_map_forward.3} parent=31 // pred_fallthru
          _
        %p2228 = scmp.eq.s32.totalorder %s25, 2
        // Predicated region
        $region49: #{i_map_forward.3} parent=31 // pred_check
          %p2229 = pneg %p2228
        $region50: #{i_map_forward.3} parent=31 // pred_check_branch
          %2231 = sbr.rel (%p2229) target = $region52
        $region51: #{i_map_forward.3} parent=31 // pred_region
          %s2232 = scalar_lea.vmem [#allocation2], 18
          %v2233 = vld [vmem:[%s2232] sm:$0xff]
          %v2234 = vld [vmem:[%s2232 + $0x8] sm:$0xff]
          %v2235 = vld [vmem:[%s2232 + $0x10] sm:$0x3]
          %2236 = vst [vmem:[#allocation2] sm:$0xff] %v2233
          %2237 = vst [vmem:[#allocation2 + $0x8] sm:$0xff] %v2234
          %2238 = vst [vmem:[#allocation2 + $0x10] sm:$0x3] %v2235
        $region52: #{i_map_forward.3} parent=31 // pred_fallthru
          _
        // Predicated region
        $region53: #{i_map_forward.3} parent=31 // pred_check
          %p2239 = pneg %p122
        $region54: #{i_map_forward.3} parent=31 // pred_check_branch
          %2241 = sbr.rel (%p2239) target = $region56
        $region55: #{i_map_forward.3} parent=31 // pred_region
          _
        $region56: #{i_map_forward.3} parent=31 // pred_fallthru
          _
        // Predicated region
        $region57: #{i_map_forward.3} parent=31 // pred_check
          %p2242 = pneg %p122
        $region58: #{i_map_forward.3} parent=31 // pred_check_branch
          %2244 = sbr.rel (%p2242) target = $region60
        $region59: #{i_map_forward.3} parent=31 // pred_region
          _
        $region60: #{i_map_forward.3} parent=31 // pred_fallthru
          _
      $region32: #{i_map_forward.3} parent=5 // pred_fallthru
        _
      %p2245 = scmp.le.s32.totalorder 2, %s15
      // Predicated region
      $region61: #{i_map_forward.3} parent=5 // pred_check
        %p2246 = pneg %p2245
      $region62: #{i_map_forward.3} parent=5 // pred_check_branch
        %2248 = sbr.rel (%p2246) target = $region64
      $region63: #{i_map_forward.3} parent=5 // pred_region
        %s2249 = ssub.s32 %s15, 2
      $region64: #{i_map_forward.3} parent=5 // pred_fallthru
        _
    $region6: #{i_map_forward.3} parent=1 // loop_footer
      %s19 = sadd.s32 1, %s15
    $region7: #{i_map_forward.3} parent=1 // loop_footer_branch
      %14 = sbr.rel target = $region3
    $region8: #{i_map_forward.3} parent=1 // loop_exit
      _
    %2250 = vsyncpa [#allocation4], 1
    %s2251 = scalar_lea.sflag [#allocation4], 1
    %2252 = vsyncpa %s2251, 1
    %2253 = vsyncpa [#allocation6], 1
    %s2254 = scalar_lea.sflag [#allocation6], 1
    %2255 = vsyncpa %s2254, 1

// kernel: i_map_forward.2
$region0: #{i_map_forward.2}
  #allocation0 [shape = 'u32[]', space=smem, size = 0x4, offset = 0x4, fixed_abs, tag = 'smem constant byte address 0x4 - core index']
  #allocation1 [shape = 'u32[144,128]{1,0:T(1,128)}', space=vmem, size = 0x12000, scoped, tag = 'internal scratch']
  %s0 = inlined_call_operand.vmem [shape: f32[2,1664], index: 0, kind: input, shape index: {}]
  %s1 = inlined_call_operand.hbm [shape: bf16[1664,1152], index: 1, kind: input, shape index: {}]
  %s2 = inlined_call_operand.hbm [shape: f32[1,1152], index: 2, kind: input, shape index: {}]
  %s3 = inlined_call_operand.vmem [shape: f32[2,1152], index: 3, kind: output, shape index: {}]
  %s4 = sld [smem:[#allocation0]]
  $region53: #{i_map_forward.2} parent=0
    _
  %s6 = ssub.s32 1, %s4
  %s7 = scalar_select 0, %s6, %s4
  $region1: #{i_map_forward.2} parent=0
    #allocation2 [shape = 'u8[2555904]{0}', space=vmem, size = 0x270000, scoped, tag = 'input window, operand 1']
    #allocation3 [shape = 's32[2]{0}', space=sflag, size = 0x8, scoped, tag = 'scoped memory for i_map_forward.2']
    #allocation4 [shape = 'u8[3072]{0}', space=vmem, size = 0xc00, scoped, tag = 'input window, operand 2']
    #allocation5 [shape = 's32[2]{0}', space=sflag, size = 0x8, scoped, tag = 'scoped memory for i_map_forward.2']
    %8 = vsyncpa [#allocation3], 0
    %s9 = scalar_lea.sflag [#allocation3], 1
    %10 = vsyncpa %s9, 0
    %11 = vsyncpa [#allocation5], 0
    %s12 = scalar_lea.sflag [#allocation5], 1
    %13 = vsyncpa %s12, 0
    loop: start=0, step=1, limit=5
    $region2: #{i_map_forward.2} parent=1 // loop_pre_header
      _
    $region3: #{i_map_forward.2} parent=1 // loop_header
      %s15 = sphi 0, %s19
      %p16 = scmp.ge.s32.totalorder %s15, 5
      %s23 = sphi 0, %s23
      %s25 = sphi 0, %s23
      %s26 = sphi 0, %s25
      %s40 = sphi 0, %s26
      %s46 = sphi 0, %s48
      %s49 = sphi 0, %s46
      %s50 = sphi 0, %s49
      %s66 = sphi 0, %s50
      %s72 = sphi 0, %s74
      %s75 = sphi 0, %s72
      %s76 = sphi 0, %s75
      %s92 = sphi 0, %s76
      %s98 = sphi 0, %s100
      %s101 = sphi 0, %s98
      %s102 = sphi 0, %s101
      %s118 = sphi 0, %s102
    $region4: #{i_map_forward.2} parent=1 // loop_header_branch
      %18 = sbr.rel (%p16) target = $region8
    $region5: #{i_map_forward.2} parent=1 // loop_body
      %s20 = ssub.s32 %s15, 1
      %s21 = ssub.s32 %s15, 2
      %s22 = sadd.s32 %s15, 1
      %s24 = sadd.s32 %s23, 1
      %p27 = scmp.eq.s32.totalorder %s15, 2
      %p28 = scmp.ne.s32.totalorder %s23, %s25
      %p29 = scmp.eq.s32.totalorder %s15, 0
      %p30 = por %p28, %p29
      %p31 = scmp.ne.s32.totalorder %s23, %s25
      %p32 = scmp.eq.s32.totalorder %s20, 2
      %p33 = por %p31, %p32
      %p34 = scmp.ne.s32.totalorder %s25, %s26
      %p35 = scmp.eq.s32.totalorder %s20, 0
      %p36 = por %p34, %p35
      %p37 = scmp.ne.s32.totalorder %s25, %s26
      %p38 = scmp.eq.s32.totalorder %s21, 2
      %p39 = por %p37, %p38
      %p41 = scmp.ne.s32.totalorder %s26, %s40
      %p42 = scmp.eq.s32.totalorder %s21, 0
      %p43 = por %p41, %p42
      %s44 = ssub.s32 %s15, %s22
      %p45 = scmp.eq.s32.totalorder %s44, 0
      %s47 = sadd.s32 %s46, 1
      %s48 = scalar_select %p45, %s46, %s47
      %p51 = pneg %p45
      %p52 = scmp.eq.s32.totalorder %s15, 2
      %p53 = por %p51, %p52
      %p54 = scmp.ne.s32.totalorder %s46, %s49
      %p55 = scmp.eq.s32.totalorder %s15, 0
      %p56 = por %p54, %p55
      %p57 = scmp.ne.s32.totalorder %s46, %s49
      %p58 = scmp.eq.s32.totalorder %s20, 2
      %p59 = por %p57, %p58
      %p60 = scmp.ne.s32.totalorder %s49, %s50
      %p61 = scmp.eq.s32.totalorder %s20, 0
      %p62 = por %p60, %p61
      %p63 = scmp.ne.s32.totalorder %s49, %s50
      %p64 = scmp.eq.s32.totalorder %s21, 2
      %p65 = por %p63, %p64
      %p67 = scmp.ne.s32.totalorder %s50, %s66
      %p68 = scmp.eq.s32.totalorder %s21, 0
      %p69 = por %p67, %p68
      %s70 = ssub.s32 %s15, %s22
      %p71 = scmp.eq.s32.totalorder %s70, 0
      %s73 = sadd.s32 %s72, 1
      %s74 = scalar_select %p71, %s72, %s73
      %p77 = pneg %p71
      %p78 = scmp.eq.s32.totalorder %s15, 2
      %p79 = por %p77, %p78
      %p80 = scmp.ne.s32.totalorder %s72, %s75
      %p81 = scmp.eq.s32.totalorder %s15, 0
      %p82 = por %p80, %p81
      %p83 = scmp.ne.s32.totalorder %s72, %s75
      %p84 = scmp.eq.s32.totalorder %s20, 2
      %p85 = por %p83, %p84
      %p86 = scmp.ne.s32.totalorder %s75, %s76
      %p87 = scmp.eq.s32.totalorder %s20, 0
      %p88 = por %p86, %p87
      %p89 = scmp.ne.s32.totalorder %s75, %s76
      %p90 = scmp.eq.s32.totalorder %s21, 2
      %p91 = por %p89, %p90
      %p93 = scmp.ne.s32.totalorder %s76, %s92
      %p94 = scmp.eq.s32.totalorder %s21, 0
      %p95 = por %p93, %p94
      %s96 = ssub.s32 %s15, %s22
      %p97 = scmp.eq.s32.totalorder %s96, 0
      %s99 = sadd.s32 %s98, 1
      %s100 = scalar_select %p97, %s98, %s99
      %p103 = pneg %p97
      %p104 = scmp.eq.s32.totalorder %s15, 2
      %p105 = por %p103, %p104
      %p106 = scmp.ne.s32.totalorder %s98, %s101
      %p107 = scmp.eq.s32.totalorder %s15, 0
      %p108 = por %p106, %p107
      %p109 = scmp.ne.s32.totalorder %s98, %s101
      %p110 = scmp.eq.s32.totalorder %s20, 2
      %p111 = por %p109, %p110
      %p112 = scmp.ne.s32.totalorder %s101, %s102
      %p113 = scmp.eq.s32.totalorder %s20, 0
      %p114 = por %p112, %p113
      %p115 = scmp.ne.s32.totalorder %s101, %s102
      %p116 = scmp.eq.s32.totalorder %s21, 2
      %p117 = por %p115, %p116
      %p119 = scmp.ne.s32.totalorder %s102, %s118
      %p120 = scmp.eq.s32.totalorder %s21, 0
      %p121 = por %p119, %p120
      %p122 = scmp.le.s32.totalorder 1, %s15
      %p123 = scmp.lt.s32.totalorder %s15, 4
      %p124 = pnand %p122, %p123
      %p125 = pneg %p124
      // Predicated region
      $region9: #{i_map_forward.2} parent=5 // pred_check
        _
      $region10: #{i_map_forward.2} parent=5 // pred_check_branch
        %127 = sbr.rel (%p124) target = $region12
      $region11: #{i_map_forward.2} parent=5 // pred_region
        %s128 = ssub.s32 %s15, 1
        // Predicated region
        $region13: #{i_map_forward.2} parent=11 // pred_check
          %p129 = pneg %p36
        $region14: #{i_map_forward.2} parent=11 // pred_check_branch
          %131 = sbr.rel (%p129) target = $region16
        $region15: #{i_map_forward.2} parent=11 // pred_region
          _
        $region16: #{i_map_forward.2} parent=11 // pred_fallthru
          _
      $region12: #{i_map_forward.2} parent=5 // pred_fallthru
        _
      %p132 = scmp.lt.s32.totalorder %s15, 3
      // Predicated region
      $region17: #{i_map_forward.2} parent=5 // pred_check
        %p133 = pneg %p132
      $region18: #{i_map_forward.2} parent=5 // pred_check_branch
        %135 = sbr.rel (%p133) target = $region20
      $region19: #{i_map_forward.2} parent=5 // pred_region
        // Predicated region
        $region21: #{i_map_forward.2} parent=19 // pred_check
          %p136 = pneg %p56
        $region22: #{i_map_forward.2} parent=19 // pred_check_branch
          %138 = sbr.rel (%p136) target = $region24
        $region23: #{i_map_forward.2} parent=19 // pred_region
          %s139 = sand.u32 %s46, 1
          %s140 = scalar_lea.sflag [#allocation3], %s139
          %s141 = sand.u32 %s46, 1
          %s142 = smul.addr %s141, 2496
          %s143 = scalar_lea.vmem [#allocation2], %s142
          %s144 = smul.u32 3, %s15
          %s146 = ssub.s32 39936, 39936
          %147 = vsyncadd %s140, %s146
          %s148 = smul.addr %s144, 64
          %s149 = scalar_lea.hbm %s1, %s148
          %s150 = sshll.u32 %s143, 4
          %s151 = int_to_ptr.vmem [resolvable:$true] %s150
          %156 = dma.hbm_to_vmem [thread:$0]  %s149, 39936, %s151, %s140, 576, 192, 12
        $region24: #{i_map_forward.2} parent=19 // pred_fallthru
          _
        // Predicated region
        $region25: #{i_map_forward.2} parent=19 // pred_check
          %p157 = pneg %p82
        $region26: #{i_map_forward.2} parent=19 // pred_check_branch
          %159 = sbr.rel (%p157) target = $region28
        $region27: #{i_map_forward.2} parent=19 // pred_region
          %s160 = sand.u32 %s72, 1
          %s161 = scalar_lea.sflag [#allocation5], %s160
          %s162 = sand.u32 %s72, 1
          %s163 = smul.addr %s162, 3
          %s164 = scalar_lea.vmem [#allocation4], %s163
          %s165 = smul.u32 3, %s15
          %s167 = ssub.s32 48, 48
          %168 = vsyncadd %s161, %s167
          %s169 = smul.addr %s165, 16
          %s170 = scalar_lea.hbm %s2, %s169
          %s172 = sshll.u32 %s164, 4
          %s173 = int_to_ptr.vmem [resolvable:$true] %s172
          %175 = dma.hbm_to_vmem [thread:$0]  %s170, 48, %s173, %s161
        $region28: #{i_map_forward.2} parent=19 // pred_fallthru
          _
      $region20: #{i_map_forward.2} parent=5 // pred_fallthru
        _
      %p176 = scmp.le.s32.totalorder 1, %s15
      %p177 = scmp.lt.s32.totalorder %s15, 4
      %p178 = pnand %p176, %p177
      %p179 = pneg %p178
      // Predicated region
      $region29: #{i_map_forward.2} parent=5 // pred_check
        _
      $region30: #{i_map_forward.2} parent=5 // pred_check_branch
        %181 = sbr.rel (%p178) target = $region32
      $region31: #{i_map_forward.2} parent=5 // pred_region
        %s182 = ssub.s32 %s15, 1
        %s183 = sand.u32 %s49, 1
        %s184 = scalar_lea.sflag [#allocation3], %s183
        %s185 = sand.u32 %s49, 1
        %s186 = smul.addr %s185, 2496
        %s187 = scalar_lea.vmem [#allocation2], %s186
        // Predicated region
        $region33: #{i_map_forward.2} parent=31 // pred_check
          %p188 = pneg %p62
        $region34: #{i_map_forward.2} parent=31 // pred_check_branch
          %190 = sbr.rel (%p188) target = $region36
        $region35: #{i_map_forward.2} parent=31 // pred_region
          %191 = dma.done %s184, 39936
        $region36: #{i_map_forward.2} parent=31 // pred_fallthru
          _
        %s192 = sand.u32 %s75, 1
        %s193 = scalar_lea.sflag [#allocation5], %s192
        %s194 = sand.u32 %s75, 1
        %s195 = smul.addr %s194, 3
        %s196 = scalar_lea.vmem [#allocation4], %s195
        // Predicated region
        $region37: #{i_map_forward.2} parent=31 // pred_check
          %p197 = pneg %p88
        $region38: #{i_map_forward.2} parent=31 // pred_check_branch
          %199 = sbr.rel (%p197) target = $region40
        $region39: #{i_map_forward.2} parent=31 // pred_region
          %200 = dma.done %s193, 48
        $region40: #{i_map_forward.2} parent=31 // pred_fallthru
          _
        %p201 = pneg %p36
        %p202 = pneg %p33
        %s203 = sand.u32 %s49, 1
        %s204 = scalar_lea.sflag [#allocation3], %s203
        %s205 = sand.u32 %s49, 1
        %s206 = smul.addr %s205, 2496
        %s207 = scalar_lea.vmem [#allocation2], %s206
        %p208 = pneg %p62
        %p209 = pneg %p59
        %s210 = sand.u32 %s75, 1
        %s211 = scalar_lea.sflag [#allocation5], %s210
        %s212 = sand.u32 %s75, 1
        %s213 = smul.addr %s212, 3
        %s214 = scalar_lea.vmem [#allocation4], %s213
        %p215 = pneg %p88
        %p216 = pneg %p85
        %p217 = pneg %p114
        %p218 = pneg %p111
        %s219 = smul.u32 3, %s20
        %p220 = scmp.lt.s32.totalorder %s219, 8
        %s221 = scalar_select %p220, %s219, 8
        %s222 = smul.addr %s221, 2
        %s223 = scalar_lea.vmem %s3, %s222
        %s224 = smul.u32 3, %s20
        %s225 = smul.u32 3, %s20
        %s226 = smul.u32 3, %s20
        %p227 = scmp.lt.s32.totalorder %s226, 8
        %s228 = scalar_select %p227, %s226, 8
        %s229 = smul.addr %s228, 2
        %s230 = scalar_lea.vmem %s3, %s229
        %s231 = smul.u32 3, %s20
        %v233 = vld [vmem:[%s0] sm:$0xff]
        %v234 = vld [vmem:[%s0 + $0x8] sm:$0xff]
        %v235 = vld [vmem:[%s0 + $0x10] sm:$0xff]
        %v236 = vld [vmem:[%s0 + $0x18] sm:$0x3]
        %v241 = vcombine.high %v233, %v233
        %v243 = vunpack.c.l.s4 1983009808
        %v244 = vunpack.c.0.s8 %v243
        %v245 = vlaneseq
        %v246 = vshrl.u32 %v245, 7
        %v247 = vsub.s32 %v244, %v246
        %v248 = vrot.slane %v233, %v247
        %v250 = vunpack.c.l.s4 1983009808
        %v251 = vunpack.c.0.s8 %v250
        %v252 = vlaneseq
        %v253 = vshrl.u32 %v252, 7
        %v254 = vsub.s32 %v251, %v253
        %v255 = vrot.slane %v241, %v254
        %v256 = vcombine.high %v248, %v248
        %v257 = vcombine.high %v255, %v255
        %v258 = vcombine.high %v234, %v234
        %v260 = vunpack.c.l.s4 1983009808
        %v261 = vunpack.c.0.s8 %v260
        %v262 = vlaneseq
        %v263 = vshrl.u32 %v262, 7
        %v264 = vsub.s32 %v261, %v263
        %v265 = vrot.slane %v234, %v264
        %v267 = vunpack.c.l.s4 1983009808
        %v268 = vunpack.c.0.s8 %v267
        %v269 = vlaneseq
        %v270 = vshrl.u32 %v269, 7
        %v271 = vsub.s32 %v268, %v270
        %v272 = vrot.slane %v258, %v271
        %v273 = vcombine.high %v265, %v265
        %v274 = vcombine.high %v272, %v272
        %v275 = vcombine.high %v235, %v235
        %v277 = vunpack.c.l.s4 1983009808
        %v278 = vunpack.c.0.s8 %v277
        %v279 = vlaneseq
        %v280 = vshrl.u32 %v279, 7
        %v281 = vsub.s32 %v278, %v280
        %v282 = vrot.slane %v235, %v281
        %v284 = vunpack.c.l.s4 1983009808
        %v285 = vunpack.c.0.s8 %v284
        %v286 = vlaneseq
        %v287 = vshrl.u32 %v286, 7
        %v288 = vsub.s32 %v285, %v287
        %v289 = vrot.slane %v275, %v288
        %v290 = vcombine.high %v282, %v282
        %v291 = vcombine.high %v289, %v289
        %v293 = vunpack.c.l.s4 1983009808
        %v294 = vunpack.c.0.s8 %v293
        %v295 = vlaneseq
        %v296 = vshrl.u32 %v295, 7
        %v297 = vsub.s32 %v294, %v296
        %v298 = vrot.slane %v236, %v297
        %v312 = vpack.c.bf16 %v248, %v248
        %v313 = vpack.c.bf16 %v256, %v256
        %v314 = vpack.c.bf16 %v255, %v255
        %v315 = vpack.c.bf16 %v257, %v257
        %v316 = vpack.c.bf16 %v265, %v265
        %v317 = vpack.c.bf16 %v273, %v273
        %v318 = vpack.c.bf16 %v272, %v272
        %v319 = vpack.c.bf16 %v274, %v274
        %v320 = vpack.c.bf16 %v282, %v282
        %v321 = vpack.c.bf16 %v290, %v290
        %v322 = vpack.c.bf16 %v289, %v289
        %v323 = vpack.c.bf16 %v291, %v291
        %v324 = vpack.c.bf16 %v298, %v298
        %v325 = vld [vmem:[%s187] sm:$0xff]
        %v326 = vld [vmem:[%s187 + $0x8] sm:$0xf]
        %v327 = vld [vmem:[%s187 + $0xc] sm:$0xff]
        %v328 = vld [vmem:[%s187 + $0x14] sm:$0xf]
        %v329 = vld [vmem:[%s187 + $0x18] sm:$0xff]
        %v330 = vld [vmem:[%s187 + $0x20] sm:$0xf]
        %v331 = vld [vmem:[%s187 + $0x24] sm:$0xff]
        %v332 = vld [vmem:[%s187 + $0x2c] sm:$0xf]
        %v333 = vld [vmem:[%s187 + $0x30] sm:$0xff]
        %v334 = vld [vmem:[%s187 + $0x38] sm:$0xf]
        %v335 = vld [vmem:[%s187 + $0x3c] sm:$0xff]
        %v336 = vld [vmem:[%s187 + $0x44] sm:$0xf]
        %v337 = vld [vmem:[%s187 + $0x48] sm:$0xff]
        %v338 = vld [vmem:[%s187 + $0x50] sm:$0xf]
        %v339 = vld [vmem:[%s187 + $0x54] sm:$0xff]
        %v340 = vld [vmem:[%s187 + $0x5c] sm:$0xf]
        %v341 = vld [vmem:[%s187 + $0x60] sm:$0xff]
        %v342 = vld [vmem:[%s187 + $0x68] sm:$0xf]
        %v343 = vld [vmem:[%s187 + $0x6c] sm:$0xff]
        %v344 = vld [vmem:[%s187 + $0x74] sm:$0xf]
        %v345 = vld [vmem:[%s187 + $0x78] sm:$0xff]
        %v346 = vld [vmem:[%s187 + $0x80] sm:$0xf]
        %v347 = vld [vmem:[%s187 + $0x84] sm:$0xff]
        %v348 = vld [vmem:[%s187 + $0x8c] sm:$0xf]
        %v349 = vld [vmem:[%s187 + $0x90] sm:$0xff]
        %v350 = vld [vmem:[%s187 + $0x98] sm:$0xf]
        %v351 = vld [vmem:[%s187 + $0x9c] sm:$0xff]
        %v352 = vld [vmem:[%s187 + $0xa4] sm:$0xf]
        %v353 = vld [vmem:[%s187 + $0xa8] sm:$0xff]
        %v354 = vld [vmem:[%s187 + $0xb0] sm:$0xf]
        %v355 = vld [vmem:[%s187 + $0xb4] sm:$0xff]
        %v356 = vld [vmem:[%s187 + $0xbc] sm:$0xf]
        %v357 = vld [vmem:[%s187 + $0xc0] sm:$0xff]
        %v358 = vld [vmem:[%s187 + $0xc8] sm:$0xf]
        %v359 = vld [vmem:[%s187 + $0xcc] sm:$0xff]
        %v360 = vld [vmem:[%s187 + $0xd4] sm:$0xf]
        %v361 = vld [vmem:[%s187 + $0xd8] sm:$0xff]
        %v362 = vld [vmem:[%s187 + $0xe0] sm:$0xf]
        %v363 = vld [vmem:[%s187 + $0xe4] sm:$0xff]
        %v364 = vld [vmem:[%s187 + $0xec] sm:$0xf]
        %v365 = vld [vmem:[%s187 + $0xf0] sm:$0xff]
        %v366 = vld [vmem:[%s187 + $0xf8] sm:$0xf]
        %v367 = vld [vmem:[%s187 + $0xfc] sm:$0xff]
        %v368 = vld [vmem:[%s187 + $0x104] sm:$0xf]
        %v369 = vld [vmem:[%s187 + $0x108] sm:$0xff]
        %v370 = vld [vmem:[%s187 + $0x110] sm:$0xf]
        %v371 = vld [vmem:[%s187 + $0x114] sm:$0xff]
        %v372 = vld [vmem:[%s187 + $0x11c] sm:$0xf]
        %v373 = vld [vmem:[%s187 + $0x120] sm:$0xff]
        %v374 = vld [vmem:[%s187 + $0x128] sm:$0xf]
        %v375 = vld [vmem:[%s187 + $0x12c] sm:$0xff]
        %v376 = vld [vmem:[%s187 + $0x134] sm:$0xf]
        %v377 = vld [vmem:[%s187 + $0x138] sm:$0xff]
        %v378 = vld [vmem:[%s187 + $0x140] sm:$0xf]
        %v379 = vld [vmem:[%s187 + $0x144] sm:$0xff]
        %v380 = vld [vmem:[%s187 + $0x14c] sm:$0xf]
        %v381 = vld [vmem:[%s187 + $0x150] sm:$0xff]
        %v382 = vld [vmem:[%s187 + $0x158] sm:$0xf]
        %v383 = vld [vmem:[%s187 + $0x15c] sm:$0xff]
        %v384 = vld [vmem:[%s187 + $0x164] sm:$0xf]
        %v385 = vld [vmem:[%s187 + $0x168] sm:$0xff]
        %v386 = vld [vmem:[%s187 + $0x170] sm:$0xf]
        %v387 = vld [vmem:[%s187 + $0x174] sm:$0xff]
        %v388 = vld [vmem:[%s187 + $0x17c] sm:$0xf]
        %v389 = vld [vmem:[%s187 + $0x180] sm:$0xff]
        %v390 = vld [vmem:[%s187 + $0x188] sm:$0xf]
        %v391 = vld [vmem:[%s187 + $0x18c] sm:$0xff]
        %v392 = vld [vmem:[%s187 + $0x194] sm:$0xf]
        %v393 = vld [vmem:[%s187 + $0x198] sm:$0xff]
        %v394 = vld [vmem:[%s187 + $0x1a0] sm:$0xf]
        %v395 = vld [vmem:[%s187 + $0x1a4] sm:$0xff]
        %v396 = vld [vmem:[%s187 + $0x1ac] sm:$0xf]
        %v397 = vld [vmem:[%s187 + $0x1b0] sm:$0xff]
        %v398 = vld [vmem:[%s187 + $0x1b8] sm:$0xf]
        %v399 = vld [vmem:[%s187 + $0x1bc] sm:$0xff]
        %v400 = vld [vmem:[%s187 + $0x1c4] sm:$0xf]
        %v401 = vld [vmem:[%s187 + $0x1c8] sm:$0xff]
        %v402 = vld [vmem:[%s187 + $0x1d0] sm:$0xf]
        %v403 = vld [vmem:[%s187 + $0x1d4] sm:$0xff]
        %v404 = vld [vmem:[%s187 + $0x1dc] sm:$0xf]
        %v405 = vld [vmem:[%s187 + $0x1e0] sm:$0xff]
        %v406 = vld [vmem:[%s187 + $0x1e8] sm:$0xf]
        %v407 = vld [vmem:[%s187 + $0x1ec] sm:$0xff]
        %v408 = vld [vmem:[%s187 + $0x1f4] sm:$0xf]
        %v409 = vld [vmem:[%s187 + $0x1f8] sm:$0xff]
        %v410 = vld [vmem:[%s187 + $0x200] sm:$0xf]
        %v411 = vld [vmem:[%s187 + $0x204] sm:$0xff]
        %v412 = vld [vmem:[%s187 + $0x20c] sm:$0xf]
        %v413 = vld [vmem:[%s187 + $0x210] sm:$0xff]
        %v414 = vld [vmem:[%s187 + $0x218] sm:$0xf]
        %v415 = vld [vmem:[%s187 + $0x21c] sm:$0xff]
        %v416 = vld [vmem:[%s187 + $0x224] sm:$0xf]
        %v417 = vld [vmem:[%s187 + $0x228] sm:$0xff]
        %v418 = vld [vmem:[%s187 + $0x230] sm:$0xf]
        %v419 = vld [vmem:[%s187 + $0x234] sm:$0xff]
        %v420 = vld [vmem:[%s187 + $0x23c] sm:$0xf]
        %v421 = vld [vmem:[%s187 + $0x240] sm:$0xff]
        %v422 = vld [vmem:[%s187 + $0x248] sm:$0xf]
        %v423 = vld [vmem:[%s187 + $0x24c] sm:$0xff]
        %v424 = vld [vmem:[%s187 + $0x254] sm:$0xf]
        %v425 = vld [vmem:[%s187 + $0x258] sm:$0xff]
        %v426 = vld [vmem:[%s187 + $0x260] sm:$0xf]
        %v427 = vld [vmem:[%s187 + $0x264] sm:$0xff]
        %v428 = vld [vmem:[%s187 + $0x26c] sm:$0xf]
        %v429 = vld [vmem:[%s187 + $0x270] sm:$0xff]
        %v430 = vld [vmem:[%s187 + $0x278] sm:$0xf]
        %v431 = vld [vmem:[%s187 + $0x27c] sm:$0xff]
        %v432 = vld [vmem:[%s187 + $0x284] sm:$0xf]
        %v433 = vld [vmem:[%s187 + $0x288] sm:$0xff]
        %v434 = vld [vmem:[%s187 + $0x290] sm:$0xf]
        %v435 = vld [vmem:[%s187 + $0x294] sm:$0xff]
        %v436 = vld [vmem:[%s187 + $0x29c] sm:$0xf]
        %v437 = vld [vmem:[%s187 + $0x2a0] sm:$0xff]
        %v438 = vld [vmem:[%s187 + $0x2a8] sm:$0xf]
        %v439 = vld [vmem:[%s187 + $0x2ac] sm:$0xff]
        %v440 = vld [vmem:[%s187 + $0x2b4] sm:$0xf]
        %v441 = vld [vmem:[%s187 + $0x2b8] sm:$0xff]
        %v442 = vld [vmem:[%s187 + $0x2c0] sm:$0xf]
        %v443 = vld [vmem:[%s187 + $0x2c4] sm:$0xff]
        %v444 = vld [vmem:[%s187 + $0x2cc] sm:$0xf]
        %v445 = vld [vmem:[%s187 + $0x2d0] sm:$0xff]
        %v446 = vld [vmem:[%s187 + $0x2d8] sm:$0xf]
        %v447 = vld [vmem:[%s187 + $0x2dc] sm:$0xff]
        %v448 = vld [vmem:[%s187 + $0x2e4] sm:$0xf]
        %v449 = vld [vmem:[%s187 + $0x2e8] sm:$0xff]
        %v450 = vld [vmem:[%s187 + $0x2f0] sm:$0xf]
        %v451 = vld [vmem:[%s187 + $0x2f4] sm:$0xff]
        %v452 = vld [vmem:[%s187 + $0x2fc] sm:$0xf]
        %v453 = vld [vmem:[%s187 + $0x300] sm:$0xff]
        %v454 = vld [vmem:[%s187 + $0x308] sm:$0xf]
        %v455 = vld [vmem:[%s187 + $0x30c] sm:$0xff]
        %v456 = vld [vmem:[%s187 + $0x314] sm:$0xf]
        %v457 = vld [vmem:[%s187 + $0x318] sm:$0xff]
        %v458 = vld [vmem:[%s187 + $0x320] sm:$0xf]
        %v459 = vld [vmem:[%s187 + $0x324] sm:$0xff]
        %v460 = vld [vmem:[%s187 + $0x32c] sm:$0xf]
        %v461 = vld [vmem:[%s187 + $0x330] sm:$0xff]
        %v462 = vld [vmem:[%s187 + $0x338] sm:$0xf]
        %v463 = vld [vmem:[%s187 + $0x33c] sm:$0xff]
        %v464 = vld [vmem:[%s187 + $0x344] sm:$0xf]
        %v465 = vld [vmem:[%s187 + $0x348] sm:$0xff]
        %v466 = vld [vmem:[%s187 + $0x350] sm:$0xf]
        %v467 = vld [vmem:[%s187 + $0x354] sm:$0xff]
        %v468 = vld [vmem:[%s187 + $0x35c] sm:$0xf]
        %v469 = vld [vmem:[%s187 + $0x360] sm:$0xff]
        %v470 = vld [vmem:[%s187 + $0x368] sm:$0xf]
        %v471 = vld [vmem:[%s187 + $0x36c] sm:$0xff]
        %v472 = vld [vmem:[%s187 + $0x374] sm:$0xf]
        %v473 = vld [vmem:[%s187 + $0x378] sm:$0xff]
        %v474 = vld [vmem:[%s187 + $0x380] sm:$0xf]
        %v475 = vld [vmem:[%s187 + $0x384] sm:$0xff]
        %v476 = vld [vmem:[%s187 + $0x38c] sm:$0xf]
        %v477 = vld [vmem:[%s187 + $0x390] sm:$0xff]
        %v478 = vld [vmem:[%s187 + $0x398] sm:$0xf]
        %v479 = vld [vmem:[%s187 + $0x39c] sm:$0xff]
        %v480 = vld [vmem:[%s187 + $0x3a4] sm:$0xf]
        %v481 = vld [vmem:[%s187 + $0x3a8] sm:$0xff]
        %v482 = vld [vmem:[%s187 + $0x3b0] sm:$0xf]
        %v483 = vld [vmem:[%s187 + $0x3b4] sm:$0xff]
        %v484 = vld [vmem:[%s187 + $0x3bc] sm:$0xf]
        %v485 = vld [vmem:[%s187 + $0x3c0] sm:$0xff]
        %v486 = vld [vmem:[%s187 + $0x3c8] sm:$0xf]
        %v487 = vld [vmem:[%s187 + $0x3cc] sm:$0xff]
        %v488 = vld [vmem:[%s187 + $0x3d4] sm:$0xf]
        %v489 = vld [vmem:[%s187 + $0x3d8] sm:$0xff]
        %v490 = vld [vmem:[%s187 + $0x3e0] sm:$0xf]
        %v491 = vld [vmem:[%s187 + $0x3e4] sm:$0xff]
        %v492 = vld [vmem:[%s187 + $0x3ec] sm:$0xf]
        %v493 = vld [vmem:[%s187 + $0x3f0] sm:$0xff]
        %v494 = vld [vmem:[%s187 + $0x3f8] sm:$0xf]
        %v495 = vld [vmem:[%s187 + $0x3fc] sm:$0xff]
        %v496 = vld [vmem:[%s187 + $0x404] sm:$0xf]
        %v497 = vld [vmem:[%s187 + $0x408] sm:$0xff]
        %v498 = vld [vmem:[%s187 + $0x410] sm:$0xf]
        %v499 = vld [vmem:[%s187 + $0x414] sm:$0xff]
        %v500 = vld [vmem:[%s187 + $0x41c] sm:$0xf]
        %v501 = vld [vmem:[%s187 + $0x420] sm:$0xff]
        %v502 = vld [vmem:[%s187 + $0x428] sm:$0xf]
        %v503 = vld [vmem:[%s187 + $0x42c] sm:$0xff]
        %v504 = vld [vmem:[%s187 + $0x434] sm:$0xf]
        %v505 = vld [vmem:[%s187 + $0x438] sm:$0xff]
        %v506 = vld [vmem:[%s187 + $0x440] sm:$0xf]
        %v507 = vld [vmem:[%s187 + $0x444] sm:$0xff]
        %v508 = vld [vmem:[%s187 + $0x44c] sm:$0xf]
        %v509 = vld [vmem:[%s187 + $0x450] sm:$0xff]
        %v510 = vld [vmem:[%s187 + $0x458] sm:$0xf]
        %v511 = vld [vmem:[%s187 + $0x45c] sm:$0xff]
        %v512 = vld [vmem:[%s187 + $0x464] sm:$0xf]
        %v513 = vld [vmem:[%s187 + $0x468] sm:$0xff]
        %v514 = vld [vmem:[%s187 + $0x470] sm:$0xf]
        %v515 = vld [vmem:[%s187 + $0x474] sm:$0xff]
        %v516 = vld [vmem:[%s187 + $0x47c] sm:$0xf]
        %v517 = vld [vmem:[%s187 + $0x480] sm:$0xff]
        %v518 = vld [vmem:[%s187 + $0x488] sm:$0xf]
        %v519 = vld [vmem:[%s187 + $0x48c] sm:$0xff]
        %v520 = vld [vmem:[%s187 + $0x494] sm:$0xf]
        %v521 = vld [vmem:[%s187 + $0x498] sm:$0xff]
        %v522 = vld [vmem:[%s187 + $0x4a0] sm:$0xf]
        %v523 = vld [vmem:[%s187 + $0x4a4] sm:$0xff]
        %v524 = vld [vmem:[%s187 + $0x4ac] sm:$0xf]
        %v525 = vld [vmem:[%s187 + $0x4b0] sm:$0xff]
        %v526 = vld [vmem:[%s187 + $0x4b8] sm:$0xf]
        %v527 = vld [vmem:[%s187 + $0x4bc] sm:$0xff]
        %v528 = vld [vmem:[%s187 + $0x4c4] sm:$0xf]
        %v529 = vld [vmem:[%s187 + $0x4c8] sm:$0xff]
        %v530 = vld [vmem:[%s187 + $0x4d0] sm:$0xf]
        %v531 = vld [vmem:[%s187 + $0x4d4] sm:$0xff]
        %v532 = vld [vmem:[%s187 + $0x4dc] sm:$0xf]
        %v533 = vld [vmem:[%s187 + $0x4e0] sm:$0xff]
        %v534 = vld [vmem:[%s187 + $0x4e8] sm:$0xf]
        %v535 = vld [vmem:[%s187 + $0x4ec] sm:$0xff]
        %v536 = vld [vmem:[%s187 + $0x4f4] sm:$0xf]
        %v537 = vld [vmem:[%s187 + $0x4f8] sm:$0xff]
        %v538 = vld [vmem:[%s187 + $0x500] sm:$0xf]
        %v539 = vld [vmem:[%s187 + $0x504] sm:$0xff]
        %v540 = vld [vmem:[%s187 + $0x50c] sm:$0xf]
        %v541 = vld [vmem:[%s187 + $0x510] sm:$0xff]
        %v542 = vld [vmem:[%s187 + $0x518] sm:$0xf]
        %v543 = vld [vmem:[%s187 + $0x51c] sm:$0xff]
        %v544 = vld [vmem:[%s187 + $0x524] sm:$0xf]
        %v545 = vld [vmem:[%s187 + $0x528] sm:$0xff]
        %v546 = vld [vmem:[%s187 + $0x530] sm:$0xf]
        %v547 = vld [vmem:[%s187 + $0x534] sm:$0xff]
        %v548 = vld [vmem:[%s187 + $0x53c] sm:$0xf]
        %v549 = vld [vmem:[%s187 + $0x540] sm:$0xff]
        %v550 = vld [vmem:[%s187 + $0x548] sm:$0xf]
        %v551 = vld [vmem:[%s187 + $0x54c] sm:$0xff]
        %v552 = vld [vmem:[%s187 + $0x554] sm:$0xf]
        %v553 = vld [vmem:[%s187 + $0x558] sm:$0xff]
        %v554 = vld [vmem:[%s187 + $0x560] sm:$0xf]
        %v555 = vld [vmem:[%s187 + $0x564] sm:$0xff]
        %v556 = vld [vmem:[%s187 + $0x56c] sm:$0xf]
        %v557 = vld [vmem:[%s187 + $0x570] sm:$0xff]
        %v558 = vld [vmem:[%s187 + $0x578] sm:$0xf]
        %v559 = vld [vmem:[%s187 + $0x57c] sm:$0xff]
        %v560 = vld [vmem:[%s187 + $0x584] sm:$0xf]
        %v561 = vld [vmem:[%s187 + $0x588] sm:$0xff]
        %v562 = vld [vmem:[%s187 + $0x590] sm:$0xf]
        %v563 = vld [vmem:[%s187 + $0x594] sm:$0xff]
        %v564 = vld [vmem:[%s187 + $0x59c] sm:$0xf]
        %v565 = vld [vmem:[%s187 + $0x5a0] sm:$0xff]
        %v566 = vld [vmem:[%s187 + $0x5a8] sm:$0xf]
        %v567 = vld [vmem:[%s187 + $0x5ac] sm:$0xff]
        %v568 = vld [vmem:[%s187 + $0x5b4] sm:$0xf]
        %v569 = vld [vmem:[%s187 + $0x5b8] sm:$0xff]
        %v570 = vld [vmem:[%s187 + $0x5c0] sm:$0xf]
        %v571 = vld [vmem:[%s187 + $0x5c4] sm:$0xff]
        %v572 = vld [vmem:[%s187 + $0x5cc] sm:$0xf]
        %v573 = vld [vmem:[%s187 + $0x5d0] sm:$0xff]
        %v574 = vld [vmem:[%s187 + $0x5d8] sm:$0xf]
        %v575 = vld [vmem:[%s187 + $0x5dc] sm:$0xff]
        %v576 = vld [vmem:[%s187 + $0x5e4] sm:$0xf]
        %v577 = vld [vmem:[%s187 + $0x5e8] sm:$0xff]
        %v578 = vld [vmem:[%s187 + $0x5f0] sm:$0xf]
        %v579 = vld [vmem:[%s187 + $0x5f4] sm:$0xff]
        %v580 = vld [vmem:[%s187 + $0x5fc] sm:$0xf]
        %v581 = vld [vmem:[%s187 + $0x600] sm:$0xff]
        %v582 = vld [vmem:[%s187 + $0x608] sm:$0xf]
        %v583 = vld [vmem:[%s187 + $0x60c] sm:$0xff]
        %v584 = vld [vmem:[%s187 + $0x614] sm:$0xf]
        %v585 = vld [vmem:[%s187 + $0x618] sm:$0xff]
        %v586 = vld [vmem:[%s187 + $0x620] sm:$0xf]
        %v587 = vld [vmem:[%s187 + $0x624] sm:$0xff]
        %v588 = vld [vmem:[%s187 + $0x62c] sm:$0xf]
        %v589 = vld [vmem:[%s187 + $0x630] sm:$0xff]
        %v590 = vld [vmem:[%s187 + $0x638] sm:$0xf]
        %v591 = vld [vmem:[%s187 + $0x63c] sm:$0xff]
        %v592 = vld [vmem:[%s187 + $0x644] sm:$0xf]
        %v593 = vld [vmem:[%s187 + $0x648] sm:$0xff]
        %v594 = vld [vmem:[%s187 + $0x650] sm:$0xf]
        %v595 = vld [vmem:[%s187 + $0x654] sm:$0xff]
        %v596 = vld [vmem:[%s187 + $0x65c] sm:$0xf]
        %v597 = vld [vmem:[%s187 + $0x660] sm:$0xff]
        %v598 = vld [vmem:[%s187 + $0x668] sm:$0xf]
        %v599 = vld [vmem:[%s187 + $0x66c] sm:$0xff]
        %v600 = vld [vmem:[%s187 + $0x674] sm:$0xf]
        %v601 = vld [vmem:[%s187 + $0x678] sm:$0xff]
        %v602 = vld [vmem:[%s187 + $0x680] sm:$0xf]
        %v603 = vld [vmem:[%s187 + $0x684] sm:$0xff]
        %v604 = vld [vmem:[%s187 + $0x68c] sm:$0xf]
        %v605 = vld [vmem:[%s187 + $0x690] sm:$0xff]
        %v606 = vld [vmem:[%s187 + $0x698] sm:$0xf]
        %v607 = vld [vmem:[%s187 + $0x69c] sm:$0xff]
        %v608 = vld [vmem:[%s187 + $0x6a4] sm:$0xf]
        %v609 = vld [vmem:[%s187 + $0x6a8] sm:$0xff]
        %v610 = vld [vmem:[%s187 + $0x6b0] sm:$0xf]
        %v611 = vld [vmem:[%s187 + $0x6b4] sm:$0xff]
        %v612 = vld [vmem:[%s187 + $0x6bc] sm:$0xf]
        %v613 = vld [vmem:[%s187 + $0x6c0] sm:$0xff]
        %v614 = vld [vmem:[%s187 + $0x6c8] sm:$0xf]
        %v615 = vld [vmem:[%s187 + $0x6cc] sm:$0xff]
        %v616 = vld [vmem:[%s187 + $0x6d4] sm:$0xf]
        %v617 = vld [vmem:[%s187 + $0x6d8] sm:$0xff]
        %v618 = vld [vmem:[%s187 + $0x6e0] sm:$0xf]
        %v619 = vld [vmem:[%s187 + $0x6e4] sm:$0xff]
        %v620 = vld [vmem:[%s187 + $0x6ec] sm:$0xf]
        %v621 = vld [vmem:[%s187 + $0x6f0] sm:$0xff]
        %v622 = vld [vmem:[%s187 + $0x6f8] sm:$0xf]
        %v623 = vld [vmem:[%s187 + $0x6fc] sm:$0xff]
        %v624 = vld [vmem:[%s187 + $0x704] sm:$0xf]
        %v625 = vld [vmem:[%s187 + $0x708] sm:$0xff]
        %v626 = vld [vmem:[%s187 + $0x710] sm:$0xf]
        %v627 = vld [vmem:[%s187 + $0x714] sm:$0xff]
        %v628 = vld [vmem:[%s187 + $0x71c] sm:$0xf]
        %v629 = vld [vmem:[%s187 + $0x720] sm:$0xff]
        %v630 = vld [vmem:[%s187 + $0x728] sm:$0xf]
        %v631 = vld [vmem:[%s187 + $0x72c] sm:$0xff]
        %v632 = vld [vmem:[%s187 + $0x734] sm:$0xf]
        %v633 = vld [vmem:[%s187 + $0x738] sm:$0xff]
        %v634 = vld [vmem:[%s187 + $0x740] sm:$0xf]
        %v635 = vld [vmem:[%s187 + $0x744] sm:$0xff]
        %v636 = vld [vmem:[%s187 + $0x74c] sm:$0xf]
        %v637 = vld [vmem:[%s187 + $0x750] sm:$0xff]
        %v638 = vld [vmem:[%s187 + $0x758] sm:$0xf]
        %v639 = vld [vmem:[%s187 + $0x75c] sm:$0xff]
        %v640 = vld [vmem:[%s187 + $0x764] sm:$0xf]
        %v641 = vld [vmem:[%s187 + $0x768] sm:$0xff]
        %v642 = vld [vmem:[%s187 + $0x770] sm:$0xf]
        %v643 = vld [vmem:[%s187 + $0x774] sm:$0xff]
        %v644 = vld [vmem:[%s187 + $0x77c] sm:$0xf]
        %v645 = vld [vmem:[%s187 + $0x780] sm:$0xff]
        %v646 = vld [vmem:[%s187 + $0x788] sm:$0xf]
        %v647 = vld [vmem:[%s187 + $0x78c] sm:$0xff]
        %v648 = vld [vmem:[%s187 + $0x794] sm:$0xf]
        %v649 = vld [vmem:[%s187 + $0x798] sm:$0xff]
        %v650 = vld [vmem:[%s187 + $0x7a0] sm:$0xf]
        %v651 = vld [vmem:[%s187 + $0x7a4] sm:$0xff]
        %v652 = vld [vmem:[%s187 + $0x7ac] sm:$0xf]
        %v653 = vld [vmem:[%s187 + $0x7b0] sm:$0xff]
        %v654 = vld [vmem:[%s187 + $0x7b8] sm:$0xf]
        %v655 = vld [vmem:[%s187 + $0x7bc] sm:$0xff]
        %v656 = vld [vmem:[%s187 + $0x7c4] sm:$0xf]
        %v657 = vld [vmem:[%s187 + $0x7c8] sm:$0xff]
        %v658 = vld [vmem:[%s187 + $0x7d0] sm:$0xf]
        %v659 = vld [vmem:[%s187 + $0x7d4] sm:$0xff]
        %v660 = vld [vmem:[%s187 + $0x7dc] sm:$0xf]
        %v661 = vld [vmem:[%s187 + $0x7e0] sm:$0xff]
        %v662 = vld [vmem:[%s187 + $0x7e8] sm:$0xf]
        %v663 = vld [vmem:[%s187 + $0x7ec] sm:$0xff]
        %v664 = vld [vmem:[%s187 + $0x7f4] sm:$0xf]
        %v665 = vld [vmem:[%s187 + $0x7f8] sm:$0xff]
        %v666 = vld [vmem:[%s187 + $0x800] sm:$0xf]
        %v667 = vld [vmem:[%s187 + $0x804] sm:$0xff]
        %v668 = vld [vmem:[%s187 + $0x80c] sm:$0xf]
        %v669 = vld [vmem:[%s187 + $0x810] sm:$0xff]
        %v670 = vld [vmem:[%s187 + $0x818] sm:$0xf]
        %v671 = vld [vmem:[%s187 + $0x81c] sm:$0xff]
        %v672 = vld [vmem:[%s187 + $0x824] sm:$0xf]
        %v673 = vld [vmem:[%s187 + $0x828] sm:$0xff]
        %v674 = vld [vmem:[%s187 + $0x830] sm:$0xf]
        %v675 = vld [vmem:[%s187 + $0x834] sm:$0xff]
        %v676 = vld [vmem:[%s187 + $0x83c] sm:$0xf]
        %v677 = vld [vmem:[%s187 + $0x840] sm:$0xff]
        %v678 = vld [vmem:[%s187 + $0x848] sm:$0xf]
        %v679 = vld [vmem:[%s187 + $0x84c] sm:$0xff]
        %v680 = vld [vmem:[%s187 + $0x854] sm:$0xf]
        %v681 = vld [vmem:[%s187 + $0x858] sm:$0xff]
        %v682 = vld [vmem:[%s187 + $0x860] sm:$0xf]
        %v683 = vld [vmem:[%s187 + $0x864] sm:$0xff]
        %v684 = vld [vmem:[%s187 + $0x86c] sm:$0xf]
        %v685 = vld [vmem:[%s187 + $0x870] sm:$0xff]
        %v686 = vld [vmem:[%s187 + $0x878] sm:$0xf]
        %v687 = vld [vmem:[%s187 + $0x87c] sm:$0xff]
        %v688 = vld [vmem:[%s187 + $0x884] sm:$0xf]
        %v689 = vld [vmem:[%s187 + $0x888] sm:$0xff]
        %v690 = vld [vmem:[%s187 + $0x890] sm:$0xf]
        %v691 = vld [vmem:[%s187 + $0x894] sm:$0xff]
        %v692 = vld [vmem:[%s187 + $0x89c] sm:$0xf]
        %v693 = vld [vmem:[%s187 + $0x8a0] sm:$0xff]
        %v694 = vld [vmem:[%s187 + $0x8a8] sm:$0xf]
        %v695 = vld [vmem:[%s187 + $0x8ac] sm:$0xff]
        %v696 = vld [vmem:[%s187 + $0x8b4] sm:$0xf]
        %v697 = vld [vmem:[%s187 + $0x8b8] sm:$0xff]
        %v698 = vld [vmem:[%s187 + $0x8c0] sm:$0xf]
        %v699 = vld [vmem:[%s187 + $0x8c4] sm:$0xff]
        %v700 = vld [vmem:[%s187 + $0x8cc] sm:$0xf]
        %v701 = vld [vmem:[%s187 + $0x8d0] sm:$0xff]
        %v702 = vld [vmem:[%s187 + $0x8d8] sm:$0xf]
        %v703 = vld [vmem:[%s187 + $0x8dc] sm:$0xff]
        %v704 = vld [vmem:[%s187 + $0x8e4] sm:$0xf]
        %v705 = vld [vmem:[%s187 + $0x8e8] sm:$0xff]
        %v706 = vld [vmem:[%s187 + $0x8f0] sm:$0xf]
        %v707 = vld [vmem:[%s187 + $0x8f4] sm:$0xff]
        %v708 = vld [vmem:[%s187 + $0x8fc] sm:$0xf]
        %v709 = vld [vmem:[%s187 + $0x900] sm:$0xff]
        %v710 = vld [vmem:[%s187 + $0x908] sm:$0xf]
        %v711 = vld [vmem:[%s187 + $0x90c] sm:$0xff]
        %v712 = vld [vmem:[%s187 + $0x914] sm:$0xf]
        %v713 = vld [vmem:[%s187 + $0x918] sm:$0xff]
        %v714 = vld [vmem:[%s187 + $0x920] sm:$0xf]
        %v715 = vld [vmem:[%s187 + $0x924] sm:$0xff]
        %v716 = vld [vmem:[%s187 + $0x92c] sm:$0xf]
        %v717 = vld [vmem:[%s187 + $0x930] sm:$0xff]
        %v718 = vld [vmem:[%s187 + $0x938] sm:$0xf]
        %v719 = vld [vmem:[%s187 + $0x93c] sm:$0xff]
        %v720 = vld [vmem:[%s187 + $0x944] sm:$0xf]
        %v721 = vld [vmem:[%s187 + $0x948] sm:$0xff]
        %v722 = vld [vmem:[%s187 + $0x950] sm:$0xf]
        %v723 = vld [vmem:[%s187 + $0x954] sm:$0xff]
        %v724 = vld [vmem:[%s187 + $0x95c] sm:$0xf]
        %v725 = vld [vmem:[%s187 + $0x960] sm:$0xff]
        %v726 = vld [vmem:[%s187 + $0x968] sm:$0xf]
        %v727 = vld [vmem:[%s187 + $0x96c] sm:$0xff]
        %v728 = vld [vmem:[%s187 + $0x974] sm:$0xf]
        %v729 = vld [vmem:[%s187 + $0x978] sm:$0xff]
        %v730 = vld [vmem:[%s187 + $0x980] sm:$0xf]
        %v731 = vld [vmem:[%s187 + $0x984] sm:$0xff]
        %v732 = vld [vmem:[%s187 + $0x98c] sm:$0xf]
        %v733 = vld [vmem:[%s187 + $0x990] sm:$0xff]
        %v734 = vld [vmem:[%s187 + $0x998] sm:$0xf]
        %v735 = vld [vmem:[%s187 + $0x99c] sm:$0xff]
        %v736 = vld [vmem:[%s187 + $0x9a4] sm:$0xf]
        %v737 = vld [vmem:[%s187 + $0x9a8] sm:$0xff]
        %v738 = vld [vmem:[%s187 + $0x9b0] sm:$0xf]
        %v739 = vld [vmem:[%s187 + $0x9b4] sm:$0xff]
        %v740 = vld [vmem:[%s187 + $0x9bc] sm:$0xf]
        %v1157 = vunpack.c.l.b16 %v325
        %v1158 = vunpack.c.h.b16 %v325
        %v1159 = vunpack.c.l.b16 %v326
        %v1160 = vunpack.c.l.b16 %v327
        %v1161 = vunpack.c.h.b16 %v327
        %v1162 = vunpack.c.l.b16 %v328
        %v1163 = vunpack.c.l.b16 %v329
        %v1164 = vunpack.c.h.b16 %v329
        %v1165 = vunpack.c.l.b16 %v330
        %v1166 = vunpack.c.l.b16 %v331
        %v1167 = vunpack.c.h.b16 %v331
        %v1168 = vunpack.c.l.b16 %v332
        %v1169 = vunpack.c.l.b16 %v333
        %v1170 = vunpack.c.h.b16 %v333
        %v1171 = vunpack.c.l.b16 %v334
        %v1172 = vunpack.c.l.b16 %v335
        %v1173 = vunpack.c.h.b16 %v335
        %v1174 = vunpack.c.l.b16 %v336
        %v1175 = vunpack.c.l.b16 %v337
        %v1176 = vunpack.c.h.b16 %v337
        %v1177 = vunpack.c.l.b16 %v338
        %v1178 = vunpack.c.l.b16 %v339
        %v1179 = vunpack.c.h.b16 %v339
        %v1180 = vunpack.c.l.b16 %v340
        %v1181 = vunpack.c.l.b16 %v341
        %v1182 = vunpack.c.h.b16 %v341
        %v1183 = vunpack.c.l.b16 %v342
        %v1184 = vunpack.c.l.b16 %v343
        %v1185 = vunpack.c.h.b16 %v343
        %v1186 = vunpack.c.l.b16 %v344
        %v1187 = vunpack.c.l.b16 %v345
        %v1188 = vunpack.c.h.b16 %v345
        %v1189 = vunpack.c.l.b16 %v346
        %v1190 = vunpack.c.l.b16 %v347
        %v1191 = vunpack.c.h.b16 %v347
        %v1192 = vunpack.c.l.b16 %v348
        %v1193 = vunpack.c.l.b16 %v349
        %v1194 = vunpack.c.h.b16 %v349
        %v1195 = vunpack.c.l.b16 %v350
        %v1196 = vunpack.c.l.b16 %v351
        %v1197 = vunpack.c.h.b16 %v351
        %v1198 = vunpack.c.l.b16 %v352
        %v1199 = vunpack.c.l.b16 %v353
        %v1200 = vunpack.c.h.b16 %v353
        %v1201 = vunpack.c.l.b16 %v354
        %v1202 = vunpack.c.l.b16 %v355
        %v1203 = vunpack.c.h.b16 %v355
        %v1204 = vunpack.c.l.b16 %v356
        %v1205 = vunpack.c.l.b16 %v357
        %v1206 = vunpack.c.h.b16 %v357
        %v1207 = vunpack.c.l.b16 %v358
        %v1208 = vunpack.c.l.b16 %v359
        %v1209 = vunpack.c.h.b16 %v359
        %v1210 = vunpack.c.l.b16 %v360
        %v1211 = vunpack.c.l.b16 %v361
        %v1212 = vunpack.c.h.b16 %v361
        %v1213 = vunpack.c.l.b16 %v362
        %v1214 = vunpack.c.l.b16 %v363
        %v1215 = vunpack.c.h.b16 %v363
        %v1216 = vunpack.c.l.b16 %v364
        %v1217 = vunpack.c.l.b16 %v365
        %v1218 = vunpack.c.h.b16 %v365
        %v1219 = vunpack.c.l.b16 %v366
        %v1220 = vunpack.c.l.b16 %v367
        %v1221 = vunpack.c.h.b16 %v367
        %v1222 = vunpack.c.l.b16 %v368
        %v1223 = vunpack.c.l.b16 %v369
        %v1224 = vunpack.c.h.b16 %v369
        %v1225 = vunpack.c.l.b16 %v370
        %v1226 = vunpack.c.l.b16 %v371
        %v1227 = vunpack.c.h.b16 %v371
        %v1228 = vunpack.c.l.b16 %v372
        %v1229 = vunpack.c.l.b16 %v373
        %v1230 = vunpack.c.h.b16 %v373
        %v1231 = vunpack.c.l.b16 %v374
        %v1232 = vunpack.c.l.b16 %v375
        %v1233 = vunpack.c.h.b16 %v375
        %v1234 = vunpack.c.l.b16 %v376
        %v1235 = vunpack.c.l.b16 %v377
        %v1236 = vunpack.c.h.b16 %v377
        %v1237 = vunpack.c.l.b16 %v378
        %v1238 = vunpack.c.l.b16 %v379
        %v1239 = vunpack.c.h.b16 %v379
        %v1240 = vunpack.c.l.b16 %v380
        %v1241 = vunpack.c.l.b16 %v381
        %v1242 = vunpack.c.h.b16 %v381
        %v1243 = vunpack.c.l.b16 %v382
        %v1244 = vunpack.c.l.b16 %v383
        %v1245 = vunpack.c.h.b16 %v383
        %v1246 = vunpack.c.l.b16 %v384
        %v1247 = vunpack.c.l.b16 %v385
        %v1248 = vunpack.c.h.b16 %v385
        %v1249 = vunpack.c.l.b16 %v386
        %v1250 = vunpack.c.l.b16 %v387
        %v1251 = vunpack.c.h.b16 %v387
        %v1252 = vunpack.c.l.b16 %v388
        %v1253 = vunpack.c.l.b16 %v389
        %v1254 = vunpack.c.h.b16 %v389
        %v1255 = vunpack.c.l.b16 %v390
        %v1256 = vunpack.c.l.b16 %v391
        %v1257 = vunpack.c.h.b16 %v391
        %v1258 = vunpack.c.l.b16 %v392
        %v1259 = vunpack.c.l.b16 %v393
        %v1260 = vunpack.c.h.b16 %v393
        %v1261 = vunpack.c.l.b16 %v394
        %v1262 = vunpack.c.l.b16 %v395
        %v1263 = vunpack.c.h.b16 %v395
        %v1264 = vunpack.c.l.b16 %v396
        %v1265 = vunpack.c.l.b16 %v397
        %v1266 = vunpack.c.h.b16 %v397
        %v1267 = vunpack.c.l.b16 %v398
        %v1268 = vunpack.c.l.b16 %v399
        %v1269 = vunpack.c.h.b16 %v399
        %v1270 = vunpack.c.l.b16 %v400
        %v1271 = vunpack.c.l.b16 %v401
        %v1272 = vunpack.c.h.b16 %v401
        %v1273 = vunpack.c.l.b16 %v402
        %v1274 = vunpack.c.l.b16 %v403
        %v1275 = vunpack.c.h.b16 %v403
        %v1276 = vunpack.c.l.b16 %v404
        %v1277 = vunpack.c.l.b16 %v405
        %v1278 = vunpack.c.h.b16 %v405
        %v1279 = vunpack.c.l.b16 %v406
        %v1280 = vunpack.c.l.b16 %v407
        %v1281 = vunpack.c.h.b16 %v407
        %v1282 = vunpack.c.l.b16 %v408
        %v1283 = vunpack.c.l.b16 %v409
        %v1284 = vunpack.c.h.b16 %v409
        %v1285 = vunpack.c.l.b16 %v410
        %v1286 = vunpack.c.l.b16 %v411
        %v1287 = vunpack.c.h.b16 %v411
        %v1288 = vunpack.c.l.b16 %v412
        %v1289 = vunpack.c.l.b16 %v413
        %v1290 = vunpack.c.h.b16 %v413
        %v1291 = vunpack.c.l.b16 %v414
        %v1292 = vunpack.c.l.b16 %v415
        %v1293 = vunpack.c.h.b16 %v415
        %v1294 = vunpack.c.l.b16 %v416
        %v1295 = vunpack.c.l.b16 %v417
        %v1296 = vunpack.c.h.b16 %v417
        %v1297 = vunpack.c.l.b16 %v418
        %v1298 = vunpack.c.l.b16 %v419
        %v1299 = vunpack.c.h.b16 %v419
        %v1300 = vunpack.c.l.b16 %v420
        %v1301 = vunpack.c.l.b16 %v421
        %v1302 = vunpack.c.h.b16 %v421
        %v1303 = vunpack.c.l.b16 %v422
        %v1304 = vunpack.c.l.b16 %v423
        %v1305 = vunpack.c.h.b16 %v423
        %v1306 = vunpack.c.l.b16 %v424
        %v1307 = vunpack.c.l.b16 %v425
        %v1308 = vunpack.c.h.b16 %v425
        %v1309 = vunpack.c.l.b16 %v426
        %v1310 = vunpack.c.l.b16 %v427
        %v1311 = vunpack.c.h.b16 %v427
        %v1312 = vunpack.c.l.b16 %v428
        %v1313 = vunpack.c.l.b16 %v429
        %v1314 = vunpack.c.h.b16 %v429
        %v1315 = vunpack.c.l.b16 %v430
        %v1316 = vunpack.c.l.b16 %v431
        %v1317 = vunpack.c.h.b16 %v431
        %v1318 = vunpack.c.l.b16 %v432
        %v1319 = vunpack.c.l.b16 %v433
        %v1320 = vunpack.c.h.b16 %v433
        %v1321 = vunpack.c.l.b16 %v434
        %v1322 = vunpack.c.l.b16 %v435
        %v1323 = vunpack.c.h.b16 %v435
        %v1324 = vunpack.c.l.b16 %v436
        %v1325 = vunpack.c.l.b16 %v437
        %v1326 = vunpack.c.h.b16 %v437
        %v1327 = vunpack.c.l.b16 %v438
        %v1328 = vunpack.c.l.b16 %v439
        %v1329 = vunpack.c.h.b16 %v439
        %v1330 = vunpack.c.l.b16 %v440
        %v1331 = vunpack.c.l.b16 %v441
        %v1332 = vunpack.c.h.b16 %v441
        %v1333 = vunpack.c.l.b16 %v442
        %v1334 = vunpack.c.l.b16 %v443
        %v1335 = vunpack.c.h.b16 %v443
        %v1336 = vunpack.c.l.b16 %v444
        %v1337 = vunpack.c.l.b16 %v445
        %v1338 = vunpack.c.h.b16 %v445
        %v1339 = vunpack.c.l.b16 %v446
        %v1340 = vunpack.c.l.b16 %v447
        %v1341 = vunpack.c.h.b16 %v447
        %v1342 = vunpack.c.l.b16 %v448
        %v1343 = vunpack.c.l.b16 %v449
        %v1344 = vunpack.c.h.b16 %v449
        %v1345 = vunpack.c.l.b16 %v450
        %v1346 = vunpack.c.l.b16 %v451
        %v1347 = vunpack.c.h.b16 %v451
        %v1348 = vunpack.c.l.b16 %v452
        %v1349 = vunpack.c.l.b16 %v453
        %v1350 = vunpack.c.h.b16 %v453
        %v1351 = vunpack.c.l.b16 %v454
        %v1352 = vunpack.c.l.b16 %v455
        %v1353 = vunpack.c.h.b16 %v455
        %v1354 = vunpack.c.l.b16 %v456
        %v1355 = vunpack.c.l.b16 %v457
        %v1356 = vunpack.c.h.b16 %v457
        %v1357 = vunpack.c.l.b16 %v458
        %v1358 = vunpack.c.l.b16 %v459
        %v1359 = vunpack.c.h.b16 %v459
        %v1360 = vunpack.c.l.b16 %v460
        %v1361 = vunpack.c.l.b16 %v461
        %v1362 = vunpack.c.h.b16 %v461
        %v1363 = vunpack.c.l.b16 %v462
        %v1364 = vunpack.c.l.b16 %v463
        %v1365 = vunpack.c.h.b16 %v463
        %v1366 = vunpack.c.l.b16 %v464
        %v1367 = vunpack.c.l.b16 %v465
        %v1368 = vunpack.c.h.b16 %v465
        %v1369 = vunpack.c.l.b16 %v466
        %v1370 = vunpack.c.l.b16 %v467
        %v1371 = vunpack.c.h.b16 %v467
        %v1372 = vunpack.c.l.b16 %v468
        %v1373 = vunpack.c.l.b16 %v469
        %v1374 = vunpack.c.h.b16 %v469
        %v1375 = vunpack.c.l.b16 %v470
        %v1376 = vunpack.c.l.b16 %v471
        %v1377 = vunpack.c.h.b16 %v471
        %v1378 = vunpack.c.l.b16 %v472
        %v1379 = vunpack.c.l.b16 %v473
        %v1380 = vunpack.c.h.b16 %v473
        %v1381 = vunpack.c.l.b16 %v474
        %v1382 = vunpack.c.l.b16 %v475
        %v1383 = vunpack.c.h.b16 %v475
        %v1384 = vunpack.c.l.b16 %v476
        %v1385 = vunpack.c.l.b16 %v477
        %v1386 = vunpack.c.h.b16 %v477
        %v1387 = vunpack.c.l.b16 %v478
        %v1388 = vunpack.c.l.b16 %v479
        %v1389 = vunpack.c.h.b16 %v479
        %v1390 = vunpack.c.l.b16 %v480
        %v1391 = vunpack.c.l.b16 %v481
        %v1392 = vunpack.c.h.b16 %v481
        %v1393 = vunpack.c.l.b16 %v482
        %v1394 = vunpack.c.l.b16 %v483
        %v1395 = vunpack.c.h.b16 %v483
        %v1396 = vunpack.c.l.b16 %v484
        %v1397 = vunpack.c.l.b16 %v485
        %v1398 = vunpack.c.h.b16 %v485
        %v1399 = vunpack.c.l.b16 %v486
        %v1400 = vunpack.c.l.b16 %v487
        %v1401 = vunpack.c.h.b16 %v487
        %v1402 = vunpack.c.l.b16 %v488
        %v1403 = vunpack.c.l.b16 %v489
        %v1404 = vunpack.c.h.b16 %v489
        %v1405 = vunpack.c.l.b16 %v490
        %v1406 = vunpack.c.l.b16 %v491
        %v1407 = vunpack.c.h.b16 %v491
        %v1408 = vunpack.c.l.b16 %v492
        %v1409 = vunpack.c.l.b16 %v493
        %v1410 = vunpack.c.h.b16 %v493
        %v1411 = vunpack.c.l.b16 %v494
        %v1412 = vunpack.c.l.b16 %v495
        %v1413 = vunpack.c.h.b16 %v495
        %v1414 = vunpack.c.l.b16 %v496
        %v1415 = vunpack.c.l.b16 %v497
        %v1416 = vunpack.c.h.b16 %v497
        %v1417 = vunpack.c.l.b16 %v498
        %v1418 = vunpack.c.l.b16 %v499
        %v1419 = vunpack.c.h.b16 %v499
        %v1420 = vunpack.c.l.b16 %v500
        %v1421 = vunpack.c.l.b16 %v501
        %v1422 = vunpack.c.h.b16 %v501
        %v1423 = vunpack.c.l.b16 %v502
        %v1424 = vunpack.c.l.b16 %v503
        %v1425 = vunpack.c.h.b16 %v503
        %v1426 = vunpack.c.l.b16 %v504
        %v1427 = vunpack.c.l.b16 %v505
        %v1428 = vunpack.c.h.b16 %v505
        %v1429 = vunpack.c.l.b16 %v506
        %v1430 = vunpack.c.l.b16 %v507
        %v1431 = vunpack.c.h.b16 %v507
        %v1432 = vunpack.c.l.b16 %v508
        %v1433 = vunpack.c.l.b16 %v509
        %v1434 = vunpack.c.h.b16 %v509
        %v1435 = vunpack.c.l.b16 %v510
        %v1436 = vunpack.c.l.b16 %v511
        %v1437 = vunpack.c.h.b16 %v511
        %v1438 = vunpack.c.l.b16 %v512
        %v1439 = vunpack.c.l.b16 %v513
        %v1440 = vunpack.c.h.b16 %v513
        %v1441 = vunpack.c.l.b16 %v514
        %v1442 = vunpack.c.l.b16 %v515
        %v1443 = vunpack.c.h.b16 %v515
        %v1444 = vunpack.c.l.b16 %v516
        %v1445 = vunpack.c.l.b16 %v517
        %v1446 = vunpack.c.h.b16 %v517
        %v1447 = vunpack.c.l.b16 %v518
        %v1448 = vunpack.c.l.b16 %v519
        %v1449 = vunpack.c.h.b16 %v519
        %v1450 = vunpack.c.l.b16 %v520
        %v1451 = vunpack.c.l.b16 %v521
        %v1452 = vunpack.c.h.b16 %v521
        %v1453 = vunpack.c.l.b16 %v522
        %v1454 = vunpack.c.l.b16 %v523
        %v1455 = vunpack.c.h.b16 %v523
        %v1456 = vunpack.c.l.b16 %v524
        %v1457 = vunpack.c.l.b16 %v525
        %v1458 = vunpack.c.h.b16 %v525
        %v1459 = vunpack.c.l.b16 %v526
        %v1460 = vunpack.c.l.b16 %v527
        %v1461 = vunpack.c.h.b16 %v527
        %v1462 = vunpack.c.l.b16 %v528
        %v1463 = vunpack.c.l.b16 %v529
        %v1464 = vunpack.c.h.b16 %v529
        %v1465 = vunpack.c.l.b16 %v530
        %v1466 = vunpack.c.l.b16 %v531
        %v1467 = vunpack.c.h.b16 %v531
        %v1468 = vunpack.c.l.b16 %v532
        %v1469 = vunpack.c.l.b16 %v533
        %v1470 = vunpack.c.h.b16 %v533
        %v1471 = vunpack.c.l.b16 %v534
        %v1472 = vunpack.c.l.b16 %v535
        %v1473 = vunpack.c.h.b16 %v535
        %v1474 = vunpack.c.l.b16 %v536
        %v1475 = vunpack.c.l.b16 %v537
        %v1476 = vunpack.c.h.b16 %v537
        %v1477 = vunpack.c.l.b16 %v538
        %v1478 = vunpack.c.l.b16 %v539
        %v1479 = vunpack.c.h.b16 %v539
        %v1480 = vunpack.c.l.b16 %v540
        %v1481 = vunpack.c.l.b16 %v541
        %v1482 = vunpack.c.h.b16 %v541
        %v1483 = vunpack.c.l.b16 %v542
        %v1484 = vunpack.c.l.b16 %v543
        %v1485 = vunpack.c.h.b16 %v543
        %v1486 = vunpack.c.l.b16 %v544
        %v1487 = vunpack.c.l.b16 %v545
        %v1488 = vunpack.c.h.b16 %v545
        %v1489 = vunpack.c.l.b16 %v546
        %v1490 = vunpack.c.l.b16 %v547
        %v1491 = vunpack.c.h.b16 %v547
        %v1492 = vunpack.c.l.b16 %v548
        %v1493 = vunpack.c.l.b16 %v549
        %v1494 = vunpack.c.h.b16 %v549
        %v1495 = vunpack.c.l.b16 %v550
        %v1496 = vunpack.c.l.b16 %v551
        %v1497 = vunpack.c.h.b16 %v551
        %v1498 = vunpack.c.l.b16 %v552
        %v1499 = vunpack.c.l.b16 %v553
        %v1500 = vunpack.c.h.b16 %v553
        %v1501 = vunpack.c.l.b16 %v554
        %v1502 = vunpack.c.l.b16 %v555
        %v1503 = vunpack.c.h.b16 %v555
        %v1504 = vunpack.c.l.b16 %v556
        %v1505 = vunpack.c.l.b16 %v557
        %v1506 = vunpack.c.h.b16 %v557
        %v1507 = vunpack.c.l.b16 %v558
        %v1508 = vunpack.c.l.b16 %v559
        %v1509 = vunpack.c.h.b16 %v559
        %v1510 = vunpack.c.l.b16 %v560
        %v1511 = vunpack.c.l.b16 %v561
        %v1512 = vunpack.c.h.b16 %v561
        %v1513 = vunpack.c.l.b16 %v562
        %v1514 = vunpack.c.l.b16 %v563
        %v1515 = vunpack.c.h.b16 %v563
        %v1516 = vunpack.c.l.b16 %v564
        %v1517 = vunpack.c.l.b16 %v565
        %v1518 = vunpack.c.h.b16 %v565
        %v1519 = vunpack.c.l.b16 %v566
        %v1520 = vunpack.c.l.b16 %v567
        %v1521 = vunpack.c.h.b16 %v567
        %v1522 = vunpack.c.l.b16 %v568
        %v1523 = vunpack.c.l.b16 %v569
        %v1524 = vunpack.c.h.b16 %v569
        %v1525 = vunpack.c.l.b16 %v570
        %v1526 = vunpack.c.l.b16 %v571
        %v1527 = vunpack.c.h.b16 %v571
        %v1528 = vunpack.c.l.b16 %v572
        %v1529 = vunpack.c.l.b16 %v573
        %v1530 = vunpack.c.h.b16 %v573
        %v1531 = vunpack.c.l.b16 %v574
        %v1532 = vunpack.c.l.b16 %v575
        %v1533 = vunpack.c.h.b16 %v575
        %v1534 = vunpack.c.l.b16 %v576
        %v1535 = vunpack.c.l.b16 %v577
        %v1536 = vunpack.c.h.b16 %v577
        %v1537 = vunpack.c.l.b16 %v578
        %v1538 = vunpack.c.l.b16 %v579
        %v1539 = vunpack.c.h.b16 %v579
        %v1540 = vunpack.c.l.b16 %v580
        %v1541 = vunpack.c.l.b16 %v581
        %v1542 = vunpack.c.h.b16 %v581
        %v1543 = vunpack.c.l.b16 %v582
        %v1544 = vunpack.c.l.b16 %v583
        %v1545 = vunpack.c.h.b16 %v583
        %v1546 = vunpack.c.l.b16 %v584
        %v1547 = vunpack.c.l.b16 %v585
        %v1548 = vunpack.c.h.b16 %v585
        %v1549 = vunpack.c.l.b16 %v586
        %v1550 = vunpack.c.l.b16 %v587
        %v1551 = vunpack.c.h.b16 %v587
        %v1552 = vunpack.c.l.b16 %v588
        %v1553 = vunpack.c.l.b16 %v589
        %v1554 = vunpack.c.h.b16 %v589
        %v1555 = vunpack.c.l.b16 %v590
        %v1556 = vunpack.c.l.b16 %v591
        %v1557 = vunpack.c.h.b16 %v591
        %v1558 = vunpack.c.l.b16 %v592
        %v1559 = vunpack.c.l.b16 %v593
        %v1560 = vunpack.c.h.b16 %v593
        %v1561 = vunpack.c.l.b16 %v594
        %v1562 = vunpack.c.l.b16 %v595
        %v1563 = vunpack.c.h.b16 %v595
        %v1564 = vunpack.c.l.b16 %v596
        %v1565 = vunpack.c.l.b16 %v597
        %v1566 = vunpack.c.h.b16 %v597
        %v1567 = vunpack.c.l.b16 %v598
        %v1568 = vunpack.c.l.b16 %v599
        %v1569 = vunpack.c.h.b16 %v599
        %v1570 = vunpack.c.l.b16 %v600
        %v1571 = vunpack.c.l.b16 %v601
        %v1572 = vunpack.c.h.b16 %v601
        %v1573 = vunpack.c.l.b16 %v602
        %v1574 = vunpack.c.l.b16 %v603
        %v1575 = vunpack.c.h.b16 %v603
        %v1576 = vunpack.c.l.b16 %v604
        %v1577 = vunpack.c.l.b16 %v605
        %v1578 = vunpack.c.h.b16 %v605
        %v1579 = vunpack.c.l.b16 %v606
        %v1580 = vunpack.c.l.b16 %v607
        %v1581 = vunpack.c.h.b16 %v607
        %v1582 = vunpack.c.l.b16 %v608
        %v1583 = vunpack.c.l.b16 %v609
        %v1584 = vunpack.c.h.b16 %v609
        %v1585 = vunpack.c.l.b16 %v610
        %v1586 = vunpack.c.l.b16 %v611
        %v1587 = vunpack.c.h.b16 %v611
        %v1588 = vunpack.c.l.b16 %v612
        %v1589 = vunpack.c.l.b16 %v613
        %v1590 = vunpack.c.h.b16 %v613
        %v1591 = vunpack.c.l.b16 %v614
        %v1592 = vunpack.c.l.b16 %v615
        %v1593 = vunpack.c.h.b16 %v615
        %v1594 = vunpack.c.l.b16 %v616
        %v1595 = vunpack.c.l.b16 %v617
        %v1596 = vunpack.c.h.b16 %v617
        %v1597 = vunpack.c.l.b16 %v618
        %v1598 = vunpack.c.l.b16 %v619
        %v1599 = vunpack.c.h.b16 %v619
        %v1600 = vunpack.c.l.b16 %v620
        %v1601 = vunpack.c.l.b16 %v621
        %v1602 = vunpack.c.h.b16 %v621
        %v1603 = vunpack.c.l.b16 %v622
        %v1604 = vunpack.c.l.b16 %v623
        %v1605 = vunpack.c.h.b16 %v623
        %v1606 = vunpack.c.l.b16 %v624
        %v1607 = vunpack.c.l.b16 %v625
        %v1608 = vunpack.c.h.b16 %v625
        %v1609 = vunpack.c.l.b16 %v626
        %v1610 = vunpack.c.l.b16 %v627
        %v1611 = vunpack.c.h.b16 %v627
        %v1612 = vunpack.c.l.b16 %v628
        %v1613 = vunpack.c.l.b16 %v629
        %v1614 = vunpack.c.h.b16 %v629
        %v1615 = vunpack.c.l.b16 %v630
        %v1616 = vunpack.c.l.b16 %v631
        %v1617 = vunpack.c.h.b16 %v631
        %v1618 = vunpack.c.l.b16 %v632
        %v1619 = vunpack.c.l.b16 %v633
        %v1620 = vunpack.c.h.b16 %v633
        %v1621 = vunpack.c.l.b16 %v634
        %v1622 = vunpack.c.l.b16 %v635
        %v1623 = vunpack.c.h.b16 %v635
        %v1624 = vunpack.c.l.b16 %v636
        %v1625 = vunpack.c.l.b16 %v637
        %v1626 = vunpack.c.h.b16 %v637
        %v1627 = vunpack.c.l.b16 %v638
        %v1628 = vunpack.c.l.b16 %v639
        %v1629 = vunpack.c.h.b16 %v639
        %v1630 = vunpack.c.l.b16 %v640
        %v1631 = vunpack.c.l.b16 %v641
        %v1632 = vunpack.c.h.b16 %v641
        %v1633 = vunpack.c.l.b16 %v642
        %v1634 = vunpack.c.l.b16 %v643
        %v1635 = vunpack.c.h.b16 %v643
        %v1636 = vunpack.c.l.b16 %v644
        %v1637 = vunpack.c.l.b16 %v645
        %v1638 = vunpack.c.h.b16 %v645
        %v1639 = vunpack.c.l.b16 %v646
        %v1640 = vunpack.c.l.b16 %v647
        %v1641 = vunpack.c.h.b16 %v647
        %v1642 = vunpack.c.l.b16 %v648
        %v1643 = vunpack.c.l.b16 %v649
        %v1644 = vunpack.c.h.b16 %v649
        %v1645 = vunpack.c.l.b16 %v650
        %v1646 = vunpack.c.l.b16 %v651
        %v1647 = vunpack.c.h.b16 %v651
        %v1648 = vunpack.c.l.b16 %v652
        %v1649 = vunpack.c.l.b16 %v653
        %v1650 = vunpack.c.h.b16 %v653
        %v1651 = vunpack.c.l.b16 %v654
        %v1652 = vunpack.c.l.b16 %v655
        %v1653 = vunpack.c.h.b16 %v655
        %v1654 = vunpack.c.l.b16 %v656
        %v1655 = vunpack.c.l.b16 %v657
        %v1656 = vunpack.c.h.b16 %v657
        %v1657 = vunpack.c.l.b16 %v658
        %v1658 = vunpack.c.l.b16 %v659
        %v1659 = vunpack.c.h.b16 %v659
        %v1660 = vunpack.c.l.b16 %v660
        %v1661 = vunpack.c.l.b16 %v661
        %v1662 = vunpack.c.h.b16 %v661
        %v1663 = vunpack.c.l.b16 %v662
        %v1664 = vunpack.c.l.b16 %v663
        %v1665 = vunpack.c.h.b16 %v663
        %v1666 = vunpack.c.l.b16 %v664
        %v1667 = vunpack.c.l.b16 %v665
        %v1668 = vunpack.c.h.b16 %v665
        %v1669 = vunpack.c.l.b16 %v666
        %v1670 = vunpack.c.l.b16 %v667
        %v1671 = vunpack.c.h.b16 %v667
        %v1672 = vunpack.c.l.b16 %v668
        %v1673 = vunpack.c.l.b16 %v669
        %v1674 = vunpack.c.h.b16 %v669
        %v1675 = vunpack.c.l.b16 %v670
        %v1676 = vunpack.c.l.b16 %v671
        %v1677 = vunpack.c.h.b16 %v671
        %v1678 = vunpack.c.l.b16 %v672
        %v1679 = vunpack.c.l.b16 %v673
        %v1680 = vunpack.c.h.b16 %v673
        %v1681 = vunpack.c.l.b16 %v674
        %v1682 = vunpack.c.l.b16 %v675
        %v1683 = vunpack.c.h.b16 %v675
        %v1684 = vunpack.c.l.b16 %v676
        %v1685 = vunpack.c.l.b16 %v677
        %v1686 = vunpack.c.h.b16 %v677
        %v1687 = vunpack.c.l.b16 %v678
        %v1688 = vunpack.c.l.b16 %v679
        %v1689 = vunpack.c.h.b16 %v679
        %v1690 = vunpack.c.l.b16 %v680
        %v1691 = vunpack.c.l.b16 %v681
        %v1692 = vunpack.c.h.b16 %v681
        %v1693 = vunpack.c.l.b16 %v682
        %v1694 = vunpack.c.l.b16 %v683
        %v1695 = vunpack.c.h.b16 %v683
        %v1696 = vunpack.c.l.b16 %v684
        %v1697 = vunpack.c.l.b16 %v685
        %v1698 = vunpack.c.h.b16 %v685
        %v1699 = vunpack.c.l.b16 %v686
        %v1700 = vunpack.c.l.b16 %v687
        %v1701 = vunpack.c.h.b16 %v687
        %v1702 = vunpack.c.l.b16 %v688
        %v1703 = vunpack.c.l.b16 %v689
        %v1704 = vunpack.c.h.b16 %v689
        %v1705 = vunpack.c.l.b16 %v690
        %v1706 = vunpack.c.l.b16 %v691
        %v1707 = vunpack.c.h.b16 %v691
        %v1708 = vunpack.c.l.b16 %v692
        %v1709 = vunpack.c.l.b16 %v693
        %v1710 = vunpack.c.h.b16 %v693
        %v1711 = vunpack.c.l.b16 %v694
        %v1712 = vunpack.c.l.b16 %v695
        %v1713 = vunpack.c.h.b16 %v695
        %v1714 = vunpack.c.l.b16 %v696
        %v1715 = vunpack.c.l.b16 %v697
        %v1716 = vunpack.c.h.b16 %v697
        %v1717 = vunpack.c.l.b16 %v698
        %v1718 = vunpack.c.l.b16 %v699
        %v1719 = vunpack.c.h.b16 %v699
        %v1720 = vunpack.c.l.b16 %v700
        %v1721 = vunpack.c.l.b16 %v701
        %v1722 = vunpack.c.h.b16 %v701
        %v1723 = vunpack.c.l.b16 %v702
        %v1724 = vunpack.c.l.b16 %v703
        %v1725 = vunpack.c.h.b16 %v703
        %v1726 = vunpack.c.l.b16 %v704
        %v1727 = vunpack.c.l.b16 %v705
        %v1728 = vunpack.c.h.b16 %v705
        %v1729 = vunpack.c.l.b16 %v706
        %v1730 = vunpack.c.l.b16 %v707
        %v1731 = vunpack.c.h.b16 %v707
        %v1732 = vunpack.c.l.b16 %v708
        %v1733 = vunpack.c.l.b16 %v709
        %v1734 = vunpack.c.h.b16 %v709
        %v1735 = vunpack.c.l.b16 %v710
        %v1736 = vunpack.c.l.b16 %v711
        %v1737 = vunpack.c.h.b16 %v711
        %v1738 = vunpack.c.l.b16 %v712
        %v1739 = vunpack.c.l.b16 %v713
        %v1740 = vunpack.c.h.b16 %v713
        %v1741 = vunpack.c.l.b16 %v714
        %v1742 = vunpack.c.l.b16 %v715
        %v1743 = vunpack.c.h.b16 %v715
        %v1744 = vunpack.c.l.b16 %v716
        %v1745 = vunpack.c.l.b16 %v717
        %v1746 = vunpack.c.h.b16 %v717
        %v1747 = vunpack.c.l.b16 %v718
        %v1748 = vunpack.c.l.b16 %v719
        %v1749 = vunpack.c.h.b16 %v719
        %v1750 = vunpack.c.l.b16 %v720
        %v1751 = vunpack.c.l.b16 %v721
        %v1752 = vunpack.c.h.b16 %v721
        %v1753 = vunpack.c.l.b16 %v722
        %v1754 = vunpack.c.l.b16 %v723
        %v1755 = vunpack.c.h.b16 %v723
        %v1756 = vunpack.c.l.b16 %v724
        %v1757 = vunpack.c.l.b16 %v725
        %v1758 = vunpack.c.h.b16 %v725
        %v1759 = vunpack.c.l.b16 %v726
        %v1760 = vunpack.c.l.b16 %v727
        %v1761 = vunpack.c.h.b16 %v727
        %v1762 = vunpack.c.l.b16 %v728
        %v1763 = vunpack.c.l.b16 %v729
        %v1764 = vunpack.c.h.b16 %v729
        %v1765 = vunpack.c.l.b16 %v730
        %v1766 = vunpack.c.l.b16 %v731
        %v1767 = vunpack.c.h.b16 %v731
        %v1768 = vunpack.c.l.b16 %v732
        %v1769 = vunpack.c.l.b16 %v733
        %v1770 = vunpack.c.h.b16 %v733
        %v1771 = vunpack.c.l.b16 %v734
        %v1772 = vunpack.c.l.b16 %v735
        %v1773 = vunpack.c.h.b16 %v735
        %v1774 = vunpack.c.l.b16 %v736
        %v1775 = vunpack.c.l.b16 %v737
        %v1776 = vunpack.c.h.b16 %v737
        %v1777 = vunpack.c.l.b16 %v738
        %v1778 = vunpack.c.l.b16 %v739
        %v1779 = vunpack.c.h.b16 %v739
        %v1780 = vunpack.c.l.b16 %v740
        %v1781 = vpack.c.b16 %v1160, %v1157
        %v1782 = vpack.c.b16 %v1161, %v1158
        %v1783 = vpack.c.b16 %v1162, %v1159
        %v1784 = vpack.c.b16 %v1166, %v1163
        %v1785 = vpack.c.b16 %v1167, %v1164
        %v1786 = vpack.c.b16 %v1168, %v1165
        %v1787 = vpack.c.b16 %v1172, %v1169
        %v1788 = vpack.c.b16 %v1173, %v1170
        %v1789 = vpack.c.b16 %v1174, %v1171
        %v1790 = vpack.c.b16 %v1178, %v1175
        %v1791 = vpack.c.b16 %v1179, %v1176
        %v1792 = vpack.c.b16 %v1180, %v1177
        %v1793 = vpack.c.b16 %v1184, %v1181
        %v1794 = vpack.c.b16 %v1185, %v1182
        %v1795 = vpack.c.b16 %v1186, %v1183
        %v1796 = vpack.c.b16 %v1190, %v1187
        %v1797 = vpack.c.b16 %v1191, %v1188
        %v1798 = vpack.c.b16 %v1192, %v1189
        %v1799 = vpack.c.b16 %v1196, %v1193
        %v1800 = vpack.c.b16 %v1197, %v1194
        %v1801 = vpack.c.b16 %v1198, %v1195
        %v1802 = vpack.c.b16 %v1202, %v1199
        %v1803 = vpack.c.b16 %v1203, %v1200
        %v1804 = vpack.c.b16 %v1204, %v1201
        %v1805 = vpack.c.b16 %v1208, %v1205
        %v1806 = vpack.c.b16 %v1209, %v1206
        %v1807 = vpack.c.b16 %v1210, %v1207
        %v1808 = vpack.c.b16 %v1214, %v1211
        %v1809 = vpack.c.b16 %v1215, %v1212
        %v1810 = vpack.c.b16 %v1216, %v1213
        %v1811 = vpack.c.b16 %v1220, %v1217
        %v1812 = vpack.c.b16 %v1221, %v1218
        %v1813 = vpack.c.b16 %v1222, %v1219
        %v1814 = vpack.c.b16 %v1226, %v1223
        %v1815 = vpack.c.b16 %v1227, %v1224
        %v1816 = vpack.c.b16 %v1228, %v1225
        %v1817 = vpack.c.b16 %v1232, %v1229
        %v1818 = vpack.c.b16 %v1233, %v1230
        %v1819 = vpack.c.b16 %v1234, %v1231
        %v1820 = vpack.c.b16 %v1238, %v1235
        %v1821 = vpack.c.b16 %v1239, %v1236
        %v1822 = vpack.c.b16 %v1240, %v1237
        %v1823 = vpack.c.b16 %v1244, %v1241
        %v1824 = vpack.c.b16 %v1245, %v1242
        %v1825 = vpack.c.b16 %v1246, %v1243
        %v1826 = vpack.c.b16 %v1250, %v1247
        %v1827 = vpack.c.b16 %v1251, %v1248
        %v1828 = vpack.c.b16 %v1252, %v1249
        %v1829 = vpack.c.b16 %v1256, %v1253
        %v1830 = vpack.c.b16 %v1257, %v1254
        %v1831 = vpack.c.b16 %v1258, %v1255
        %v1832 = vpack.c.b16 %v1262, %v1259
        %v1833 = vpack.c.b16 %v1263, %v1260
        %v1834 = vpack.c.b16 %v1264, %v1261
        %v1835 = vpack.c.b16 %v1268, %v1265
        %v1836 = vpack.c.b16 %v1269, %v1266
        %v1837 = vpack.c.b16 %v1270, %v1267
        %v1838 = vpack.c.b16 %v1274, %v1271
        %v1839 = vpack.c.b16 %v1275, %v1272
        %v1840 = vpack.c.b16 %v1276, %v1273
        %v1841 = vpack.c.b16 %v1280, %v1277
        %v1842 = vpack.c.b16 %v1281, %v1278
        %v1843 = vpack.c.b16 %v1282, %v1279
        %v1844 = vpack.c.b16 %v1286, %v1283
        %v1845 = vpack.c.b16 %v1287, %v1284
        %v1846 = vpack.c.b16 %v1288, %v1285
        %v1847 = vpack.c.b16 %v1292, %v1289
        %v1848 = vpack.c.b16 %v1293, %v1290
        %v1849 = vpack.c.b16 %v1294, %v1291
        %v1850 = vpack.c.b16 %v1298, %v1295
        %v1851 = vpack.c.b16 %v1299, %v1296
        %v1852 = vpack.c.b16 %v1300, %v1297
        %v1853 = vpack.c.b16 %v1304, %v1301
        %v1854 = vpack.c.b16 %v1305, %v1302
        %v1855 = vpack.c.b16 %v1306, %v1303
        %v1856 = vpack.c.b16 %v1310, %v1307
        %v1857 = vpack.c.b16 %v1311, %v1308
        %v1858 = vpack.c.b16 %v1312, %v1309
        %v1859 = vpack.c.b16 %v1316, %v1313
        %v1860 = vpack.c.b16 %v1317, %v1314
        %v1861 = vpack.c.b16 %v1318, %v1315
        %v1862 = vpack.c.b16 %v1322, %v1319
        %v1863 = vpack.c.b16 %v1323, %v1320
        %v1864 = vpack.c.b16 %v1324, %v1321
        %v1865 = vpack.c.b16 %v1328, %v1325
        %v1866 = vpack.c.b16 %v1329, %v1326
        %v1867 = vpack.c.b16 %v1330, %v1327
        %v1868 = vpack.c.b16 %v1334, %v1331
        %v1869 = vpack.c.b16 %v1335, %v1332
        %v1870 = vpack.c.b16 %v1336, %v1333
        %v1871 = vpack.c.b16 %v1340, %v1337
        %v1872 = vpack.c.b16 %v1341, %v1338
        %v1873 = vpack.c.b16 %v1342, %v1339
        %v1874 = vpack.c.b16 %v1346, %v1343
        %v1875 = vpack.c.b16 %v1347, %v1344
        %v1876 = vpack.c.b16 %v1348, %v1345
        %v1877 = vpack.c.b16 %v1352, %v1349
        %v1878 = vpack.c.b16 %v1353, %v1350
        %v1879 = vpack.c.b16 %v1354, %v1351
        %v1880 = vpack.c.b16 %v1358, %v1355
        %v1881 = vpack.c.b16 %v1359, %v1356
        %v1882 = vpack.c.b16 %v1360, %v1357
        %v1883 = vpack.c.b16 %v1364, %v1361
        %v1884 = vpack.c.b16 %v1365, %v1362
        %v1885 = vpack.c.b16 %v1366, %v1363
        %v1886 = vpack.c.b16 %v1370, %v1367
        %v1887 = vpack.c.b16 %v1371, %v1368
        %v1888 = vpack.c.b16 %v1372, %v1369
        %v1889 = vpack.c.b16 %v1376, %v1373
        %v1890 = vpack.c.b16 %v1377, %v1374
        %v1891 = vpack.c.b16 %v1378, %v1375
        %v1892 = vpack.c.b16 %v1382, %v1379
        %v1893 = vpack.c.b16 %v1383, %v1380
        %v1894 = vpack.c.b16 %v1384, %v1381
        %v1895 = vpack.c.b16 %v1388, %v1385
        %v1896 = vpack.c.b16 %v1389, %v1386
        %v1897 = vpack.c.b16 %v1390, %v1387
        %v1898 = vpack.c.b16 %v1394, %v1391
        %v1899 = vpack.c.b16 %v1395, %v1392
        %v1900 = vpack.c.b16 %v1396, %v1393
        %v1901 = vpack.c.b16 %v1400, %v1397
        %v1902 = vpack.c.b16 %v1401, %v1398
        %v1903 = vpack.c.b16 %v1402, %v1399
        %v1904 = vpack.c.b16 %v1406, %v1403
        %v1905 = vpack.c.b16 %v1407, %v1404
        %v1906 = vpack.c.b16 %v1408, %v1405
        %v1907 = vpack.c.b16 %v1412, %v1409
        %v1908 = vpack.c.b16 %v1413, %v1410
        %v1909 = vpack.c.b16 %v1414, %v1411
        %v1910 = vpack.c.b16 %v1418, %v1415
        %v1911 = vpack.c.b16 %v1419, %v1416
        %v1912 = vpack.c.b16 %v1420, %v1417
        %v1913 = vpack.c.b16 %v1424, %v1421
        %v1914 = vpack.c.b16 %v1425, %v1422
        %v1915 = vpack.c.b16 %v1426, %v1423
        %v1916 = vpack.c.b16 %v1430, %v1427
        %v1917 = vpack.c.b16 %v1431, %v1428
        %v1918 = vpack.c.b16 %v1432, %v1429
        %v1919 = vpack.c.b16 %v1436, %v1433
        %v1920 = vpack.c.b16 %v1437, %v1434
        %v1921 = vpack.c.b16 %v1438, %v1435
        %v1922 = vpack.c.b16 %v1442, %v1439
        %v1923 = vpack.c.b16 %v1443, %v1440
        %v1924 = vpack.c.b16 %v1444, %v1441
        %v1925 = vpack.c.b16 %v1448, %v1445
        %v1926 = vpack.c.b16 %v1449, %v1446
        %v1927 = vpack.c.b16 %v1450, %v1447
        %v1928 = vpack.c.b16 %v1454, %v1451
        %v1929 = vpack.c.b16 %v1455, %v1452
        %v1930 = vpack.c.b16 %v1456, %v1453
        %v1931 = vpack.c.b16 %v1460, %v1457
        %v1932 = vpack.c.b16 %v1461, %v1458
        %v1933 = vpack.c.b16 %v1462, %v1459
        %v1934 = vpack.c.b16 %v1466, %v1463
        %v1935 = vpack.c.b16 %v1467, %v1464
        %v1936 = vpack.c.b16 %v1468, %v1465
        %v1937 = vpack.c.b16 %v1472, %v1469
        %v1938 = vpack.c.b16 %v1473, %v1470
        %v1939 = vpack.c.b16 %v1474, %v1471
        %v1940 = vpack.c.b16 %v1478, %v1475
        %v1941 = vpack.c.b16 %v1479, %v1476
        %v1942 = vpack.c.b16 %v1480, %v1477
        %v1943 = vpack.c.b16 %v1484, %v1481
        %v1944 = vpack.c.b16 %v1485, %v1482
        %v1945 = vpack.c.b16 %v1486, %v1483
        %v1946 = vpack.c.b16 %v1490, %v1487
        %v1947 = vpack.c.b16 %v1491, %v1488
        %v1948 = vpack.c.b16 %v1492, %v1489
        %v1949 = vpack.c.b16 %v1496, %v1493
        %v1950 = vpack.c.b16 %v1497, %v1494
        %v1951 = vpack.c.b16 %v1498, %v1495
        %v1952 = vpack.c.b16 %v1502, %v1499
        %v1953 = vpack.c.b16 %v1503, %v1500
        %v1954 = vpack.c.b16 %v1504, %v1501
        %v1955 = vpack.c.b16 %v1508, %v1505
        %v1956 = vpack.c.b16 %v1509, %v1506
        %v1957 = vpack.c.b16 %v1510, %v1507
        %v1958 = vpack.c.b16 %v1514, %v1511
        %v1959 = vpack.c.b16 %v1515, %v1512
        %v1960 = vpack.c.b16 %v1516, %v1513
        %v1961 = vpack.c.b16 %v1520, %v1517
        %v1962 = vpack.c.b16 %v1521, %v1518
        %v1963 = vpack.c.b16 %v1522, %v1519
        %v1964 = vpack.c.b16 %v1526, %v1523
        %v1965 = vpack.c.b16 %v1527, %v1524
        %v1966 = vpack.c.b16 %v1528, %v1525
        %v1967 = vpack.c.b16 %v1532, %v1529
        %v1968 = vpack.c.b16 %v1533, %v1530
        %v1969 = vpack.c.b16 %v1534, %v1531
        %v1970 = vpack.c.b16 %v1538, %v1535
        %v1971 = vpack.c.b16 %v1539, %v1536
        %v1972 = vpack.c.b16 %v1540, %v1537
        %v1973 = vpack.c.b16 %v1544, %v1541
        %v1974 = vpack.c.b16 %v1545, %v1542
        %v1975 = vpack.c.b16 %v1546, %v1543
        %v1976 = vpack.c.b16 %v1550, %v1547
        %v1977 = vpack.c.b16 %v1551, %v1548
        %v1978 = vpack.c.b16 %v1552, %v1549
        %v1979 = vpack.c.b16 %v1556, %v1553
        %v1980 = vpack.c.b16 %v1557, %v1554
        %v1981 = vpack.c.b16 %v1558, %v1555
        %v1982 = vpack.c.b16 %v1562, %v1559
        %v1983 = vpack.c.b16 %v1563, %v1560
        %v1984 = vpack.c.b16 %v1564, %v1561
        %v1985 = vpack.c.b16 %v1568, %v1565
        %v1986 = vpack.c.b16 %v1569, %v1566
        %v1987 = vpack.c.b16 %v1570, %v1567
        %v1988 = vpack.c.b16 %v1574, %v1571
        %v1989 = vpack.c.b16 %v1575, %v1572
        %v1990 = vpack.c.b16 %v1576, %v1573
        %v1991 = vpack.c.b16 %v1580, %v1577
        %v1992 = vpack.c.b16 %v1581, %v1578
        %v1993 = vpack.c.b16 %v1582, %v1579
        %v1994 = vpack.c.b16 %v1586, %v1583
        %v1995 = vpack.c.b16 %v1587, %v1584
        %v1996 = vpack.c.b16 %v1588, %v1585
        %v1997 = vpack.c.b16 %v1592, %v1589
        %v1998 = vpack.c.b16 %v1593, %v1590
        %v1999 = vpack.c.b16 %v1594, %v1591
        %v2000 = vpack.c.b16 %v1598, %v1595
        %v2001 = vpack.c.b16 %v1599, %v1596
        %v2002 = vpack.c.b16 %v1600, %v1597
        %v2003 = vpack.c.b16 %v1604, %v1601
        %v2004 = vpack.c.b16 %v1605, %v1602
        %v2005 = vpack.c.b16 %v1606, %v1603
        %v2006 = vpack.c.b16 %v1610, %v1607
        %v2007 = vpack.c.b16 %v1611, %v1608
        %v2008 = vpack.c.b16 %v1612, %v1609
        %v2009 = vpack.c.b16 %v1616, %v1613
        %v2010 = vpack.c.b16 %v1617, %v1614
        %v2011 = vpack.c.b16 %v1618, %v1615
        %v2012 = vpack.c.b16 %v1622, %v1619
        %v2013 = vpack.c.b16 %v1623, %v1620
        %v2014 = vpack.c.b16 %v1624, %v1621
        %v2015 = vpack.c.b16 %v1628, %v1625
        %v2016 = vpack.c.b16 %v1629, %v1626
        %v2017 = vpack.c.b16 %v1630, %v1627
        %v2018 = vpack.c.b16 %v1634, %v1631
        %v2019 = vpack.c.b16 %v1635, %v1632
        %v2020 = vpack.c.b16 %v1636, %v1633
        %v2021 = vpack.c.b16 %v1640, %v1637
        %v2022 = vpack.c.b16 %v1641, %v1638
        %v2023 = vpack.c.b16 %v1642, %v1639
        %v2024 = vpack.c.b16 %v1646, %v1643
        %v2025 = vpack.c.b16 %v1647, %v1644
        %v2026 = vpack.c.b16 %v1648, %v1645
        %v2027 = vpack.c.b16 %v1652, %v1649
        %v2028 = vpack.c.b16 %v1653, %v1650
        %v2029 = vpack.c.b16 %v1654, %v1651
        %v2030 = vpack.c.b16 %v1658, %v1655
        %v2031 = vpack.c.b16 %v1659, %v1656
        %v2032 = vpack.c.b16 %v1660, %v1657
        %v2033 = vpack.c.b16 %v1664, %v1661
        %v2034 = vpack.c.b16 %v1665, %v1662
        %v2035 = vpack.c.b16 %v1666, %v1663
        %v2036 = vpack.c.b16 %v1670, %v1667
        %v2037 = vpack.c.b16 %v1671, %v1668
        %v2038 = vpack.c.b16 %v1672, %v1669
        %v2039 = vpack.c.b16 %v1676, %v1673
        %v2040 = vpack.c.b16 %v1677, %v1674
        %v2041 = vpack.c.b16 %v1678, %v1675
        %v2042 = vpack.c.b16 %v1682, %v1679
        %v2043 = vpack.c.b16 %v1683, %v1680
        %v2044 = vpack.c.b16 %v1684, %v1681
        %v2045 = vpack.c.b16 %v1688, %v1685
        %v2046 = vpack.c.b16 %v1689, %v1686
        %v2047 = vpack.c.b16 %v1690, %v1687
        %v2048 = vpack.c.b16 %v1694, %v1691
        %v2049 = vpack.c.b16 %v1695, %v1692
        %v2050 = vpack.c.b16 %v1696, %v1693
        %v2051 = vpack.c.b16 %v1700, %v1697
        %v2052 = vpack.c.b16 %v1701, %v1698
        %v2053 = vpack.c.b16 %v1702, %v1699
        %v2054 = vpack.c.b16 %v1706, %v1703
        %v2055 = vpack.c.b16 %v1707, %v1704
        %v2056 = vpack.c.b16 %v1708, %v1705
        %v2057 = vpack.c.b16 %v1712, %v1709
        %v2058 = vpack.c.b16 %v1713, %v1710
        %v2059 = vpack.c.b16 %v1714, %v1711
        %v2060 = vpack.c.b16 %v1718, %v1715
        %v2061 = vpack.c.b16 %v1719, %v1716
        %v2062 = vpack.c.b16 %v1720, %v1717
        %v2063 = vpack.c.b16 %v1724, %v1721
        %v2064 = vpack.c.b16 %v1725, %v1722
        %v2065 = vpack.c.b16 %v1726, %v1723
        %v2066 = vpack.c.b16 %v1730, %v1727
        %v2067 = vpack.c.b16 %v1731, %v1728
        %v2068 = vpack.c.b16 %v1732, %v1729
        %v2069 = vpack.c.b16 %v1736, %v1733
        %v2070 = vpack.c.b16 %v1737, %v1734
        %v2071 = vpack.c.b16 %v1738, %v1735
        %v2072 = vpack.c.b16 %v1742, %v1739
        %v2073 = vpack.c.b16 %v1743, %v1740
        %v2074 = vpack.c.b16 %v1744, %v1741
        %v2075 = vpack.c.b16 %v1748, %v1745
        %v2076 = vpack.c.b16 %v1749, %v1746
        %v2077 = vpack.c.b16 %v1750, %v1747
        %v2078 = vpack.c.b16 %v1754, %v1751
        %v2079 = vpack.c.b16 %v1755, %v1752
        %v2080 = vpack.c.b16 %v1756, %v1753
        %v2081 = vpack.c.b16 %v1760, %v1757
        %v2082 = vpack.c.b16 %v1761, %v1758
        %v2083 = vpack.c.b16 %v1762, %v1759
        %v2084 = vpack.c.b16 %v1766, %v1763
        %v2085 = vpack.c.b16 %v1767, %v1764
        %v2086 = vpack.c.b16 %v1768, %v1765
        %v2087 = vpack.c.b16 %v1772, %v1769
        %v2088 = vpack.c.b16 %v1773, %v1770
        %v2089 = vpack.c.b16 %v1774, %v1771
        %v2090 = vpack.c.b16 %v1778, %v1775
        %v2091 = vpack.c.b16 %v1779, %v1776
        %v2092 = vpack.c.b16 %v1780, %v1777
        %2405 = vmatprep.subr.bf16.mxu0 %v1803
        %2406 = vmatpush1.bf16.msra.mxu0 %v1802
        %2407 = vmatprep.subr.bf16.mxu0 %v1800
        %2408 = vmatpush1.bf16.msra.mxu0 %v1799
        %2409 = vmatprep.subr.bf16.mxu0 %v1797
        %2410 = vmatpush1.bf16.msra.mxu0 %v1796
        %2411 = vmatprep.subr.bf16.mxu0 %v1794
        %2412 = vmatpush1.bf16.msra.mxu0 %v1793
        %2413 = vmatprep.subr.bf16.mxu0 %v1791
        %2414 = vmatpush1.bf16.msra.mxu0 %v1790
        %2415 = vmatprep.subr.bf16.mxu0 %v1788
        %2416 = vmatpush1.bf16.msra.mxu0 %v1787
        %2417 = vmatprep.subr.bf16.mxu0 %v1785
        %2418 = vmatpush1.bf16.msra.mxu0 %v1784
        %2419 = vmatprep.subr.bf16.mxu0 %v1782
        %2420 = vmatpush1.bf16.msra.mxu0 %v1781
        %2421 = vmatprep.subr.bf16.mxu0 %v1827
        %2422 = vmatpush2.bf16.msra.mxu0 %v1826
        %2423 = vmatprep.subr.bf16.mxu0 %v1824
        %2424 = vmatpush2.bf16.msra.mxu0 %v1823
        %2425 = vmatprep.subr.bf16.mxu0 %v1821
        %2426 = vmatpush2.bf16.msra.mxu0 %v1820
        %2427 = vmatprep.subr.bf16.mxu0 %v1818
        %2428 = vmatpush2.bf16.msra.mxu0 %v1817
        %2429 = vmatprep.subr.bf16.mxu0 %v1815
        %2430 = vmatpush2.bf16.msra.mxu0 %v1814
        %2431 = vmatprep.subr.bf16.mxu0 %v1812
        %2432 = vmatpush2.bf16.msra.mxu0 %v1811
        %2433 = vmatprep.subr.bf16.mxu0 %v1809
        %2434 = vmatpush2.bf16.msra.mxu0 %v1808
        %2435 = vmatprep.subr.bf16.mxu0 %v1806
        %2436 = vmatpush2.bf16.msra.mxu0 %v1805
        %2437 = vmatprep.mubr.bf16.mxu0 %v313
        %2438 = vmatmul.mubr.bf16.gmra.mxu0 %v312
        %v2439 = vpop.f32.mrf.mxu0
        %v2440 = vadd.f32 0.0, %v2439
        %v2441 = vpop.f32.mrf.mxu0
        %v2442 = vadd.f32 0.0, %v2441
        %v2443 = vpop.f32.mrf.mxu0
        %v2444 = vpop.f32.mrf.mxu0
        %2445 = vdwg.mxu0
        %2446 = vmatprep.subr.bf16.mxu0 %v1851
        %2447 = vmatpush1.bf16.msra.mxu0 %v1850
        %2448 = vmatprep.subr.bf16.mxu0 %v1848
        %2449 = vmatpush1.bf16.msra.mxu0 %v1847
        %2450 = vmatprep.subr.bf16.mxu0 %v1845
        %2451 = vmatpush1.bf16.msra.mxu0 %v1844
        %2452 = vmatprep.subr.bf16.mxu0 %v1842
        %2453 = vmatpush1.bf16.msra.mxu0 %v1841
        %2454 = vmatprep.subr.bf16.mxu0 %v1839
        %2455 = vmatpush1.bf16.msra.mxu0 %v1838
        %2456 = vmatprep.subr.bf16.mxu0 %v1836
        %2457 = vmatpush1.bf16.msra.mxu0 %v1835
        %2458 = vmatprep.subr.bf16.mxu0 %v1833
        %2459 = vmatpush1.bf16.msra.mxu0 %v1832
        %2460 = vmatprep.subr.bf16.mxu0 %v1830
        %2461 = vmatpush1.bf16.msra.mxu0 %v1829
        %2462 = vmatprep.subr.bf16.mxu0 %v1875
        %2463 = vmatpush2.bf16.msra.mxu0 %v1874
        %2464 = vmatprep.subr.bf16.mxu0 %v1872
        %2465 = vmatpush2.bf16.msra.mxu0 %v1871
        %2466 = vmatprep.subr.bf16.mxu0 %v1869
        %2467 = vmatpush2.bf16.msra.mxu0 %v1868
        %2468 = vmatprep.subr.bf16.mxu0 %v1866
        %2469 = vmatpush2.bf16.msra.mxu0 %v1865
        %2470 = vmatprep.subr.bf16.mxu0 %v1863
        %2471 = vmatpush2.bf16.msra.mxu0 %v1862
        %2472 = vmatprep.subr.bf16.mxu0 %v1860
        %2473 = vmatpush2.bf16.msra.mxu0 %v1859
        %2474 = vmatprep.subr.bf16.mxu0 %v1857
        %2475 = vmatpush2.bf16.msra.mxu0 %v1856
        %2476 = vmatprep.subr.bf16.mxu0 %v1854
        %2477 = vmatpush2.bf16.msra.mxu0 %v1853
        %2478 = vmatprep.mubr.bf16.mxu0 %v315
        %2479 = vmatmul.mubr.bf16.gmra.mxu0 %v314
        %v2480 = vpop.f32.mrf.mxu0
        %v2481 = vadd.f32 %v2440, %v2480
        %v2482 = vpop.f32.mrf.mxu0
        %v2483 = vadd.f32 %v2442, %v2482
        %v2484 = vpop.f32.mrf.mxu0
        %v2485 = vpop.f32.mrf.mxu0
        %2486 = vdwg.mxu0
        %2487 = vmatprep.subr.bf16.mxu0 %v1899
        %2488 = vmatpush1.bf16.msra.mxu0 %v1898
        %2489 = vmatprep.subr.bf16.mxu0 %v1896
        %2490 = vmatpush1.bf16.msra.mxu0 %v1895
        %2491 = vmatprep.subr.bf16.mxu0 %v1893
        %2492 = vmatpush1.bf16.msra.mxu0 %v1892
        %2493 = vmatprep.subr.bf16.mxu0 %v1890
        %2494 = vmatpush1.bf16.msra.mxu0 %v1889
        %2495 = vmatprep.subr.bf16.mxu0 %v1887
        %2496 = vmatpush1.bf16.msra.mxu0 %v1886
        %2497 = vmatprep.subr.bf16.mxu0 %v1884
        %2498 = vmatpush1.bf16.msra.mxu0 %v1883
        %2499 = vmatprep.subr.bf16.mxu0 %v1881
        %2500 = vmatpush1.bf16.msra.mxu0 %v1880
        %2501 = vmatprep.subr.bf16.mxu0 %v1878
        %2502 = vmatpush1.bf16.msra.mxu0 %v1877
        %2503 = vmatprep.subr.bf16.mxu0 %v1923
        %2504 = vmatpush2.bf16.msra.mxu0 %v1922
        %2505 = vmatprep.subr.bf16.mxu0 %v1920
        %2506 = vmatpush2.bf16.msra.mxu0 %v1919
        %2507 = vmatprep.subr.bf16.mxu0 %v1917
        %2508 = vmatpush2.bf16.msra.mxu0 %v1916
        %2509 = vmatprep.subr.bf16.mxu0 %v1914
        %2510 = vmatpush2.bf16.msra.mxu0 %v1913
        %2511 = vmatprep.subr.bf16.mxu0 %v1911
        %2512 = vmatpush2.bf16.msra.mxu0 %v1910
        %2513 = vmatprep.subr.bf16.mxu0 %v1908
        %2514 = vmatpush2.bf16.msra.mxu0 %v1907
        %2515 = vmatprep.subr.bf16.mxu0 %v1905
        %2516 = vmatpush2.bf16.msra.mxu0 %v1904
        %2517 = vmatprep.subr.bf16.mxu0 %v1902
        %2518 = vmatpush2.bf16.msra.mxu0 %v1901
        %2519 = vmatprep.mubr.bf16.mxu0 %v317
        %2520 = vmatmul.mubr.bf16.gmra.mxu0 %v316
        %v2521 = vpop.f32.mrf.mxu0
        %v2522 = vadd.f32 %v2481, %v2521
        %v2523 = vpop.f32.mrf.mxu0
        %v2524 = vadd.f32 %v2483, %v2523
        %v2525 = vpop.f32.mrf.mxu0
        %v2526 = vpop.f32.mrf.mxu0
        %2527 = vdwg.mxu0
        %2528 = vmatprep.subr.bf16.mxu0 %v1947
        %2529 = vmatpush1.bf16.msra.mxu0 %v1946
        %2530 = vmatprep.subr.bf16.mxu0 %v1944
        %2531 = vmatpush1.bf16.msra.mxu0 %v1943
        %2532 = vmatprep.subr.bf16.mxu0 %v1941
        %2533 = vmatpush1.bf16.msra.mxu0 %v1940
        %2534 = vmatprep.subr.bf16.mxu0 %v1938
        %2535 = vmatpush1.bf16.msra.mxu0 %v1937
        %2536 = vmatprep.subr.bf16.mxu0 %v1935
        %2537 = vmatpush1.bf16.msra.mxu0 %v1934
        %2538 = vmatprep.subr.bf16.mxu0 %v1932
        %2539 = vmatpush1.bf16.msra.mxu0 %v1931
        %2540 = vmatprep.subr.bf16.mxu0 %v1929
        %2541 = vmatpush1.bf16.msra.mxu0 %v1928
        %2542 = vmatprep.subr.bf16.mxu0 %v1926
        %2543 = vmatpush1.bf16.msra.mxu0 %v1925
        %2544 = vmatprep.subr.bf16.mxu0 %v1971
        %2545 = vmatpush2.bf16.msra.mxu0 %v1970
        %2546 = vmatprep.subr.bf16.mxu0 %v1968
        %2547 = vmatpush2.bf16.msra.mxu0 %v1967
        %2548 = vmatprep.subr.bf16.mxu0 %v1965
        %2549 = vmatpush2.bf16.msra.mxu0 %v1964
        %2550 = vmatprep.subr.bf16.mxu0 %v1962
        %2551 = vmatpush2.bf16.msra.mxu0 %v1961
        %2552 = vmatprep.subr.bf16.mxu0 %v1959
        %2553 = vmatpush2.bf16.msra.mxu0 %v1958
        %2554 = vmatprep.subr.bf16.mxu0 %v1956
        %2555 = vmatpush2.bf16.msra.mxu0 %v1955
        %2556 = vmatprep.subr.bf16.mxu0 %v1953
        %2557 = vmatpush2.bf16.msra.mxu0 %v1952
        %2558 = vmatprep.subr.bf16.mxu0 %v1950
        %2559 = vmatpush2.bf16.msra.mxu0 %v1949
        %2560 = vmatprep.mubr.bf16.mxu0 %v319
        %2561 = vmatmul.mubr.bf16.gmra.mxu0 %v318
        %v2562 = vpop.f32.mrf.mxu0
        %v2563 = vadd.f32 %v2522, %v2562
        %v2564 = vpop.f32.mrf.mxu0
        %v2565 = vadd.f32 %v2524, %v2564
        %v2566 = vpop.f32.mrf.mxu0
        %v2567 = vpop.f32.mrf.mxu0
        %2568 = vdwg.mxu0
        %2569 = vmatprep.subr.bf16.mxu0 %v1995
        %2570 = vmatpush1.bf16.msra.mxu0 %v1994
        %2571 = vmatprep.subr.bf16.mxu0 %v1992
        %2572 = vmatpush1.bf16.msra.mxu0 %v1991
        %2573 = vmatprep.subr.bf16.mxu0 %v1989
        %2574 = vmatpush1.bf16.msra.mxu0 %v1988
        %2575 = vmatprep.subr.bf16.mxu0 %v1986
        %2576 = vmatpush1.bf16.msra.mxu0 %v1985
        %2577 = vmatprep.subr.bf16.mxu0 %v1983
        %2578 = vmatpush1.bf16.msra.mxu0 %v1982
        %2579 = vmatprep.subr.bf16.mxu0 %v1980
        %2580 = vmatpush1.bf16.msra.mxu0 %v1979
        %2581 = vmatprep.subr.bf16.mxu0 %v1977
        %2582 = vmatpush1.bf16.msra.mxu0 %v1976
        %2583 = vmatprep.subr.bf16.mxu0 %v1974
        %2584 = vmatpush1.bf16.msra.mxu0 %v1973
        %2585 = vmatprep.subr.bf16.mxu0 %v2019
        %2586 = vmatpush2.bf16.msra.mxu0 %v2018
        %2587 = vmatprep.subr.bf16.mxu0 %v2016
        %2588 = vmatpush2.bf16.msra.mxu0 %v2015
        %2589 = vmatprep.subr.bf16.mxu0 %v2013
        %2590 = vmatpush2.bf16.msra.mxu0 %v2012
        %2591 = vmatprep.subr.bf16.mxu0 %v2010
        %2592 = vmatpush2.bf16.msra.mxu0 %v2009
        %2593 = vmatprep.subr.bf16.mxu0 %v2007
        %2594 = vmatpush2.bf16.msra.mxu0 %v2006
        %2595 = vmatprep.subr.bf16.mxu0 %v2004
        %2596 = vmatpush2.bf16.msra.mxu0 %v2003
        %2597 = vmatprep.subr.bf16.mxu0 %v2001
        %2598 = vmatpush2.bf16.msra.mxu0 %v2000
        %2599 = vmatprep.subr.bf16.mxu0 %v1998
        %2600 = vmatpush2.bf16.msra.mxu0 %v1997
        %2601 = vmatprep.mubr.bf16.mxu0 %v321
        %2602 = vmatmul.mubr.bf16.gmra.mxu0 %v320
        %v2603 = vpop.f32.mrf.mxu0
        %v2604 = vadd.f32 %v2563, %v2603
        %v2605 = vpop.f32.mrf.mxu0
        %v2606 = vadd.f32 %v2565, %v2605
        %v2607 = vpop.f32.mrf.mxu0
        %v2608 = vpop.f32.mrf.mxu0
        %2609 = vdwg.mxu0
        %2610 = vmatprep.subr.bf16.mxu0 %v2043
        %2611 = vmatpush1.bf16.msra.mxu0 %v2042
        %2612 = vmatprep.subr.bf16.mxu0 %v2040
        %2613 = vmatpush1.bf16.msra.mxu0 %v2039
        %2614 = vmatprep.subr.bf16.mxu0 %v2037
        %2615 = vmatpush1.bf16.msra.mxu0 %v2036
        %2616 = vmatprep.subr.bf16.mxu0 %v2034
        %2617 = vmatpush1.bf16.msra.mxu0 %v2033
        %2618 = vmatprep.subr.bf16.mxu0 %v2031
        %2619 = vmatpush1.bf16.msra.mxu0 %v2030
        %2620 = vmatprep.subr.bf16.mxu0 %v2028
        %2621 = vmatpush1.bf16.msra.mxu0 %v2027
        %2622 = vmatprep.subr.bf16.mxu0 %v2025
        %2623 = vmatpush1.bf16.msra.mxu0 %v2024
        %2624 = vmatprep.subr.bf16.mxu0 %v2022
        %2625 = vmatpush1.bf16.msra.mxu0 %v2021
        %2626 = vmatprep.subr.bf16.mxu0 %v2067
        %2627 = vmatpush2.bf16.msra.mxu0 %v2066
        %2628 = vmatprep.subr.bf16.mxu0 %v2064
        %2629 = vmatpush2.bf16.msra.mxu0 %v2063
        %2630 = vmatprep.subr.bf16.mxu0 %v2061
        %2631 = vmatpush2.bf16.msra.mxu0 %v2060
        %2632 = vmatprep.subr.bf16.mxu0 %v2058
        %2633 = vmatpush2.bf16.msra.mxu0 %v2057
        %2634 = vmatprep.subr.bf16.mxu0 %v2055
        %2635 = vmatpush2.bf16.msra.mxu0 %v2054
        %2636 = vmatprep.subr.bf16.mxu0 %v2052
        %2637 = vmatpush2.bf16.msra.mxu0 %v2051
        %2638 = vmatprep.subr.bf16.mxu0 %v2049
        %2639 = vmatpush2.bf16.msra.mxu0 %v2048
        %2640 = vmatprep.subr.bf16.mxu0 %v2046
        %2641 = vmatpush2.bf16.msra.mxu0 %v2045
        %2642 = vmatprep.mubr.bf16.mxu0 %v323
        %2643 = vmatmul.mubr.bf16.gmra.mxu0 %v322
        %v2644 = vpop.f32.mrf.mxu0
        %v2645 = vadd.f32 %v2604, %v2644
        %v2646 = vpop.f32.mrf.mxu0
        %v2647 = vadd.f32 %v2606, %v2646
        %v2648 = vpop.f32.mrf.mxu0
        %v2649 = vpop.f32.mrf.mxu0
        %2650 = vdwg.mxu0
        %2651 = vmatprep.subr.bf16.mxu0 %v2091
        %2652 = vmatpush1.bf16.msra.mxu0 %v2090
        %2653 = vmatprep.subr.bf16.mxu0 %v2088
        %2654 = vmatpush1.bf16.msra.mxu0 %v2087
        %2655 = vmatprep.subr.bf16.mxu0 %v2085
        %2656 = vmatpush1.bf16.msra.mxu0 %v2084
        %2657 = vmatprep.subr.bf16.mxu0 %v2082
        %2658 = vmatpush1.bf16.msra.mxu0 %v2081
        %2659 = vmatprep.subr.bf16.mxu0 %v2079
        %2660 = vmatpush1.bf16.msra.mxu0 %v2078
        %2661 = vmatprep.subr.bf16.mxu0 %v2076
        %2662 = vmatpush1.bf16.msra.mxu0 %v2075
        %2663 = vmatprep.subr.bf16.mxu0 %v2073
        %2664 = vmatpush1.bf16.msra.mxu0 %v2072
        %2665 = vmatprep.subr.bf16.mxu0 %v2070
        %2666 = vmatpush1.bf16.msra.mxu0 %v2069
        %2667 = vmatprep.subr.bf16.mxu0 0
        %2668 = vmatpush2.bf16.msra.mxu0 0
        %2669 = vmatprep.subr.bf16.mxu0 0
        %2670 = vmatpush2.bf16.msra.mxu0 0
        %2671 = vmatprep.subr.bf16.mxu0 0
        %2672 = vmatpush2.bf16.msra.mxu0 0
        %2673 = vmatprep.subr.bf16.mxu0 0
        %2674 = vmatpush2.bf16.msra.mxu0 0
        %2675 = vmatprep.subr.bf16.mxu0 0
        %2676 = vmatpush2.bf16.msra.mxu0 0
        %2677 = vmatprep.subr.bf16.mxu0 0
        %2678 = vmatpush2.bf16.msra.mxu0 0
        %2679 = vmatprep.subr.bf16.mxu0 0
        %2680 = vmatpush2.bf16.msra.mxu0 0
        %2681 = vmatprep.subr.bf16.mxu0 0
        %2682 = vmatpush2.bf16.msra.mxu0 0
        %2683 = vmatprep.mubr.bf16.mxu0 0
        %2684 = vmatmul.mubr.bf16.gmra.mxu0 %v324
        %v2685 = vpop.f32.mrf.mxu0
        %v2686 = vadd.f32 %v2645, %v2685
        %v2687 = vpop.f32.mrf.mxu0
        %v2688 = vadd.f32 %v2647, %v2687
        %v2689 = vpop.f32.mrf.mxu0
        %v2690 = vpop.f32.mrf.mxu0
        %2691 = vdwg.mxu0
        %2692 = vmatprep.subr.bf16.mxu0 0
        %2693 = vmatpush1.bf16.msra.mxu0 %v1804
        %2694 = vmatprep.subr.bf16.mxu0 0
        %2695 = vmatpush1.bf16.msra.mxu0 %v1801
        %2696 = vmatprep.subr.bf16.mxu0 0
        %2697 = vmatpush1.bf16.msra.mxu0 %v1798
        %2698 = vmatprep.subr.bf16.mxu0 0
        %2699 = vmatpush1.bf16.msra.mxu0 %v1795
        %2700 = vmatprep.subr.bf16.mxu0 0
        %2701 = vmatpush1.bf16.msra.mxu0 %v1792
        %2702 = vmatprep.subr.bf16.mxu0 0
        %2703 = vmatpush1.bf16.msra.mxu0 %v1789
        %2704 = vmatprep.subr.bf16.mxu0 0
        %2705 = vmatpush1.bf16.msra.mxu0 %v1786
        %2706 = vmatprep.subr.bf16.mxu0 0
        %2707 = vmatpush1.bf16.msra.mxu0 %v1783
        %2708 = vmatprep.subr.bf16.mxu0 0
        %2709 = vmatpush2.bf16.msra.mxu0 %v1828
        %2710 = vmatprep.subr.bf16.mxu0 0
        %2711 = vmatpush2.bf16.msra.mxu0 %v1825
        %2712 = vmatprep.subr.bf16.mxu0 0
        %2713 = vmatpush2.bf16.msra.mxu0 %v1822
        %2714 = vmatprep.subr.bf16.mxu0 0
        %2715 = vmatpush2.bf16.msra.mxu0 %v1819
        %2716 = vmatprep.subr.bf16.mxu0 0
        %2717 = vmatpush2.bf16.msra.mxu0 %v1816
        %2718 = vmatprep.subr.bf16.mxu0 0
        %2719 = vmatpush2.bf16.msra.mxu0 %v1813
        %2720 = vmatprep.subr.bf16.mxu0 0
        %2721 = vmatpush2.bf16.msra.mxu0 %v1810
        %2722 = vmatprep.subr.bf16.mxu0 0
        %2723 = vmatpush2.bf16.msra.mxu0 %v1807
        %2724 = vmatprep.mubr.bf16.mxu0 %v313
        %2725 = vmatmul.mubr.bf16.gmra.mxu0 %v312
        %v2726 = vpop.f32.mrf.mxu0
        %v2727 = vadd.f32 0.0, %v2726
        %v2728 = vpop.f32.mrf.mxu0
        %v2729 = vpop.f32.mrf.mxu0
        %v2730 = vpop.f32.mrf.mxu0
        %2731 = vdwg.mxu0
        %2732 = vmatprep.subr.bf16.mxu0 0
        %2733 = vmatpush1.bf16.msra.mxu0 %v1852
        %2734 = vmatprep.subr.bf16.mxu0 0
        %2735 = vmatpush1.bf16.msra.mxu0 %v1849
        %2736 = vmatprep.subr.bf16.mxu0 0
        %2737 = vmatpush1.bf16.msra.mxu0 %v1846
        %2738 = vmatprep.subr.bf16.mxu0 0
        %2739 = vmatpush1.bf16.msra.mxu0 %v1843
        %2740 = vmatprep.subr.bf16.mxu0 0
        %2741 = vmatpush1.bf16.msra.mxu0 %v1840
        %2742 = vmatprep.subr.bf16.mxu0 0
        %2743 = vmatpush1.bf16.msra.mxu0 %v1837
        %2744 = vmatprep.subr.bf16.mxu0 0
        %2745 = vmatpush1.bf16.msra.mxu0 %v1834
        %2746 = vmatprep.subr.bf16.mxu0 0
        %2747 = vmatpush1.bf16.msra.mxu0 %v1831
        %2748 = vmatprep.subr.bf16.mxu0 0
        %2749 = vmatpush2.bf16.msra.mxu0 %v1876
        %2750 = vmatprep.subr.bf16.mxu0 0
        %2751 = vmatpush2.bf16.msra.mxu0 %v1873
        %2752 = vmatprep.subr.bf16.mxu0 0
        %2753 = vmatpush2.bf16.msra.mxu0 %v1870
        %2754 = vmatprep.subr.bf16.mxu0 0
        %2755 = vmatpush2.bf16.msra.mxu0 %v1867
        %2756 = vmatprep.subr.bf16.mxu0 0
        %2757 = vmatpush2.bf16.msra.mxu0 %v1864
        %2758 = vmatprep.subr.bf16.mxu0 0
        %2759 = vmatpush2.bf16.msra.mxu0 %v1861
        %2760 = vmatprep.subr.bf16.mxu0 0
        %2761 = vmatpush2.bf16.msra.mxu0 %v1858
        %2762 = vmatprep.subr.bf16.mxu0 0
        %2763 = vmatpush2.bf16.msra.mxu0 %v1855
        %2764 = vmatprep.mubr.bf16.mxu0 %v315
        %2765 = vmatmul.mubr.bf16.gmra.mxu0 %v314
        %v2766 = vpop.f32.mrf.mxu0
        %v2767 = vadd.f32 %v2727, %v2766
        %v2768 = vpop.f32.mrf.mxu0
        %v2769 = vpop.f32.mrf.mxu0
        %v2770 = vpop.f32.mrf.mxu0
        %2771 = vdwg.mxu0
        %2772 = vmatprep.subr.bf16.mxu0 0
        %2773 = vmatpush1.bf16.msra.mxu0 %v1900
        %2774 = vmatprep.subr.bf16.mxu0 0
        %2775 = vmatpush1.bf16.msra.mxu0 %v1897
        %2776 = vmatprep.subr.bf16.mxu0 0
        %2777 = vmatpush1.bf16.msra.mxu0 %v1894
        %2778 = vmatprep.subr.bf16.mxu0 0
        %2779 = vmatpush1.bf16.msra.mxu0 %v1891
        %2780 = vmatprep.subr.bf16.mxu0 0
        %2781 = vmatpush1.bf16.msra.mxu0 %v1888
        %2782 = vmatprep.subr.bf16.mxu0 0
        %2783 = vmatpush1.bf16.msra.mxu0 %v1885
        %2784 = vmatprep.subr.bf16.mxu0 0
        %2785 = vmatpush1.bf16.msra.mxu0 %v1882
        %2786 = vmatprep.subr.bf16.mxu0 0
        %2787 = vmatpush1.bf16.msra.mxu0 %v1879
        %2788 = vmatprep.subr.bf16.mxu0 0
        %2789 = vmatpush2.bf16.msra.mxu0 %v1924
        %2790 = vmatprep.subr.bf16.mxu0 0
        %2791 = vmatpush2.bf16.msra.mxu0 %v1921
        %2792 = vmatprep.subr.bf16.mxu0 0
        %2793 = vmatpush2.bf16.msra.mxu0 %v1918
        %2794 = vmatprep.subr.bf16.mxu0 0
        %2795 = vmatpush2.bf16.msra.mxu0 %v1915
        %2796 = vmatprep.subr.bf16.mxu0 0
        %2797 = vmatpush2.bf16.msra.mxu0 %v1912
        %2798 = vmatprep.subr.bf16.mxu0 0
        %2799 = vmatpush2.bf16.msra.mxu0 %v1909
        %2800 = vmatprep.subr.bf16.mxu0 0
        %2801 = vmatpush2.bf16.msra.mxu0 %v1906
        %2802 = vmatprep.subr.bf16.mxu0 0
        %2803 = vmatpush2.bf16.msra.mxu0 %v1903
        %2804 = vmatprep.mubr.bf16.mxu0 %v317
        %2805 = vmatmul.mubr.bf16.gmra.mxu0 %v316
        %v2806 = vpop.f32.mrf.mxu0
        %v2807 = vadd.f32 %v2767, %v2806
        %v2808 = vpop.f32.mrf.mxu0
        %v2809 = vpop.f32.mrf.mxu0
        %v2810 = vpop.f32.mrf.mxu0
        %2811 = vdwg.mxu0
        %2812 = vmatprep.subr.bf16.mxu0 0
        %2813 = vmatpush1.bf16.msra.mxu0 %v1948
        %2814 = vmatprep.subr.bf16.mxu0 0
        %2815 = vmatpush1.bf16.msra.mxu0 %v1945
        %2816 = vmatprep.subr.bf16.mxu0 0
        %2817 = vmatpush1.bf16.msra.mxu0 %v1942
        %2818 = vmatprep.subr.bf16.mxu0 0
        %2819 = vmatpush1.bf16.msra.mxu0 %v1939
        %2820 = vmatprep.subr.bf16.mxu0 0
        %2821 = vmatpush1.bf16.msra.mxu0 %v1936
        %2822 = vmatprep.subr.bf16.mxu0 0
        %2823 = vmatpush1.bf16.msra.mxu0 %v1933
        %2824 = vmatprep.subr.bf16.mxu0 0
        %2825 = vmatpush1.bf16.msra.mxu0 %v1930
        %2826 = vmatprep.subr.bf16.mxu0 0
        %2827 = vmatpush1.bf16.msra.mxu0 %v1927
        %2828 = vmatprep.subr.bf16.mxu0 0
        %2829 = vmatpush2.bf16.msra.mxu0 %v1972
        %2830 = vmatprep.subr.bf16.mxu0 0
        %2831 = vmatpush2.bf16.msra.mxu0 %v1969
        %2832 = vmatprep.subr.bf16.mxu0 0
        %2833 = vmatpush2.bf16.msra.mxu0 %v1966
        %2834 = vmatprep.subr.bf16.mxu0 0
        %2835 = vmatpush2.bf16.msra.mxu0 %v1963
        %2836 = vmatprep.subr.bf16.mxu0 0
        %2837 = vmatpush2.bf16.msra.mxu0 %v1960
        %2838 = vmatprep.subr.bf16.mxu0 0
        %2839 = vmatpush2.bf16.msra.mxu0 %v1957
        %2840 = vmatprep.subr.bf16.mxu0 0
        %2841 = vmatpush2.bf16.msra.mxu0 %v1954
        %2842 = vmatprep.subr.bf16.mxu0 0
        %2843 = vmatpush2.bf16.msra.mxu0 %v1951
        %2844 = vmatprep.mubr.bf16.mxu0 %v319
        %2845 = vmatmul.mubr.bf16.gmra.mxu0 %v318
        %v2846 = vpop.f32.mrf.mxu0
        %v2847 = vadd.f32 %v2807, %v2846
        %v2848 = vpop.f32.mrf.mxu0
        %v2849 = vpop.f32.mrf.mxu0
        %v2850 = vpop.f32.mrf.mxu0
        %2851 = vdwg.mxu0
        %2852 = vmatprep.subr.bf16.mxu0 0
        %2853 = vmatpush1.bf16.msra.mxu0 %v1996
        %2854 = vmatprep.subr.bf16.mxu0 0
        %2855 = vmatpush1.bf16.msra.mxu0 %v1993
        %2856 = vmatprep.subr.bf16.mxu0 0
        %2857 = vmatpush1.bf16.msra.mxu0 %v1990
        %2858 = vmatprep.subr.bf16.mxu0 0
        %2859 = vmatpush1.bf16.msra.mxu0 %v1987
        %2860 = vmatprep.subr.bf16.mxu0 0
        %2861 = vmatpush1.bf16.msra.mxu0 %v1984
        %2862 = vmatprep.subr.bf16.mxu0 0
        %2863 = vmatpush1.bf16.msra.mxu0 %v1981
        %2864 = vmatprep.subr.bf16.mxu0 0
        %2865 = vmatpush1.bf16.msra.mxu0 %v1978
        %2866 = vmatprep.subr.bf16.mxu0 0
        %2867 = vmatpush1.bf16.msra.mxu0 %v1975
        %2868 = vmatprep.subr.bf16.mxu0 0
        %2869 = vmatpush2.bf16.msra.mxu0 %v2020
        %2870 = vmatprep.subr.bf16.mxu0 0
        %2871 = vmatpush2.bf16.msra.mxu0 %v2017
        %2872 = vmatprep.subr.bf16.mxu0 0
        %2873 = vmatpush2.bf16.msra.mxu0 %v2014
        %2874 = vmatprep.subr.bf16.mxu0 0
        %2875 = vmatpush2.bf16.msra.mxu0 %v2011
        %2876 = vmatprep.subr.bf16.mxu0 0
        %2877 = vmatpush2.bf16.msra.mxu0 %v2008
        %2878 = vmatprep.subr.bf16.mxu0 0
        %2879 = vmatpush2.bf16.msra.mxu0 %v2005
        %2880 = vmatprep.subr.bf16.mxu0 0
        %2881 = vmatpush2.bf16.msra.mxu0 %v2002
        %2882 = vmatprep.subr.bf16.mxu0 0
        %2883 = vmatpush2.bf16.msra.mxu0 %v1999
        %2884 = vmatprep.mubr.bf16.mxu0 %v321
        %2885 = vmatmul.mubr.bf16.gmra.mxu0 %v320
        %v2886 = vpop.f32.mrf.mxu0
        %v2887 = vadd.f32 %v2847, %v2886
        %v2888 = vpop.f32.mrf.mxu0
        %v2889 = vpop.f32.mrf.mxu0
        %v2890 = vpop.f32.mrf.mxu0
        %2891 = vdwg.mxu0
        %2892 = vmatprep.subr.bf16.mxu0 0
        %2893 = vmatpush1.bf16.msra.mxu0 %v2044
        %2894 = vmatprep.subr.bf16.mxu0 0
        %2895 = vmatpush1.bf16.msra.mxu0 %v2041
        %2896 = vmatprep.subr.bf16.mxu0 0
        %2897 = vmatpush1.bf16.msra.mxu0 %v2038
        %2898 = vmatprep.subr.bf16.mxu0 0
        %2899 = vmatpush1.bf16.msra.mxu0 %v2035
        %2900 = vmatprep.subr.bf16.mxu0 0
        %2901 = vmatpush1.bf16.msra.mxu0 %v2032
        %2902 = vmatprep.subr.bf16.mxu0 0
        %2903 = vmatpush1.bf16.msra.mxu0 %v2029
        %2904 = vmatprep.subr.bf16.mxu0 0
        %2905 = vmatpush1.bf16.msra.mxu0 %v2026
        %2906 = vmatprep.subr.bf16.mxu0 0
        %2907 = vmatpush1.bf16.msra.mxu0 %v2023
        %2908 = vmatprep.subr.bf16.mxu0 0
        %2909 = vmatpush2.bf16.msra.mxu0 %v2068
        %2910 = vmatprep.subr.bf16.mxu0 0
        %2911 = vmatpush2.bf16.msra.mxu0 %v2065
        %2912 = vmatprep.subr.bf16.mxu0 0
        %2913 = vmatpush2.bf16.msra.mxu0 %v2062
        %2914 = vmatprep.subr.bf16.mxu0 0
        %2915 = vmatpush2.bf16.msra.mxu0 %v2059
        %2916 = vmatprep.subr.bf16.mxu0 0
        %2917 = vmatpush2.bf16.msra.mxu0 %v2056
        %2918 = vmatprep.subr.bf16.mxu0 0
        %2919 = vmatpush2.bf16.msra.mxu0 %v2053
        %2920 = vmatprep.subr.bf16.mxu0 0
        %2921 = vmatpush2.bf16.msra.mxu0 %v2050
        %2922 = vmatprep.subr.bf16.mxu0 0
        %2923 = vmatpush2.bf16.msra.mxu0 %v2047
        %2924 = vmatprep.mubr.bf16.mxu0 %v323
        %2925 = vmatmul.mubr.bf16.gmra.mxu0 %v322
        %v2926 = vpop.f32.mrf.mxu0
        %v2927 = vadd.f32 %v2887, %v2926
        %v2928 = vpop.f32.mrf.mxu0
        %v2929 = vpop.f32.mrf.mxu0
        %v2930 = vpop.f32.mrf.mxu0
        %2931 = vdwg.mxu0
        %2932 = vmatprep.subr.bf16.mxu0 0
        %2933 = vmatpush1.bf16.msra.mxu0 %v2092
        %2934 = vmatprep.subr.bf16.mxu0 0
        %2935 = vmatpush1.bf16.msra.mxu0 %v2089
        %2936 = vmatprep.subr.bf16.mxu0 0
        %2937 = vmatpush1.bf16.msra.mxu0 %v2086
        %2938 = vmatprep.subr.bf16.mxu0 0
        %2939 = vmatpush1.bf16.msra.mxu0 %v2083
        %2940 = vmatprep.subr.bf16.mxu0 0
        %2941 = vmatpush1.bf16.msra.mxu0 %v2080
        %2942 = vmatprep.subr.bf16.mxu0 0
        %2943 = vmatpush1.bf16.msra.mxu0 %v2077
        %2944 = vmatprep.subr.bf16.mxu0 0
        %2945 = vmatpush1.bf16.msra.mxu0 %v2074
        %2946 = vmatprep.subr.bf16.mxu0 0
        %2947 = vmatpush1.bf16.msra.mxu0 %v2071
        %2948 = vmatprep.subr.bf16.mxu0 0
        %2949 = vmatpush2.bf16.msra.mxu0 0
        %2950 = vmatprep.subr.bf16.mxu0 0
        %2951 = vmatpush2.bf16.msra.mxu0 0
        %2952 = vmatprep.subr.bf16.mxu0 0
        %2953 = vmatpush2.bf16.msra.mxu0 0
        %2954 = vmatprep.subr.bf16.mxu0 0
        %2955 = vmatpush2.bf16.msra.mxu0 0
        %2956 = vmatprep.subr.bf16.mxu0 0
        %2957 = vmatpush2.bf16.msra.mxu0 0
        %2958 = vmatprep.subr.bf16.mxu0 0
        %2959 = vmatpush2.bf16.msra.mxu0 0
        %2960 = vmatprep.subr.bf16.mxu0 0
        %2961 = vmatpush2.bf16.msra.mxu0 0
        %2962 = vmatprep.subr.bf16.mxu0 0
        %2963 = vmatpush2.bf16.msra.mxu0 0
        %2964 = vmatprep.mubr.bf16.mxu0 0
        %2965 = vmatmul.mubr.bf16.gmra.mxu0 %v324
        %v2966 = vpop.f32.mrf.mxu0
        %v2967 = vadd.f32 %v2927, %v2966
        %v2968 = vpop.f32.mrf.mxu0
        %v2969 = vpop.f32.mrf.mxu0
        %v2970 = vpop.f32.mrf.mxu0
        %2971 = vdwg.mxu0
        %v2972 = vmul.f32 %v2686, 0.00024514517
        %v2973 = vmul.f32 %v2688, 0.00024514517
        %v2974 = vmul.f32 %v2967, 0.00024514517
        %v2975 = vld [vmem:[%s196] sm:$0x7]
        %v2977 = vlaneseq
        %v2978 = vshrl.u32 %v2977, 7
        %v2979 = vsub.s32 0, %v2978
        %v2980 = vrot.slane %v2975, %v2979
        %v2981 = vlaneseq
        %v2982 = vshrl.u32 %v2981, 7
        %v2983 = vsub.s32 1, %v2982
        %v2984 = vrot.slane %v2975, %v2983
        %v2985 = vlaneseq
        %v2986 = vshrl.u32 %v2985, 7
        %v2987 = vsub.s32 2, %v2986
        %v2988 = vrot.slane %v2975, %v2987
        %v2992 = vadd.f32 %v2972, %v2980
        %v2993 = vadd.f32 %v2973, %v2984
        %v2994 = vadd.f32 %v2974, %v2988
        %vm2995 = vcmp.ge.f32.partialorder %v2992, 0.0
        %vm2996 = vcmp.ge.f32.partialorder %v2993, 0.0
        %vm2997 = vcmp.ge.f32.partialorder %v2994, 0.0
        %v2998 = vmul.f32 %v2992, 1.4142135
        %v2999 = vmul.f32 %v2993, 1.4142135
        %v3000 = vmul.f32 %v2994, 1.4142135
        %v3001 = vmul.f32 %v2992, 0.28284273
        %v3002 = vmul.f32 %v2993, 0.28284273
        %v3003 = vmul.f32 %v2994, 0.28284273
        %v3004 = vsel %vm2995, %v2998, %v3001
        %v3005 = vsel %vm2996, %v2999, %v3002
        %v3006 = vsel %vm2997, %v3000, %v3003
        %v3010 = vcombine.low %v3004, %v3005
        %v3012 = vunpack.c.l.s4 1983009808
        %v3013 = vunpack.c.0.s8 %v3012
        %v3014 = vlaneseq
        %v3015 = vshrl.u32 %v3014, 7
        %v3016 = vsub.s32 %v3013, %v3015
        %v3017 = vrot.slane %v3010, %v3016
        %v3019 = vunpack.c.l.s4 1983009808
        %v3020 = vunpack.c.0.s8 %v3019
        %v3021 = vlaneseq
        %v3022 = vshrl.u32 %v3021, 7
        %v3023 = vsub.s32 %v3020, %v3022
        %v3024 = vrot.slane %v3006, %v3023
        %v3025 = vcombine.low %v3017, %v3024
        %3027 = vst [vmem:[%s230] sm:$0x3f] %v3025
        %s3028 = smul.u32 3, %s20
        %p3029 = scmp.lt.s32.totalorder %s3028, 8
        %s3030 = scalar_select %p3029, %s3028, 8
        %s3031 = smul.addr %s3030, 2
        %s3032 = scalar_lea.vmem %s3, %s3031
        // Predicated region
        $region41: #{i_map_forward.2} parent=31 // pred_check
          %p3033 = pneg %p111
        $region42: #{i_map_forward.2} parent=31 // pred_check_branch
          %3035 = sbr.rel (%p3033) target = $region44
        $region43: #{i_map_forward.2} parent=31 // pred_region
          %s3036 = smul.u32 3, %s20
        $region44: #{i_map_forward.2} parent=31 // pred_fallthru
          _
      $region32: #{i_map_forward.2} parent=5 // pred_fallthru
        _
      %p3037 = scmp.le.s32.totalorder 2, %s15
      // Predicated region
      $region45: #{i_map_forward.2} parent=5 // pred_check
        %p3038 = pneg %p3037
      $region46: #{i_map_forward.2} parent=5 // pred_check_branch
        %3040 = sbr.rel (%p3038) target = $region48
      $region47: #{i_map_forward.2} parent=5 // pred_region
        %s3041 = ssub.s32 %s15, 2
        // Predicated region
        $region49: #{i_map_forward.2} parent=47 // pred_check
          %p3042 = pneg %p117
        $region50: #{i_map_forward.2} parent=47 // pred_check_branch
          %3044 = sbr.rel (%p3042) target = $region52
        $region51: #{i_map_forward.2} parent=47 // pred_region
          %s3045 = smul.u32 3, %s21
          %p3046 = scmp.lt.s32.totalorder %s3045, 8
          %s3047 = scalar_select %p3046, %s3045, 8
          %s3048 = smul.addr %s3047, 2
          %s3049 = scalar_lea.vmem %s3, %s3048
        $region52: #{i_map_forward.2} parent=47 // pred_fallthru
          _
      $region48: #{i_map_forward.2} parent=5 // pred_fallthru
        _
    $region6: #{i_map_forward.2} parent=1 // loop_footer
      %s19 = sadd.s32 1, %s15
    $region7: #{i_map_forward.2} parent=1 // loop_footer_branch
      %14 = sbr.rel target = $region3
    $region8: #{i_map_forward.2} parent=1 // loop_exit
      _
    %3050 = vsyncpa [#allocation3], 1
    %s3051 = scalar_lea.sflag [#allocation3], 1
    %3052 = vsyncpa %s3051, 1
    %3053 = vsyncpa [#allocation5], 1
    %s3054 = scalar_lea.sflag [#allocation5], 1
    %3055 = vsyncpa %s3054, 1

</llo_original>
